<compile_context>
chip_gen: v6e
topology: v6e:2x2x1
jax: 0.10.0
libtpu: 0.0.40
codegen_flags: <defaults>
</compile_context>

<pallas_src>
import functools
import math

import jax
import jax.numpy as jnp
from jax.experimental import pallas as pl
from jax.experimental.pallas import tpu as pltpu

F32 = jnp.float32
_SQRT_HALF = 0.7071067811865476
_EPS = 1e-5
_VMEM_LIMIT = 32 * 1024 * 1024


def _gelu(x):
    # exact erf-based GELU == torch.nn.GELU(approximate='none')
    return 0.5 * x * (1.0 + jax.lax.erf(x * _SQRT_HALF))


def _layernorm(x, g, b):
    mu = jnp.mean(x, axis=-1, keepdims=True)
    var = jnp.mean((x - mu) ** 2, axis=-1, keepdims=True)
    return (x - mu) * jax.lax.rsqrt(var + _EPS) * g + b


def _cparams():
    return pltpu.CompilerParams(dimension_semantics=("parallel",),
                                vmem_limit_bytes=_VMEM_LIMIT)


# --------------------------- REM conv kernel ---------------------------------

def _conv3x3_kernel(xp_ref, w_ref, b_ref, o_ref, *, H, W, cin, cout,
                    pre_inorm):
    # xp_ref: (1, H+2, W+2, cin) zero-padded input (raw input if pre_inorm).
    if pre_inorm:
        # InstanceNorm2d(cin, affine=False) stats over the (unpadded) interior
        xin = xp_ref[0, 1:H + 1, 1:W + 1, :].reshape(H * W, cin)
        mu = jnp.mean(xin, axis=0, keepdims=True)
        var = jnp.mean((xin - mu) ** 2, axis=0, keepdims=True)
        inv = jax.lax.rsqrt(var + _EPS)
        mu3 = mu.reshape(1, 1, cin)
        inv3 = inv.reshape(1, 1, cin)
        ri = jax.lax.broadcasted_iota(jnp.int32, (H, W, cin), 0)
        ci = jax.lax.broadcasted_iota(jnp.int32, (H, W, cin), 1)

    acc = jnp.zeros((H * W, cout), F32)
    for kh in range(3):
        for kw in range(3):
            s = xp_ref[0, kh:kh + H, kw:kw + W, :]            # (H, W, cin)
            if pre_inorm:
                # normalize, then re-zero positions that came from the pad
                s = (s - mu3) * inv3
                valid = ((ri + kh >= 1) & (ri + kh <= H) &
                         (ci + kw >= 1) & (ci + kw <= W))
                s = jnp.where(valid, s, 0.0)
            wk = w_ref[(kh * 3 + kw) * cin:(kh * 3 + kw + 1) * cin, :]
            acc = acc + jnp.dot(s.reshape(H * W, cin), wk,
                                preferred_element_type=F32)
    y = acc + b_ref[...]
    # InstanceNorm2d(cout, affine=False) over H*W, then GELU
    mu2 = jnp.mean(y, axis=0, keepdims=True)
    var2 = jnp.mean((y - mu2) ** 2, axis=0, keepdims=True)
    y = (y - mu2) * jax.lax.rsqrt(var2 + _EPS)
    o_ref[0] = _gelu(y)


def conv3x3_block(x_nhwc, w, b, *, pre_inorm):
    B, H, W, cin = x_nhwc.shape
    cout = w.shape[1]
    xp = jnp.pad(x_nhwc, ((0, 0), (1, 1), (1, 1), (0, 0)))
    kern = functools.partial(_conv3x3_kernel, H=H, W=W, cin=cin, cout=cout,
                             pre_inorm=pre_inorm)
    out = pl.pallas_call(
        kern,
        out_shape=jax.ShapeDtypeStruct((B, H * W, cout), F32),
        grid=(B,),
        in_specs=[pl.BlockSpec((1, H + 2, W + 2, cin), lambda i: (i, 0, 0, 0)),
                  pl.BlockSpec((9 * cin, cout), lambda i: (0, 0)),
                  pl.BlockSpec((1, cout), lambda i: (0, 0))],
        out_specs=pl.BlockSpec((1, H * W, cout), lambda i: (i, 0, 0)),
        compiler_params=_cparams(),
    )(xp, w, b)
    return out.reshape(B, H, W, cout)


# ------------------------- fused RetNet kernel --------------------------------

def _retnet_kernel(p_ref, we_ref, be_ref, ln1g_ref, ln1b_ref, wqkvg_ref,
                   wo_ref, ln2g_ref, ln2b_ref, fw1_ref, fb1_ref, fw2_ref,
                   fb2_ref, o_ref, *, layers, heads, hidden, vdim, L):
    dh = hidden // heads
    dvh = vdim // heads

    # VisionEmbedding patch projection (host extracts the patches)
    x = jnp.dot(p_ref[0], we_ref[...], preferred_element_type=F32) + be_ref[...]

    # per-head causal decay masks built in-kernel (no (B*heads, L, L) HBM array)
    n_i = jax.lax.broadcasted_iota(jnp.int32, (L, L), 0)
    m_i = jax.lax.broadcasted_iota(jnp.int32, (L, L), 1)
    causal = n_i >= m_i
    diff = (n_i - m_i).astype(F32)
    decays = []
    for h in range(heads):
        log_g = math.log(1.0 - 2.0 ** (-5.0 - float(h)))
        e = jnp.exp(jnp.where(causal, diff, 0.0) * log_g)
        decays.append(jnp.where(causal, e, 0.0))

    scale = 1.0 / math.sqrt(dh)   # standard retention key scaling

    for l in range(layers):
        wqkvg = wqkvg_ref[l]
        wo = wo_ref[l]
        fw1 = fw1_ref[l]
        fb1 = fb1_ref[l]
        fw2 = fw2_ref[l]
        fb2 = fb2_ref[l]

        xn = _layernorm(x, ln1g_ref[l], ln1b_ref[l])
        # single fused matmul producing [q | k | v | g] (lane-dense 192 cols)
        qkvg = jnp.dot(xn, wqkvg, preferred_element_type=F32)
        gate = qkvg[:, 2 * hidden + vdim:]
        gate = gate * jax.nn.sigmoid(gate)                       # swish

        ret = jnp.zeros((L, hidden), F32)
        for h in range(heads):
            q_h = qkvg[:, h * dh:(h + 1) * dh]
            k_h = qkvg[:, hidden + h * dh:hidden + (h + 1) * dh]
            v_h = qkvg[:, 2 * hidden + h * dvh:2 * hidden + (h + 1) * dvh]
            s = jax.lax.dot_general(q_h, k_h, (((1,), (1,)), ((), ())),
                                    preferred_element_type=F32) * scale
            s = s * decays[h]
            y_h = jnp.dot(s, v_h, preferred_element_type=F32)     # (L, dvh)
            # per-head group norm (affine == identity at init)
            mu = jnp.mean(y_h, axis=-1, keepdims=True)
            var = jnp.mean((y_h - mu) ** 2, axis=-1, keepdims=True)
            y_h = (y_h - mu) * jax.lax.rsqrt(var + _EPS)
            g_h = gate[:, h * dvh:(h + 1) * dvh]
            ret = ret + jnp.dot(g_h * y_h, wo[h * dvh:(h + 1) * dvh, :],
                                preferred_element_type=F32)

        xr = ret + x                                              # residual
        x2 = _layernorm(xr, ln2g_ref[l], ln2b_ref[l])
        hmid = _gelu(jnp.dot(x2, fw1, preferred_element_type=F32) + fb1)
        x = jnp.dot(hmid, fw2, preferred_element_type=F32) + fb2 + xr

    o_ref[0] = x


def retnet_forward(patches, vembed, stack, *, heads, hidden, vdim):
    B, L, P = patches.shape
    layers = stack['ln1_g'].shape[0]
    kern = functools.partial(_retnet_kernel, layers=layers, heads=heads,
                             hidden=hidden, vdim=vdim, L=L)

    def full(arr):
        nd = arr.ndim
        return pl.BlockSpec(tuple(arr.shape), lambda i, nd=nd: (0,) * nd)

    args = (patches, vembed['w'], vembed['b'],
            stack['ln1_g'], stack['ln1_b'], stack['wqkvg'], stack['wo'],
            stack['ln2_g'], stack['ln2_b'], stack['fw1'], stack['fb1'],
            stack['fw2'], stack['fb2'])
    in_specs = [pl.BlockSpec((1, L, P), lambda i: (i, 0, 0))]
    in_specs += [full(a) for a in args[1:]]
    return pl.pallas_call(
        kern,
        out_shape=jax.ShapeDtypeStruct((B, L, hidden), F32),
        grid=(B,),
        in_specs=in_specs,
        out_specs=pl.BlockSpec((1, L, hidden), lambda i: (i, 0, 0)),
        compiler_params=_cparams(),
    )(*args)


# ------------------------ fused SemanticHead kernel --------------------------

def _head_kernel(a_ref, mwb_ref, rem_ref, w1_ref, b1_ref, g_ref, bb_ref,
                 w2_ref, b2_ref, o_ref, *, H, W, pW, C):
    # W-axis bilinear interp as a batched (over H) matmul, fused with REM skip
    a = a_ref[0]                                                  # (H, pW, C)
    up = jax.lax.dot_general(mwb_ref[...], a,
                             (((2,), (1,)), ((0,), (0,))),
                             preferred_element_type=F32)          # (H, W, C)
    x = up.reshape(H * W, C) + rem_ref[0]
    h = jnp.dot(x, w1_ref[...], preferred_element_type=F32) + b1_ref[...]
    mu = jnp.mean(h, axis=-1, keepdims=True)
    var = jnp.mean((h - mu) ** 2, axis=-1, keepdims=True)
    h = (h - mu) * jax.lax.rsqrt(var + _EPS) * g_ref[...] + bb_ref[...]
    h = _gelu(h)
    # lane-dense (padded to 128 classes) output store
    o_ref[0] = jnp.dot(h, w2_ref[...], preferred_element_type=F32) + b2_ref[...]


def head_forward(a_rows, mwb, rem_flat, head, num_classes):
    B, H, pW, C = a_rows.shape
    W = mwb.shape[1]
    D = head['w1'].shape[1]
    ncp = max(128, -(-num_classes // 128) * 128)
    w2p = jnp.pad(head['w2'], ((0, 0), (0, ncp - num_classes)))
    b2p = jnp.pad(head['b2'], ((0, 0), (0, ncp - num_classes)))
    kern = functools.partial(_head_kernel, H=H, W=W, pW=pW, C=C)
    out = pl.pallas_call(
        kern,
        out_shape=jax.ShapeDtypeStruct((B, H * W, ncp), F32),
        grid=(B,),
        in_specs=[pl.BlockSpec((1, H, pW, C), lambda i: (i, 0, 0, 0)),
                  pl.BlockSpec((H, W, pW), lambda i: (0, 0, 0)),
                  pl.BlockSpec((1, H * W, C), lambda i: (i, 0, 0)),
                  pl.BlockSpec((C, D), lambda i: (0, 0)),
                  pl.BlockSpec((1, D), lambda i: (0, 0)),
                  pl.BlockSpec((1, D), lambda i: (0, 0)),
                  pl.BlockSpec((1, D), lambda i: (0, 0)),
                  pl.BlockSpec((D, ncp), lambda i: (0, 0)),
                  pl.BlockSpec((1, ncp), lambda i: (0, 0))],
        out_specs=pl.BlockSpec((1, H * W, ncp), lambda i: (i, 0, 0)),
        compiler_params=_cparams(),
    )(a_rows, mwb, rem_flat, head['w1'], head['b1'], head['ln_g'],
      head['ln_b'], w2p, b2p)
    return out[:, :, :num_classes]


# ------------------------------ glue helpers --------------------------------

def bilinear_matrix(out_size, in_size):
    # PyTorch F.interpolate(mode='bilinear', align_corners=False) as a matrix.
    scale = in_size / out_size
    i = jnp.arange(out_size, dtype=F32)
    src = jnp.maximum((i + 0.5) * scale - 0.5, 0.0)
    i0 = jnp.clip(jnp.floor(src).astype(jnp.int32), 0, in_size - 1)
    i1 = jnp.clip(i0 + 1, 0, in_size - 1)
    frac = src - i0.astype(F32)
    rows = jnp.arange(out_size)
    m = jnp.zeros((out_size, in_size), F32)
    m = m.at[rows, i0].add(1.0 - frac)
    m = m.at[rows, i1].add(frac)
    return m


def init_params(key, in_dim=5, rem_dim=32, decoder_dim=32, hidden=32,
                ffn_size=64, heads=4, layers=2, patch_size=4, num_classes=20,
                double_v=True):
    keys = iter(jax.random.split(key, 64))

    def w(shape, scale=0.02):
        return (scale * jax.random.normal(next(keys), shape)).astype(F32)

    zeros = lambda s: jnp.zeros(s, F32)
    ones = lambda s: jnp.ones(s, F32)
    vdim = 2 * hidden if double_v else hidden
    qkvg_dim = 2 * hidden + 2 * vdim

    layer_list = []
    for _ in range(layers):
        layer_list.append({
            'ln1_g': ones((1, hidden)), 'ln1_b': zeros((1, hidden)),
            'wqkvg': w((hidden, qkvg_dim)),         # [q | k | v | g] fused
            'wo': w((vdim, hidden)),
            'ln2_g': ones((1, hidden)), 'ln2_b': zeros((1, hidden)),
            'fw1': w((hidden, ffn_size)), 'fb1': zeros((1, ffn_size)),
            'fw2': w((ffn_size, hidden)), 'fb2': zeros((1, hidden)),
        })
    stack = {k: jnp.stack([lay[k] for lay in layer_list])
             for k in layer_list[0]}

    return {
        'patch_size': patch_size, 'heads': heads, 'hidden': hidden,
        'vdim': vdim, 'num_classes': num_classes,
        'rem': [
            {'w': w((9 * in_dim, 32)), 'b': zeros((1, 32))},
            {'w': w((9 * 32, 64)), 'b': zeros((1, 64))},
            {'w': w((9 * 64, rem_dim)), 'b': zeros((1, rem_dim))},
        ],
        'vembed': {'w': w((patch_size * patch_size * rem_dim, hidden)),
                   'b': zeros((1, hidden))},
        'retnet': stack,
        'head': {'w1': w((rem_dim, decoder_dim)), 'b1': zeros((1, decoder_dim)),
                 'ln_g': ones((1, decoder_dim)), 'ln_b': zeros((1, decoder_dim)),
                 'w2': w((decoder_dim, num_classes)),
                 'b2': zeros((1, num_classes))},
    }


def rangeret_forward(params, x_nchw):
    B, _, H, W = x_nchw.shape
    x = jnp.transpose(x_nchw, (0, 2, 3, 1)).astype(F32)          # NCHW -> NHWC

    # --- REM: (input InstanceNorm +) conv3x3 + InstanceNorm + GELU, fused ---
    rem_ws = params['rem']
    y = conv3x3_block(x, rem_ws[0]['w'], rem_ws[0]['b'], pre_inorm=True)
    y = conv3x3_block(y, rem_ws[1]['w'], rem_ws[1]['b'], pre_inorm=False)
    rem = conv3x3_block(y, rem_ws[2]['w'], rem_ws[2]['b'], pre_inorm=False)
    C = rem.shape[-1]

    # --- VisionEmbedding patch extraction (host layout only) ---
    ps = params['patch_size']
    pH, pW = H // ps, W // ps
    L = pH * pW
    patches = rem.reshape(B, pH, ps, pW, ps, C).transpose(0, 1, 3, 2, 4, 5)
    patches = patches.reshape(B, L, ps * ps * C)

    # --- fused RetNet stack (patch projection + all retention layers) ---
    ret = retnet_forward(patches, params['vembed'], params['retnet'],
                         heads=params['heads'], hidden=params['hidden'],
                         vdim=params['vdim'])                    # (B, L, hidden)

    # --- SemanticHead: separable bilinear upsample + REM skip + MLP head ---
    hidden = params['hidden']
    mh = bilinear_matrix(H, pH)                                  # (H, pH)
    mw = bilinear_matrix(W, pW)                                  # (W, pW)
    ret_img = ret.reshape(B, pH, pW, hidden)
    a_rows = jnp.einsum('hp,bpqc->bhqc', mh, ret_img)            # H-interp (host)
    mwb = jnp.broadcast_to(mw, (H, W, pW))
    out = head_forward(a_rows, mwb, rem.reshape(B, H * W, C), params['head'],
                       params['num_classes'])
    return out.reshape(B, H, W, params['num_classes'])


if __name__ == "__main__":
    key = jax.random.PRNGKey(0)
    pkey, xkey = jax.random.split(key)
    params = init_params(pkey)
    B, in_dim, H, W = 2, 5, 16, 16
    x = jax.random.normal(xkey, (B, in_dim, H, W), dtype=F32)
    out = rangeret_forward(params, x)
    out = jax.block_until_ready(out)
    assert out.shape == (B, H, W, 20)
    assert bool(jnp.all(jnp.isfinite(out)))
    print("KERNEL_OK")
</pallas_src>

<mosaic_0001>
module attributes {stable_mosaic.version = 11 : i64} {
  func.func @_conv3x3_kernel(%arg0: i32, %arg1: memref<1x18x18x5xf32, #tpu.memory_space<vmem>>, %arg2: memref<45x32xf32, #tpu.memory_space<vmem>>, %arg3: memref<1x32xf32, #tpu.memory_space<vmem>>, %arg4: memref<1x256x32xf32, #tpu.memory_space<vmem>>) attributes {dimension_semantics = [#tpu.dimension_semantics<parallel>], iteration_bounds = array<i64: 2>, scalar_prefetch = 0 : i64, scratch_operands = 0 : i64, tpu.core_type = #tpu.core_type<tc>, window_params = [{transform_indices = @transform_0, window_bounds = array<i64: 1, 18, 18, 5>}, {pipeline_mode = #tpu.pipeline_mode<synchronous>, transform_indices = @transform_1, window_bounds = array<i64: 45, 32>}, {pipeline_mode = #tpu.pipeline_mode<synchronous>, transform_indices = @transform_2, window_bounds = array<i64: 1, 32>}, {transform_indices = @transform_3, window_bounds = array<i64: 1, 256, 32>}]} {
    %c0 = arith.constant 0 : index
    %c1 = arith.constant 1 : index
    %c1_0 = arith.constant 1 : index
    %c0_1 = arith.constant 0 : index
    %0 = vector.load %arg1[%c0, %c1, %c1_0, %c0_1] : memref<1x18x18x5xf32, #tpu.memory_space<vmem>>, vector<1x16x16x5xf32>
    %1 = vector.shape_cast %0 : vector<1x16x16x5xf32> to vector<16x16x5xf32>
    %2 = vector.shape_cast %1 : vector<16x16x5xf32> to vector<256x5xf32>
    %cst = arith.constant dense<0.000000e+00> : vector<5xf32>
    %3 = vector.multi_reduction <add>, %2, %cst [0] : vector<256x5xf32> to vector<5xf32>
    %4 = vector.shape_cast %3 : vector<5xf32> to vector<1x5xf32>
    %cst_2 = arith.constant 2.560000e+02 : f32
    %5 = vector.broadcast %cst_2 : f32 to vector<1x5xf32>
    %6 = arith.divf %4, %5 : vector<1x5xf32>
    %7 = vector.broadcast %6 : vector<1x5xf32> to vector<256x5xf32>
    %8 = arith.subf %2, %7 : vector<256x5xf32>
    %9 = arith.mulf %8, %8 : vector<256x5xf32>
    %cst_3 = arith.constant dense<0.000000e+00> : vector<5xf32>
    %10 = vector.multi_reduction <add>, %9, %cst_3 [0] : vector<256x5xf32> to vector<5xf32>
    %11 = vector.shape_cast %10 : vector<5xf32> to vector<1x5xf32>
    %cst_4 = arith.constant 2.560000e+02 : f32
    %12 = vector.broadcast %cst_4 : f32 to vector<1x5xf32>
    %13 = arith.divf %11, %12 : vector<1x5xf32>
    %cst_5 = arith.constant 9.99999974E-6 : f32
    %14 = vector.broadcast %cst_5 : f32 to vector<1x5xf32>
    %15 = arith.addf %13, %14 : vector<1x5xf32>
    %16 = math.rsqrt %15 : vector<1x5xf32>
    %17 = vector.shape_cast %6 : vector<1x5xf32> to vector<1x1x5xf32>
    %18 = vector.shape_cast %16 : vector<1x5xf32> to vector<1x1x5xf32>
    %19 = tpu.iota {dimensions = array<i32: 0>} : vector<16x16x5xi32>
    %20 = tpu.iota {dimensions = array<i32: 1>} : vector<16x16x5xi32>
    %cst_6 = arith.constant 0.000000e+00 : f32
    %21 = vector.broadcast %cst_6 : f32 to vector<256x32xf32>
    %c0_7 = arith.constant 0 : index
    %c0_8 = arith.constant 0 : index
    %c0_9 = arith.constant 0 : index
    %c0_10 = arith.constant 0 : index
    %22 = vector.load %arg1[%c0_7, %c0_8, %c0_9, %c0_10] : memref<1x18x18x5xf32, #tpu.memory_space<vmem>>, vector<1x16x16x5xf32>
    %23 = vector.shape_cast %22 : vector<1x16x16x5xf32> to vector<16x16x5xf32>
    %24 = vector.broadcast %17 : vector<1x1x5xf32> to vector<16x16x5xf32>
    %25 = arith.subf %23, %24 : vector<16x16x5xf32>
    %26 = vector.broadcast %18 : vector<1x1x5xf32> to vector<16x16x5xf32>
    %27 = arith.mulf %25, %26 : vector<16x16x5xf32>
    %c0_i32 = arith.constant 0 : i32
    %28 = vector.broadcast %c0_i32 : i32 to vector<16x16x5xi32>
    %29 = arith.addi %19, %28 : vector<16x16x5xi32>
    %c1_i32 = arith.constant 1 : i32
    %30 = vector.broadcast %c1_i32 : i32 to vector<16x16x5xi32>
    %31 = arith.cmpi sge, %29, %30 : vector<16x16x5xi32>
    %c0_i32_11 = arith.constant 0 : i32
    %32 = vector.broadcast %c0_i32_11 : i32 to vector<16x16x5xi32>
    %33 = arith.addi %19, %32 : vector<16x16x5xi32>
    %c16_i32 = arith.constant 16 : i32
    %34 = vector.broadcast %c16_i32 : i32 to vector<16x16x5xi32>
    %35 = arith.cmpi sle, %33, %34 : vector<16x16x5xi32>
    %36 = arith.andi %31, %35 : vector<16x16x5xi1>
    %c0_i32_12 = arith.constant 0 : i32
    %37 = vector.broadcast %c0_i32_12 : i32 to vector<16x16x5xi32>
    %38 = arith.addi %20, %37 : vector<16x16x5xi32>
    %c1_i32_13 = arith.constant 1 : i32
    %39 = vector.broadcast %c1_i32_13 : i32 to vector<16x16x5xi32>
    %40 = arith.cmpi sge, %38, %39 : vector<16x16x5xi32>
    %41 = arith.andi %36, %40 : vector<16x16x5xi1>
    %c0_i32_14 = arith.constant 0 : i32
    %42 = vector.broadcast %c0_i32_14 : i32 to vector<16x16x5xi32>
    %43 = arith.addi %20, %42 : vector<16x16x5xi32>
    %c16_i32_15 = arith.constant 16 : i32
    %44 = vector.broadcast %c16_i32_15 : i32 to vector<16x16x5xi32>
    %45 = arith.cmpi sle, %43, %44 : vector<16x16x5xi32>
    %46 = arith.andi %41, %45 : vector<16x16x5xi1>
    %cst_16 = arith.constant 0.000000e+00 : f32
    %47 = vector.broadcast %cst_16 : f32 to vector<16x16x5xf32>
    %48 = arith.select %46, %27, %47 : vector<16x16x5xi1>, vector<16x16x5xf32>
    %c0_17 = arith.constant 0 : index
    %c0_18 = arith.constant 0 : index
    %49 = vector.load %arg2[%c0_17, %c0_18] : memref<45x32xf32, #tpu.memory_space<vmem>>, vector<5x32xf32>
    %50 = vector.shape_cast %48 : vector<16x16x5xf32> to vector<256x5xf32>
    %cst_19 = arith.constant dense<0.000000e+00> : vector<256x32xf32>
    %51 = tpu.matmul %50, %49, %cst_19 {dimension_numbers = #tpu.dot_dimension_numbers<[1], [0], [0], [1], [0, 0, 1, 1], [], []>} : vector<256x5xf32>, vector<5x32xf32>, vector<256x32xf32> -> vector<256x32xf32>
    %52 = arith.addf %21, %51 : vector<256x32xf32>
    %c0_20 = arith.constant 0 : index
    %c0_21 = arith.constant 0 : index
    %c1_22 = arith.constant 1 : index
    %c0_23 = arith.constant 0 : index
    %53 = vector.load %arg1[%c0_20, %c0_21, %c1_22, %c0_23] : memref<1x18x18x5xf32, #tpu.memory_space<vmem>>, vector<1x16x16x5xf32>
    %54 = vector.shape_cast %53 : vector<1x16x16x5xf32> to vector<16x16x5xf32>
    %55 = vector.broadcast %17 : vector<1x1x5xf32> to vector<16x16x5xf32>
    %56 = arith.subf %54, %55 : vector<16x16x5xf32>
    %57 = vector.broadcast %18 : vector<1x1x5xf32> to vector<16x16x5xf32>
    %58 = arith.mulf %56, %57 : vector<16x16x5xf32>
    %c0_i32_24 = arith.constant 0 : i32
    %59 = vector.broadcast %c0_i32_24 : i32 to vector<16x16x5xi32>
    %60 = arith.addi %19, %59 : vector<16x16x5xi32>
    %c1_i32_25 = arith.constant 1 : i32
    %61 = vector.broadcast %c1_i32_25 : i32 to vector<16x16x5xi32>
    %62 = arith.cmpi sge, %60, %61 : vector<16x16x5xi32>
    %c0_i32_26 = arith.constant 0 : i32
    %63 = vector.broadcast %c0_i32_26 : i32 to vector<16x16x5xi32>
    %64 = arith.addi %19, %63 : vector<16x16x5xi32>
    %c16_i32_27 = arith.constant 16 : i32
    %65 = vector.broadcast %c16_i32_27 : i32 to vector<16x16x5xi32>
    %66 = arith.cmpi sle, %64, %65 : vector<16x16x5xi32>
    %67 = arith.andi %62, %66 : vector<16x16x5xi1>
    %c1_i32_28 = arith.constant 1 : i32
    %68 = vector.broadcast %c1_i32_28 : i32 to vector<16x16x5xi32>
    %69 = arith.addi %20, %68 : vector<16x16x5xi32>
    %c1_i32_29 = arith.constant 1 : i32
    %70 = vector.broadcast %c1_i32_29 : i32 to vector<16x16x5xi32>
    %71 = arith.cmpi sge, %69, %70 : vector<16x16x5xi32>
    %72 = arith.andi %67, %71 : vector<16x16x5xi1>
    %c1_i32_30 = arith.constant 1 : i32
    %73 = vector.broadcast %c1_i32_30 : i32 to vector<16x16x5xi32>
    %74 = arith.addi %20, %73 : vector<16x16x5xi32>
    %c16_i32_31 = arith.constant 16 : i32
    %75 = vector.broadcast %c16_i32_31 : i32 to vector<16x16x5xi32>
    %76 = arith.cmpi sle, %74, %75 : vector<16x16x5xi32>
    %77 = arith.andi %72, %76 : vector<16x16x5xi1>
    %cst_32 = arith.constant 0.000000e+00 : f32
    %78 = vector.broadcast %cst_32 : f32 to vector<16x16x5xf32>
    %79 = arith.select %77, %58, %78 : vector<16x16x5xi1>, vector<16x16x5xf32>
    %c5 = arith.constant 5 : index
    %c0_33 = arith.constant 0 : index
    %80 = vector.load %arg2[%c5, %c0_33] : memref<45x32xf32, #tpu.memory_space<vmem>>, vector<5x32xf32>
    %81 = vector.shape_cast %79 : vector<16x16x5xf32> to vector<256x5xf32>
    %cst_34 = arith.constant dense<0.000000e+00> : vector<256x32xf32>
    %82 = tpu.matmul %81, %80, %cst_34 {dimension_numbers = #tpu.dot_dimension_numbers<[1], [0], [0], [1], [0, 0, 1, 1], [], []>} : vector<256x5xf32>, vector<5x32xf32>, vector<256x32xf32> -> vector<256x32xf32>
    %83 = arith.addf %52, %82 : vector<256x32xf32>
    %c0_35 = arith.constant 0 : index
    %c0_36 = arith.constant 0 : index
    %c2 = arith.constant 2 : index
    %c0_37 = arith.constant 0 : index
    %84 = vector.load %arg1[%c0_35, %c0_36, %c2, %c0_37] : memref<1x18x18x5xf32, #tpu.memory_space<vmem>>, vector<1x16x16x5xf32>
    %85 = vector.shape_cast %84 : vector<1x16x16x5xf32> to vector<16x16x5xf32>
    %86 = vector.broadcast %17 : vector<1x1x5xf32> to vector<16x16x5xf32>
    %87 = arith.subf %85, %86 : vector<16x16x5xf32>
    %88 = vector.broadcast %18 : vector<1x1x5xf32> to vector<16x16x5xf32>
    %89 = arith.mulf %87, %88 : vector<16x16x5xf32>
    %c0_i32_38 = arith.constant 0 : i32
    %90 = vector.broadcast %c0_i32_38 : i32 to vector<16x16x5xi32>
    %91 = arith.addi %19, %90 : vector<16x16x5xi32>
    %c1_i32_39 = arith.constant 1 : i32
    %92 = vector.broadcast %c1_i32_39 : i32 to vector<16x16x5xi32>
    %93 = arith.cmpi sge, %91, %92 : vector<16x16x5xi32>
    %c0_i32_40 = arith.constant 0 : i32
    %94 = vector.broadcast %c0_i32_40 : i32 to vector<16x16x5xi32>
    %95 = arith.addi %19, %94 : vector<16x16x5xi32>
    %c16_i32_41 = arith.constant 16 : i32
    %96 = vector.broadcast %c16_i32_41 : i32 to vector<16x16x5xi32>
    %97 = arith.cmpi sle, %95, %96 : vector<16x16x5xi32>
    %98 = arith.andi %93, %97 : vector<16x16x5xi1>
    %c2_i32 = arith.constant 2 : i32
    %99 = vector.broadcast %c2_i32 : i32 to vector<16x16x5xi32>
    %100 = arith.addi %20, %99 : vector<16x16x5xi32>
    %c1_i32_42 = arith.constant 1 : i32
    %101 = vector.broadcast %c1_i32_42 : i32 to vector<16x16x5xi32>
    %102 = arith.cmpi sge, %100, %101 : vector<16x16x5xi32>
    %103 = arith.andi %98, %102 : vector<16x16x5xi1>
    %c2_i32_43 = arith.constant 2 : i32
    %104 = vector.broadcast %c2_i32_43 : i32 to vector<16x16x5xi32>
    %105 = arith.addi %20, %104 : vector<16x16x5xi32>
    %c16_i32_44 = arith.constant 16 : i32
    %106 = vector.broadcast %c16_i32_44 : i32 to vector<16x16x5xi32>
    %107 = arith.cmpi sle, %105, %106 : vector<16x16x5xi32>
    %108 = arith.andi %103, %107 : vector<16x16x5xi1>
    %cst_45 = arith.constant 0.000000e+00 : f32
    %109 = vector.broadcast %cst_45 : f32 to vector<16x16x5xf32>
    %110 = arith.select %108, %89, %109 : vector<16x16x5xi1>, vector<16x16x5xf32>
    %c10 = arith.constant 10 : index
    %c0_46 = arith.constant 0 : index
    %111 = vector.load %arg2[%c10, %c0_46] : memref<45x32xf32, #tpu.memory_space<vmem>>, vector<5x32xf32>
    %112 = vector.shape_cast %110 : vector<16x16x5xf32> to vector<256x5xf32>
    %cst_47 = arith.constant dense<0.000000e+00> : vector<256x32xf32>
    %113 = tpu.matmul %112, %111, %cst_47 {dimension_numbers = #tpu.dot_dimension_numbers<[1], [0], [0], [1], [0, 0, 1, 1], [], []>} : vector<256x5xf32>, vector<5x32xf32>, vector<256x32xf32> -> vector<256x32xf32>
    %114 = arith.addf %83, %113 : vector<256x32xf32>
    %c0_48 = arith.constant 0 : index
    %c1_49 = arith.constant 1 : index
    %c0_50 = arith.constant 0 : index
    %c0_51 = arith.constant 0 : index
    %115 = vector.load %arg1[%c0_48, %c1_49, %c0_50, %c0_51] : memref<1x18x18x5xf32, #tpu.memory_space<vmem>>, vector<1x16x16x5xf32>
    %116 = vector.shape_cast %115 : vector<1x16x16x5xf32> to vector<16x16x5xf32>
    %117 = vector.broadcast %17 : vector<1x1x5xf32> to vector<16x16x5xf32>
    %118 = arith.subf %116, %117 : vector<16x16x5xf32>
    %119 = vector.broadcast %18 : vector<1x1x5xf32> to vector<16x16x5xf32>
    %120 = arith.mulf %118, %119 : vector<16x16x5xf32>
    %c1_i32_52 = arith.constant 1 : i32
    %121 = vector.broadcast %c1_i32_52 : i32 to vector<16x16x5xi32>
    %122 = arith.addi %19, %121 : vector<16x16x5xi32>
    %c1_i32_53 = arith.constant 1 : i32
    %123 = vector.broadcast %c1_i32_53 : i32 to vector<16x16x5xi32>
    %124 = arith.cmpi sge, %122, %123 : vector<16x16x5xi32>
    %c1_i32_54 = arith.constant 1 : i32
    %125 = vector.broadcast %c1_i32_54 : i32 to vector<16x16x5xi32>
    %126 = arith.addi %19, %125 : vector<16x16x5xi32>
    %c16_i32_55 = arith.constant 16 : i32
    %127 = vector.broadcast %c16_i32_55 : i32 to vector<16x16x5xi32>
    %128 = arith.cmpi sle, %126, %127 : vector<16x16x5xi32>
    %129 = arith.andi %124, %128 : vector<16x16x5xi1>
    %c0_i32_56 = arith.constant 0 : i32
    %130 = vector.broadcast %c0_i32_56 : i32 to vector<16x16x5xi32>
    %131 = arith.addi %20, %130 : vector<16x16x5xi32>
    %c1_i32_57 = arith.constant 1 : i32
    %132 = vector.broadcast %c1_i32_57 : i32 to vector<16x16x5xi32>
    %133 = arith.cmpi sge, %131, %132 : vector<16x16x5xi32>
    %134 = arith.andi %129, %133 : vector<16x16x5xi1>
    %c0_i32_58 = arith.constant 0 : i32
    %135 = vector.broadcast %c0_i32_58 : i32 to vector<16x16x5xi32>
    %136 = arith.addi %20, %135 : vector<16x16x5xi32>
    %c16_i32_59 = arith.constant 16 : i32
    %137 = vector.broadcast %c16_i32_59 : i32 to vector<16x16x5xi32>
    %138 = arith.cmpi sle, %136, %137 : vector<16x16x5xi32>
    %139 = arith.andi %134, %138 : vector<16x16x5xi1>
    %cst_60 = arith.constant 0.000000e+00 : f32
    %140 = vector.broadcast %cst_60 : f32 to vector<16x16x5xf32>
    %141 = arith.select %139, %120, %140 : vector<16x16x5xi1>, vector<16x16x5xf32>
    %c15 = arith.constant 15 : index
    %c0_61 = arith.constant 0 : index
    %142 = vector.load %arg2[%c15, %c0_61] : memref<45x32xf32, #tpu.memory_space<vmem>>, vector<5x32xf32>
    %143 = vector.shape_cast %141 : vector<16x16x5xf32> to vector<256x5xf32>
    %cst_62 = arith.constant dense<0.000000e+00> : vector<256x32xf32>
    %144 = tpu.matmul %143, %142, %cst_62 {dimension_numbers = #tpu.dot_dimension_numbers<[1], [0], [0], [1], [0, 0, 1, 1], [], []>} : vector<256x5xf32>, vector<5x32xf32>, vector<256x32xf32> -> vector<256x32xf32>
    %145 = arith.addf %114, %144 : vector<256x32xf32>
    %c0_63 = arith.constant 0 : index
    %c1_64 = arith.constant 1 : index
    %c1_65 = arith.constant 1 : index
    %c0_66 = arith.constant 0 : index
    %146 = vector.load %arg1[%c0_63, %c1_64, %c1_65, %c0_66] : memref<1x18x18x5xf32, #tpu.memory_space<vmem>>, vector<1x16x16x5xf32>
    %147 = vector.shape_cast %146 : vector<1x16x16x5xf32> to vector<16x16x5xf32>
    %148 = vector.broadcast %17 : vector<1x1x5xf32> to vector<16x16x5xf32>
    %149 = arith.subf %147, %148 : vector<16x16x5xf32>
    %150 = vector.broadcast %18 : vector<1x1x5xf32> to vector<16x16x5xf32>
    %151 = arith.mulf %149, %150 : vector<16x16x5xf32>
    %c1_i32_67 = arith.constant 1 : i32
    %152 = vector.broadcast %c1_i32_67 : i32 to vector<16x16x5xi32>
    %153 = arith.addi %19, %152 : vector<16x16x5xi32>
    %c1_i32_68 = arith.constant 1 : i32
    %154 = vector.broadcast %c1_i32_68 : i32 to vector<16x16x5xi32>
    %155 = arith.cmpi sge, %153, %154 : vector<16x16x5xi32>
    %c1_i32_69 = arith.constant 1 : i32
    %156 = vector.broadcast %c1_i32_69 : i32 to vector<16x16x5xi32>
    %157 = arith.addi %19, %156 : vector<16x16x5xi32>
    %c16_i32_70 = arith.constant 16 : i32
    %158 = vector.broadcast %c16_i32_70 : i32 to vector<16x16x5xi32>
    %159 = arith.cmpi sle, %157, %158 : vector<16x16x5xi32>
    %160 = arith.andi %155, %159 : vector<16x16x5xi1>
    %c1_i32_71 = arith.constant 1 : i32
    %161 = vector.broadcast %c1_i32_71 : i32 to vector<16x16x5xi32>
    %162 = arith.addi %20, %161 : vector<16x16x5xi32>
    %c1_i32_72 = arith.constant 1 : i32
    %163 = vector.broadcast %c1_i32_72 : i32 to vector<16x16x5xi32>
    %164 = arith.cmpi sge, %162, %163 : vector<16x16x5xi32>
    %165 = arith.andi %160, %164 : vector<16x16x5xi1>
    %c1_i32_73 = arith.constant 1 : i32
    %166 = vector.broadcast %c1_i32_73 : i32 to vector<16x16x5xi32>
    %167 = arith.addi %20, %166 : vector<16x16x5xi32>
    %c16_i32_74 = arith.constant 16 : i32
    %168 = vector.broadcast %c16_i32_74 : i32 to vector<16x16x5xi32>
    %169 = arith.cmpi sle, %167, %168 : vector<16x16x5xi32>
    %170 = arith.andi %165, %169 : vector<16x16x5xi1>
    %cst_75 = arith.constant 0.000000e+00 : f32
    %171 = vector.broadcast %cst_75 : f32 to vector<16x16x5xf32>
    %172 = arith.select %170, %151, %171 : vector<16x16x5xi1>, vector<16x16x5xf32>
    %c20 = arith.constant 20 : index
    %c0_76 = arith.constant 0 : index
    %173 = vector.load %arg2[%c20, %c0_76] : memref<45x32xf32, #tpu.memory_space<vmem>>, vector<5x32xf32>
    %174 = vector.shape_cast %172 : vector<16x16x5xf32> to vector<256x5xf32>
    %cst_77 = arith.constant dense<0.000000e+00> : vector<256x32xf32>
    %175 = tpu.matmul %174, %173, %cst_77 {dimension_numbers = #tpu.dot_dimension_numbers<[1], [0], [0], [1], [0, 0, 1, 1], [], []>} : vector<256x5xf32>, vector<5x32xf32>, vector<256x32xf32> -> vector<256x32xf32>
    %176 = arith.addf %145, %175 : vector<256x32xf32>
    %c0_78 = arith.constant 0 : index
    %c1_79 = arith.constant 1 : index
    %c2_80 = arith.constant 2 : index
    %c0_81 = arith.constant 0 : index
    %177 = vector.load %arg1[%c0_78, %c1_79, %c2_80, %c0_81] : memref<1x18x18x5xf32, #tpu.memory_space<vmem>>, vector<1x16x16x5xf32>
    %178 = vector.shape_cast %177 : vector<1x16x16x5xf32> to vector<16x16x5xf32>
    %179 = vector.broadcast %17 : vector<1x1x5xf32> to vector<16x16x5xf32>
    %180 = arith.subf %178, %179 : vector<16x16x5xf32>
    %181 = vector.broadcast %18 : vector<1x1x5xf32> to vector<16x16x5xf32>
    %182 = arith.mulf %180, %181 : vector<16x16x5xf32>
    %c1_i32_82 = arith.constant 1 : i32
    %183 = vector.broadcast %c1_i32_82 : i32 to vector<16x16x5xi32>
    %184 = arith.addi %19, %183 : vector<16x16x5xi32>
    %c1_i32_83 = arith.constant 1 : i32
    %185 = vector.broadcast %c1_i32_83 : i32 to vector<16x16x5xi32>
    %186 = arith.cmpi sge, %184, %185 : vector<16x16x5xi32>
    %c1_i32_84 = arith.constant 1 : i32
    %187 = vector.broadcast %c1_i32_84 : i32 to vector<16x16x5xi32>
    %188 = arith.addi %19, %187 : vector<16x16x5xi32>
    %c16_i32_85 = arith.constant 16 : i32
    %189 = vector.broadcast %c16_i32_85 : i32 to vector<16x16x5xi32>
    %190 = arith.cmpi sle, %188, %189 : vector<16x16x5xi32>
    %191 = arith.andi %186, %190 : vector<16x16x5xi1>
    %c2_i32_86 = arith.constant 2 : i32
    %192 = vector.broadcast %c2_i32_86 : i32 to vector<16x16x5xi32>
    %193 = arith.addi %20, %192 : vector<16x16x5xi32>
    %c1_i32_87 = arith.constant 1 : i32
    %194 = vector.broadcast %c1_i32_87 : i32 to vector<16x16x5xi32>
    %195 = arith.cmpi sge, %193, %194 : vector<16x16x5xi32>
    %196 = arith.andi %191, %195 : vector<16x16x5xi1>
    %c2_i32_88 = arith.constant 2 : i32
    %197 = vector.broadcast %c2_i32_88 : i32 to vector<16x16x5xi32>
    %198 = arith.addi %20, %197 : vector<16x16x5xi32>
    %c16_i32_89 = arith.constant 16 : i32
    %199 = vector.broadcast %c16_i32_89 : i32 to vector<16x16x5xi32>
    %200 = arith.cmpi sle, %198, %199 : vector<16x16x5xi32>
    %201 = arith.andi %196, %200 : vector<16x16x5xi1>
    %cst_90 = arith.constant 0.000000e+00 : f32
    %202 = vector.broadcast %cst_90 : f32 to vector<16x16x5xf32>
    %203 = arith.select %201, %182, %202 : vector<16x16x5xi1>, vector<16x16x5xf32>
    %c25 = arith.constant 25 : index
    %c0_91 = arith.constant 0 : index
    %204 = vector.load %arg2[%c25, %c0_91] : memref<45x32xf32, #tpu.memory_space<vmem>>, vector<5x32xf32>
    %205 = vector.shape_cast %203 : vector<16x16x5xf32> to vector<256x5xf32>
    %cst_92 = arith.constant dense<0.000000e+00> : vector<256x32xf32>
    %206 = tpu.matmul %205, %204, %cst_92 {dimension_numbers = #tpu.dot_dimension_numbers<[1], [0], [0], [1], [0, 0, 1, 1], [], []>} : vector<256x5xf32>, vector<5x32xf32>, vector<256x32xf32> -> vector<256x32xf32>
    %207 = arith.addf %176, %206 : vector<256x32xf32>
    %c0_93 = arith.constant 0 : index
    %c2_94 = arith.constant 2 : index
    %c0_95 = arith.constant 0 : index
    %c0_96 = arith.constant 0 : index
    %208 = vector.load %arg1[%c0_93, %c2_94, %c0_95, %c0_96] : memref<1x18x18x5xf32, #tpu.memory_space<vmem>>, vector<1x16x16x5xf32>
    %209 = vector.shape_cast %208 : vector<1x16x16x5xf32> to vector<16x16x5xf32>
    %210 = vector.broadcast %17 : vector<1x1x5xf32> to vector<16x16x5xf32>
    %211 = arith.subf %209, %210 : vector<16x16x5xf32>
    %212 = vector.broadcast %18 : vector<1x1x5xf32> to vector<16x16x5xf32>
    %213 = arith.mulf %211, %212 : vector<16x16x5xf32>
    %c2_i32_97 = arith.constant 2 : i32
    %214 = vector.broadcast %c2_i32_97 : i32 to vector<16x16x5xi32>
    %215 = arith.addi %19, %214 : vector<16x16x5xi32>
    %c1_i32_98 = arith.constant 1 : i32
    %216 = vector.broadcast %c1_i32_98 : i32 to vector<16x16x5xi32>
    %217 = arith.cmpi sge, %215, %216 : vector<16x16x5xi32>
    %c2_i32_99 = arith.constant 2 : i32
    %218 = vector.broadcast %c2_i32_99 : i32 to vector<16x16x5xi32>
    %219 = arith.addi %19, %218 : vector<16x16x5xi32>
    %c16_i32_100 = arith.constant 16 : i32
    %220 = vector.broadcast %c16_i32_100 : i32 to vector<16x16x5xi32>
    %221 = arith.cmpi sle, %219, %220 : vector<16x16x5xi32>
    %222 = arith.andi %217, %221 : vector<16x16x5xi1>
    %c0_i32_101 = arith.constant 0 : i32
    %223 = vector.broadcast %c0_i32_101 : i32 to vector<16x16x5xi32>
    %224 = arith.addi %20, %223 : vector<16x16x5xi32>
    %c1_i32_102 = arith.constant 1 : i32
    %225 = vector.broadcast %c1_i32_102 : i32 to vector<16x16x5xi32>
    %226 = arith.cmpi sge, %224, %225 : vector<16x16x5xi32>
    %227 = arith.andi %222, %226 : vector<16x16x5xi1>
    %c0_i32_103 = arith.constant 0 : i32
    %228 = vector.broadcast %c0_i32_103 : i32 to vector<16x16x5xi32>
    %229 = arith.addi %20, %228 : vector<16x16x5xi32>
    %c16_i32_104 = arith.constant 16 : i32
    %230 = vector.broadcast %c16_i32_104 : i32 to vector<16x16x5xi32>
    %231 = arith.cmpi sle, %229, %230 : vector<16x16x5xi32>
    %232 = arith.andi %227, %231 : vector<16x16x5xi1>
    %cst_105 = arith.constant 0.000000e+00 : f32
    %233 = vector.broadcast %cst_105 : f32 to vector<16x16x5xf32>
    %234 = arith.select %232, %213, %233 : vector<16x16x5xi1>, vector<16x16x5xf32>
    %c30 = arith.constant 30 : index
    %c0_106 = arith.constant 0 : index
    %235 = vector.load %arg2[%c30, %c0_106] : memref<45x32xf32, #tpu.memory_space<vmem>>, vector<5x32xf32>
    %236 = vector.shape_cast %234 : vector<16x16x5xf32> to vector<256x5xf32>
    %cst_107 = arith.constant dense<0.000000e+00> : vector<256x32xf32>
    %237 = tpu.matmul %236, %235, %cst_107 {dimension_numbers = #tpu.dot_dimension_numbers<[1], [0], [0], [1], [0, 0, 1, 1], [], []>} : vector<256x5xf32>, vector<5x32xf32>, vector<256x32xf32> -> vector<256x32xf32>
    %238 = arith.addf %207, %237 : vector<256x32xf32>
    %c0_108 = arith.constant 0 : index
    %c2_109 = arith.constant 2 : index
    %c1_110 = arith.constant 1 : index
    %c0_111 = arith.constant 0 : index
    %239 = vector.load %arg1[%c0_108, %c2_109, %c1_110, %c0_111] : memref<1x18x18x5xf32, #tpu.memory_space<vmem>>, vector<1x16x16x5xf32>
    %240 = vector.shape_cast %239 : vector<1x16x16x5xf32> to vector<16x16x5xf32>
    %241 = vector.broadcast %17 : vector<1x1x5xf32> to vector<16x16x5xf32>
    %242 = arith.subf %240, %241 : vector<16x16x5xf32>
    %243 = vector.broadcast %18 : vector<1x1x5xf32> to vector<16x16x5xf32>
    %244 = arith.mulf %242, %243 : vector<16x16x5xf32>
    %c2_i32_112 = arith.constant 2 : i32
    %245 = vector.broadcast %c2_i32_112 : i32 to vector<16x16x5xi32>
    %246 = arith.addi %19, %245 : vector<16x16x5xi32>
    %c1_i32_113 = arith.constant 1 : i32
    %247 = vector.broadcast %c1_i32_113 : i32 to vector<16x16x5xi32>
    %248 = arith.cmpi sge, %246, %247 : vector<16x16x5xi32>
    %c2_i32_114 = arith.constant 2 : i32
    %249 = vector.broadcast %c2_i32_114 : i32 to vector<16x16x5xi32>
    %250 = arith.addi %19, %249 : vector<16x16x5xi32>
    %c16_i32_115 = arith.constant 16 : i32
    %251 = vector.broadcast %c16_i32_115 : i32 to vector<16x16x5xi32>
    %252 = arith.cmpi sle, %250, %251 : vector<16x16x5xi32>
    %253 = arith.andi %248, %252 : vector<16x16x5xi1>
    %c1_i32_116 = arith.constant 1 : i32
    %254 = vector.broadcast %c1_i32_116 : i32 to vector<16x16x5xi32>
    %255 = arith.addi %20, %254 : vector<16x16x5xi32>
    %c1_i32_117 = arith.constant 1 : i32
    %256 = vector.broadcast %c1_i32_117 : i32 to vector<16x16x5xi32>
    %257 = arith.cmpi sge, %255, %256 : vector<16x16x5xi32>
    %258 = arith.andi %253, %257 : vector<16x16x5xi1>
    %c1_i32_118 = arith.constant 1 : i32
    %259 = vector.broadcast %c1_i32_118 : i32 to vector<16x16x5xi32>
    %260 = arith.addi %20, %259 : vector<16x16x5xi32>
    %c16_i32_119 = arith.constant 16 : i32
    %261 = vector.broadcast %c16_i32_119 : i32 to vector<16x16x5xi32>
    %262 = arith.cmpi sle, %260, %261 : vector<16x16x5xi32>
    %263 = arith.andi %258, %262 : vector<16x16x5xi1>
    %cst_120 = arith.constant 0.000000e+00 : f32
    %264 = vector.broadcast %cst_120 : f32 to vector<16x16x5xf32>
    %265 = arith.select %263, %244, %264 : vector<16x16x5xi1>, vector<16x16x5xf32>
    %c35 = arith.constant 35 : index
    %c0_121 = arith.constant 0 : index
    %266 = vector.load %arg2[%c35, %c0_121] : memref<45x32xf32, #tpu.memory_space<vmem>>, vector<5x32xf32>
    %267 = vector.shape_cast %265 : vector<16x16x5xf32> to vector<256x5xf32>
    %cst_122 = arith.constant dense<0.000000e+00> : vector<256x32xf32>
    %268 = tpu.matmul %267, %266, %cst_122 {dimension_numbers = #tpu.dot_dimension_numbers<[1], [0], [0], [1], [0, 0, 1, 1], [], []>} : vector<256x5xf32>, vector<5x32xf32>, vector<256x32xf32> -> vector<256x32xf32>
    %269 = arith.addf %238, %268 : vector<256x32xf32>
    %c0_123 = arith.constant 0 : index
    %c2_124 = arith.constant 2 : index
    %c2_125 = arith.constant 2 : index
    %c0_126 = arith.constant 0 : index
    %270 = vector.load %arg1[%c0_123, %c2_124, %c2_125, %c0_126] : memref<1x18x18x5xf32, #tpu.memory_space<vmem>>, vector<1x16x16x5xf32>
    %271 = vector.shape_cast %270 : vector<1x16x16x5xf32> to vector<16x16x5xf32>
    %272 = vector.broadcast %17 : vector<1x1x5xf32> to vector<16x16x5xf32>
    %273 = arith.subf %271, %272 : vector<16x16x5xf32>
    %274 = vector.broadcast %18 : vector<1x1x5xf32> to vector<16x16x5xf32>
    %275 = arith.mulf %273, %274 : vector<16x16x5xf32>
    %c2_i32_127 = arith.constant 2 : i32
    %276 = vector.broadcast %c2_i32_127 : i32 to vector<16x16x5xi32>
    %277 = arith.addi %19, %276 : vector<16x16x5xi32>
    %c1_i32_128 = arith.constant 1 : i32
    %278 = vector.broadcast %c1_i32_128 : i32 to vector<16x16x5xi32>
    %279 = arith.cmpi sge, %277, %278 : vector<16x16x5xi32>
    %c2_i32_129 = arith.constant 2 : i32
    %280 = vector.broadcast %c2_i32_129 : i32 to vector<16x16x5xi32>
    %281 = arith.addi %19, %280 : vector<16x16x5xi32>
    %c16_i32_130 = arith.constant 16 : i32
    %282 = vector.broadcast %c16_i32_130 : i32 to vector<16x16x5xi32>
    %283 = arith.cmpi sle, %281, %282 : vector<16x16x5xi32>
    %284 = arith.andi %279, %283 : vector<16x16x5xi1>
    %c2_i32_131 = arith.constant 2 : i32
    %285 = vector.broadcast %c2_i32_131 : i32 to vector<16x16x5xi32>
    %286 = arith.addi %20, %285 : vector<16x16x5xi32>
    %c1_i32_132 = arith.constant 1 : i32
    %287 = vector.broadcast %c1_i32_132 : i32 to vector<16x16x5xi32>
    %288 = arith.cmpi sge, %286, %287 : vector<16x16x5xi32>
    %289 = arith.andi %284, %288 : vector<16x16x5xi1>
    %c2_i32_133 = arith.constant 2 : i32
    %290 = vector.broadcast %c2_i32_133 : i32 to vector<16x16x5xi32>
    %291 = arith.addi %20, %290 : vector<16x16x5xi32>
    %c16_i32_134 = arith.constant 16 : i32
    %292 = vector.broadcast %c16_i32_134 : i32 to vector<16x16x5xi32>
    %293 = arith.cmpi sle, %291, %292 : vector<16x16x5xi32>
    %294 = arith.andi %289, %293 : vector<16x16x5xi1>
    %cst_135 = arith.constant 0.000000e+00 : f32
    %295 = vector.broadcast %cst_135 : f32 to vector<16x16x5xf32>
    %296 = arith.select %294, %275, %295 : vector<16x16x5xi1>, vector<16x16x5xf32>
    %c40 = arith.constant 40 : index
    %c0_136 = arith.constant 0 : index
    %297 = vector.load %arg2[%c40, %c0_136] : memref<45x32xf32, #tpu.memory_space<vmem>>, vector<5x32xf32>
    %298 = vector.shape_cast %296 : vector<16x16x5xf32> to vector<256x5xf32>
    %cst_137 = arith.constant dense<0.000000e+00> : vector<256x32xf32>
    %299 = tpu.matmul %298, %297, %cst_137 {dimension_numbers = #tpu.dot_dimension_numbers<[1], [0], [0], [1], [0, 0, 1, 1], [], []>} : vector<256x5xf32>, vector<5x32xf32>, vector<256x32xf32> -> vector<256x32xf32>
    %300 = arith.addf %269, %299 : vector<256x32xf32>
    %c0_138 = arith.constant 0 : index
    %c0_139 = arith.constant 0 : index
    %301 = vector.load %arg3[%c0_138, %c0_139] : memref<1x32xf32, #tpu.memory_space<vmem>>, vector<1x32xf32>
    %302 = vector.broadcast %301 : vector<1x32xf32> to vector<256x32xf32>
    %303 = arith.addf %300, %302 : vector<256x32xf32>
    %cst_140 = arith.constant dense<0.000000e+00> : vector<32xf32>
    %304 = vector.multi_reduction <add>, %303, %cst_140 [0] : vector<256x32xf32> to vector<32xf32>
    %305 = vector.shape_cast %304 : vector<32xf32> to vector<1x32xf32>
    %cst_141 = arith.constant 2.560000e+02 : f32
    %306 = vector.broadcast %cst_141 : f32 to vector<1x32xf32>
    %307 = arith.divf %305, %306 : vector<1x32xf32>
    %308 = vector.broadcast %307 : vector<1x32xf32> to vector<256x32xf32>
    %309 = arith.subf %303, %308 : vector<256x32xf32>
    %310 = arith.mulf %309, %309 : vector<256x32xf32>
    %cst_142 = arith.constant dense<0.000000e+00> : vector<32xf32>
    %311 = vector.multi_reduction <add>, %310, %cst_142 [0] : vector<256x32xf32> to vector<32xf32>
    %312 = vector.shape_cast %311 : vector<32xf32> to vector<1x32xf32>
    %cst_143 = arith.constant 2.560000e+02 : f32
    %313 = vector.broadcast %cst_143 : f32 to vector<1x32xf32>
    %314 = arith.divf %312, %313 : vector<1x32xf32>
    %315 = vector.broadcast %307 : vector<1x32xf32> to vector<256x32xf32>
    %316 = arith.subf %303, %315 : vector<256x32xf32>
    %cst_144 = arith.constant 9.99999974E-6 : f32
    %317 = vector.broadcast %cst_144 : f32 to vector<1x32xf32>
    %318 = arith.addf %314, %317 : vector<1x32xf32>
    %319 = math.rsqrt %318 : vector<1x32xf32>
    %320 = vector.broadcast %319 : vector<1x32xf32> to vector<256x32xf32>
    %321 = arith.mulf %316, %320 : vector<256x32xf32>
    %cst_145 = arith.constant 5.000000e-01 : f32
    %322 = vector.broadcast %cst_145 : f32 to vector<256x32xf32>
    %323 = arith.mulf %322, %321 : vector<256x32xf32>
    %cst_146 = arith.constant 0.707106769 : f32
    %324 = vector.broadcast %cst_146 : f32 to vector<256x32xf32>
    %325 = arith.mulf %321, %324 : vector<256x32xf32>
    %326 = math.erf %325 : vector<256x32xf32>
    %cst_147 = arith.constant 1.000000e+00 : f32
    %327 = vector.broadcast %cst_147 : f32 to vector<256x32xf32>
    %328 = arith.addf %327, %326 : vector<256x32xf32>
    %329 = arith.mulf %323, %328 : vector<256x32xf32>
    %c0_148 = arith.constant 0 : index
    %c0_149 = arith.constant 0 : index
    %c0_150 = arith.constant 0 : index
    %330 = vector.load %arg4[%c0_148, %c0_149, %c0_150] : memref<1x256x32xf32, #tpu.memory_space<vmem>>, vector<1x256x32xf32>
    %331 = vector.shape_cast %330 : vector<1x256x32xf32> to vector<256x32xf32>
    %332 = vector.shape_cast %329 : vector<256x32xf32> to vector<1x256x32xf32>
    tpu.vector_store %arg4[%c0_148, %c0_149, %c0_150], %332 {strides = array<i32>} : memref<1x256x32xf32, #tpu.memory_space<vmem>>, vector<1x256x32xf32>,
    return
  }
  func.func @transform_0(%arg0: i32) -> (i32, i32, i32, i32) {
    %c0_i32 = arith.constant 0 : i32
    %c0_i32_0 = arith.constant 0 : i32
    %c0_i32_1 = arith.constant 0 : i32
    %c0_i32_2 = arith.constant 0 : i32
    return %arg0, %c0_i32, %c0_i32_0, %c0_i32_1 : i32, i32, i32, i32
  }
  func.func @transform_1(%arg0: i32) -> (i32, i32) {
    %c0_i32 = arith.constant 0 : i32
    %c0_i32_0 = arith.constant 0 : i32
    %c0_i32_1 = arith.constant 0 : i32
    return %c0_i32, %c0_i32_0 : i32, i32
  }
  func.func @transform_2(%arg0: i32) -> (i32, i32) {
    %c0_i32 = arith.constant 0 : i32
    %c0_i32_0 = arith.constant 0 : i32
    %c0_i32_1 = arith.constant 0 : i32
    return %c0_i32, %c0_i32_0 : i32, i32
  }
  func.func @transform_3(%arg0: i32) -> (i32, i32, i32) {
    %c0_i32 = arith.constant 0 : i32
    %c0_i32_0 = arith.constant 0 : i32
    %c0_i32_1 = arith.constant 0 : i32
    return %arg0, %c0_i32, %c0_i32_0 : i32, i32, i32
  }
}

</mosaic_0001>

<llo_original>
// kernel: tpu_custom_call.1
$region0: #{tpu_custom_call.1}
  #allocation0 [shape = 'u32[]', space=smem, size = 0x4, offset = 0x4, fixed_abs, tag = 'smem constant byte address 0x4 - core index']
  #allocation1 [shape = 'u32[144,128]{1,0:T(1,128)}', space=vmem, size = 0x12000, scoped, tag = 'internal scratch']
  %s0 = inlined_call_operand.vmem [shape: f32[2,18,18,5], index: 0, kind: input, shape index: {}]
  %s1 = inlined_call_operand.vmem [shape: f32[45,32], index: 1, kind: input, shape index: {}]
  %s2 = inlined_call_operand.vmem [shape: f32[1,32], index: 2, kind: input, shape index: {}]
  %s3 = inlined_call_operand.vmem [shape: f32[2,256,32], index: 3, kind: output, shape index: {}]
  %s4 = sld [smem:[#allocation0]]
  $region45: #{tpu_custom_call.1} parent=0
    _
  %s6 = ssub.s32 1, %s4
  %s7 = scalar_select 0, %s6, %s4
  loop: start=0, step=1, limit=4
  $region2: #{tpu_custom_call.1} parent=0 // loop_pre_header
    _
  $region3: #{tpu_custom_call.1} parent=0 // loop_header
    %s9 = sphi 0, %s13
    %p10 = scmp.ge.s32.totalorder %s9, 4
    %s19 = sphi 0, %s21
    %s22 = sphi 0, %s19
    %s23 = sphi 0, %s22
    %s39 = sphi 0, %s23
    %s43 = sphi 0, %s43
    %s45 = sphi 0, %s43
    %s46 = sphi 0, %s45
    %s60 = sphi 0, %s46
    %s64 = sphi 0, %s64
    %s66 = sphi 0, %s64
    %s67 = sphi 0, %s66
    %s81 = sphi 0, %s67
    %s87 = sphi 0, %s89
    %s90 = sphi 0, %s87
    %s91 = sphi 0, %s90
    %s107 = sphi 0, %s91
  $region4: #{tpu_custom_call.1} parent=0 // loop_header_branch
    %12 = sbr.rel (%p10) target = $region8
  $region5: #{tpu_custom_call.1} parent=0 // loop_body
    %s14 = ssub.s32 %s9, 1
    %s15 = ssub.s32 %s9, 2
    %s16 = sadd.s32 %s9, 1
    %s17 = ssub.s32 %s9, %s16
    %p18 = scmp.eq.s32.totalorder %s17, 0
    %s20 = sadd.s32 %s19, 1
    %s21 = scalar_select %p18, %s19, %s20
    %p24 = pneg %p18
    %p25 = scmp.eq.s32.totalorder %s9, 1
    %p26 = por %p24, %p25
    %p27 = scmp.ne.s32.totalorder %s19, %s22
    %p28 = scmp.eq.s32.totalorder %s9, 0
    %p29 = por %p27, %p28
    %p30 = scmp.ne.s32.totalorder %s19, %s22
    %p31 = scmp.eq.s32.totalorder %s14, 1
    %p32 = por %p30, %p31
    %p33 = scmp.ne.s32.totalorder %s22, %s23
    %p34 = scmp.eq.s32.totalorder %s14, 0
    %p35 = por %p33, %p34
    %p36 = scmp.ne.s32.totalorder %s22, %s23
    %p37 = scmp.eq.s32.totalorder %s15, 1
    %p38 = por %p36, %p37
    %p40 = scmp.ne.s32.totalorder %s23, %s39
    %p41 = scmp.eq.s32.totalorder %s15, 0
    %p42 = por %p40, %p41
    %s44 = sadd.s32 %s43, 1
    %p47 = scmp.eq.s32.totalorder %s9, 1
    %p48 = scmp.ne.s32.totalorder %s43, %s45
    %p49 = scmp.eq.s32.totalorder %s9, 0
    %p50 = por %p48, %p49
    %p51 = scmp.ne.s32.totalorder %s43, %s45
    %p52 = scmp.eq.s32.totalorder %s14, 1
    %p53 = por %p51, %p52
    %p54 = scmp.ne.s32.totalorder %s45, %s46
    %p55 = scmp.eq.s32.totalorder %s14, 0
    %p56 = por %p54, %p55
    %p57 = scmp.ne.s32.totalorder %s45, %s46
    %p58 = scmp.eq.s32.totalorder %s15, 1
    %p59 = por %p57, %p58
    %p61 = scmp.ne.s32.totalorder %s46, %s60
    %p62 = scmp.eq.s32.totalorder %s15, 0
    %p63 = por %p61, %p62
    %s65 = sadd.s32 %s64, 1
    %p68 = scmp.eq.s32.totalorder %s9, 1
    %p69 = scmp.ne.s32.totalorder %s64, %s66
    %p70 = scmp.eq.s32.totalorder %s9, 0
    %p71 = por %p69, %p70
    %p72 = scmp.ne.s32.totalorder %s64, %s66
    %p73 = scmp.eq.s32.totalorder %s14, 1
    %p74 = por %p72, %p73
    %p75 = scmp.ne.s32.totalorder %s66, %s67
    %p76 = scmp.eq.s32.totalorder %s14, 0
    %p77 = por %p75, %p76
    %p78 = scmp.ne.s32.totalorder %s66, %s67
    %p79 = scmp.eq.s32.totalorder %s15, 1
    %p80 = por %p78, %p79
    %p82 = scmp.ne.s32.totalorder %s67, %s81
    %p83 = scmp.eq.s32.totalorder %s15, 0
    %p84 = por %p82, %p83
    %s85 = ssub.s32 %s9, %s16
    %p86 = scmp.eq.s32.totalorder %s85, 0
    %s88 = sadd.s32 %s87, 1
    %s89 = scalar_select %p86, %s87, %s88
    %p92 = pneg %p86
    %p93 = scmp.eq.s32.totalorder %s9, 1
    %p94 = por %p92, %p93
    %p95 = scmp.ne.s32.totalorder %s87, %s90
    %p96 = scmp.eq.s32.totalorder %s9, 0
    %p97 = por %p95, %p96
    %p98 = scmp.ne.s32.totalorder %s87, %s90
    %p99 = scmp.eq.s32.totalorder %s14, 1
    %p100 = por %p98, %p99
    %p101 = scmp.ne.s32.totalorder %s90, %s91
    %p102 = scmp.eq.s32.totalorder %s14, 0
    %p103 = por %p101, %p102
    %p104 = scmp.ne.s32.totalorder %s90, %s91
    %p105 = scmp.eq.s32.totalorder %s15, 1
    %p106 = por %p104, %p105
    %p108 = scmp.ne.s32.totalorder %s91, %s107
    %p109 = scmp.eq.s32.totalorder %s15, 0
    %p110 = por %p108, %p109
    %p111 = scmp.le.s32.totalorder 1, %s9
    %p112 = scmp.lt.s32.totalorder %s9, 3
    %p113 = pnand %p111, %p112
    %p114 = pneg %p113
    // Predicated region
    $region9: #{tpu_custom_call.1} parent=5 // pred_check
      _
    $region10: #{tpu_custom_call.1} parent=5 // pred_check_branch
      %116 = sbr.rel (%p113) target = $region12
    $region11: #{tpu_custom_call.1} parent=5 // pred_region
      %s117 = ssub.s32 %s9, 1
      // Predicated region
      $region13: #{tpu_custom_call.1} parent=11 // pred_check
        %p118 = pneg %p56
      $region14: #{tpu_custom_call.1} parent=11 // pred_check_branch
        %120 = sbr.rel (%p118) target = $region16
      $region15: #{tpu_custom_call.1} parent=11 // pred_region
        _
      $region16: #{tpu_custom_call.1} parent=11 // pred_fallthru
        _
      // Predicated region
      $region17: #{tpu_custom_call.1} parent=11 // pred_check
        %p121 = pneg %p77
      $region18: #{tpu_custom_call.1} parent=11 // pred_check_branch
        %123 = sbr.rel (%p121) target = $region20
      $region19: #{tpu_custom_call.1} parent=11 // pred_region
        _
      $region20: #{tpu_custom_call.1} parent=11 // pred_fallthru
        _
    $region12: #{tpu_custom_call.1} parent=5 // pred_fallthru
      _
    %p124 = scmp.lt.s32.totalorder %s9, 2
    // Predicated region
    $region21: #{tpu_custom_call.1} parent=5 // pred_check
      %p125 = pneg %p124
    $region22: #{tpu_custom_call.1} parent=5 // pred_check_branch
      %127 = sbr.rel (%p125) target = $region24
    $region23: #{tpu_custom_call.1} parent=5 // pred_region
      // Predicated region
      $region25: #{tpu_custom_call.1} parent=23 // pred_check
        %p128 = pneg %p29
      $region26: #{tpu_custom_call.1} parent=23 // pred_check_branch
        %130 = sbr.rel (%p128) target = $region28
      $region27: #{tpu_custom_call.1} parent=23 // pred_region
        %p131 = scmp.lt.s32.totalorder %s9, 1
        %s132 = scalar_select %p131, %s9, 1
        %s133 = smul.addr %s132, 54
        %s134 = smul.addr %s133, 8
        %s135 = scalar_lea.vmem %s0, %s134
      $region28: #{tpu_custom_call.1} parent=23 // pred_fallthru
        _
    $region24: #{tpu_custom_call.1} parent=5 // pred_fallthru
      _
    %p136 = scmp.le.s32.totalorder 1, %s9
    %p137 = scmp.lt.s32.totalorder %s9, 3
    %p138 = pnand %p136, %p137
    %p139 = pneg %p138
    // Predicated region
    $region29: #{tpu_custom_call.1} parent=5 // pred_check
      _
    $region30: #{tpu_custom_call.1} parent=5 // pred_check_branch
      %141 = sbr.rel (%p138) target = $region32
    $region31: #{tpu_custom_call.1} parent=5 // pred_region
      %s142 = ssub.s32 %s9, 1
      %p143 = scmp.lt.s32.totalorder %s14, 1
      %s144 = scalar_select %p143, %s14, 1
      %s145 = smul.addr %s144, 54
      %s146 = smul.addr %s145, 8
      %s147 = scalar_lea.vmem %s0, %s146
      %p148 = pneg %p35
      %p149 = pneg %p32
      %p150 = pneg %p56
      %p151 = pneg %p53
      %p152 = pneg %p77
      %p153 = pneg %p74
      %p154 = pneg %p103
      %p155 = pneg %p100
      %p156 = scmp.lt.s32.totalorder %s14, 1
      %s157 = scalar_select %p156, %s14, 1
      %s158 = smul.addr %s157, 32
      %s159 = smul.addr %s158, 8
      %s160 = scalar_lea.vmem %s3, %s159
      %p161 = scmp.lt.s32.totalorder %s14, 1
      %s162 = scalar_select %p161, %s14, 1
      %s163 = smul.addr %s162, 54
      %s164 = smul.addr %s163, 8
      %s165 = scalar_lea.vmem %s0, %s164
      %p166 = scmp.lt.s32.totalorder %s14, 1
      %s167 = scalar_select %p166, %s14, 1
      %s168 = smul.addr %s167, 32
      %s169 = smul.addr %s168, 8
      %s170 = scalar_lea.vmem %s3, %s169
      %s171 = scalar_lea.vmem %s165, 24
      %v172 = vld [vmem:[%s171 + $0x1] sm:$0xff]
      %v173 = vld [vmem:[%s171 + $0x9] sm:$0xff]
      %v174 = vld [vmem:[%s171 + $0x19] sm:$0xff]
      %v175 = vld [vmem:[%s171 + $0x21] sm:$0xff]
      %v176 = vld [vmem:[%s171 + $0x31] sm:$0xff]
      %v177 = vld [vmem:[%s171 + $0x39] sm:$0xff]
      %v178 = vld [vmem:[%s171 + $0x49] sm:$0xff]
      %v179 = vld [vmem:[%s171 + $0x51] sm:$0xff]
      %v180 = vld [vmem:[%s171 + $0x61] sm:$0xff]
      %v181 = vld [vmem:[%s171 + $0x69] sm:$0xff]
      %v182 = vld [vmem:[%s171 + $0x79] sm:$0xff]
      %v183 = vld [vmem:[%s171 + $0x81] sm:$0xff]
      %v184 = vld [vmem:[%s171 + $0x91] sm:$0xff]
      %v185 = vld [vmem:[%s171 + $0x99] sm:$0xff]
      %v186 = vld [vmem:[%s171 + $0xa9] sm:$0xff]
      %v187 = vld [vmem:[%s171 + $0xb1] sm:$0xff]
      %v188 = vld [vmem:[%s171 + $0xc1] sm:$0xff]
      %v189 = vld [vmem:[%s171 + $0xc9] sm:$0xff]
      %v190 = vld [vmem:[%s171 + $0xd9] sm:$0xff]
      %v191 = vld [vmem:[%s171 + $0xe1] sm:$0xff]
      %v192 = vld [vmem:[%s171 + $0xf1] sm:$0xff]
      %v193 = vld [vmem:[%s171 + $0xf9] sm:$0xff]
      %v194 = vld [vmem:[%s171 + $0x109] sm:$0xff]
      %v195 = vld [vmem:[%s171 + $0x111] sm:$0xff]
      %v196 = vld [vmem:[%s171 + $0x121] sm:$0xff]
      %v197 = vld [vmem:[%s171 + $0x129] sm:$0xff]
      %v198 = vld [vmem:[%s171 + $0x139] sm:$0xff]
      %v199 = vld [vmem:[%s171 + $0x141] sm:$0xff]
      %v200 = vld [vmem:[%s171 + $0x151] sm:$0xff]
      %v201 = vld [vmem:[%s171 + $0x159] sm:$0xff]
      %v202 = vld [vmem:[%s171 + $0x169] sm:$0xff]
      %v203 = vld [vmem:[%s171 + $0x171] sm:$0xff]
      %vm204 = vcmask 39936
      %v205 = vsel %vm204, %v172, 0.0
      %v206 = vsel %vm204, %v173, 0.0
      %v207 = vadd.f32 %v205, %v206
      %v208 = vsel %vm204, %v174, 0.0
      %v209 = vadd.f32 %v207, %v208
      %v210 = vsel %vm204, %v175, 0.0
      %v211 = vadd.f32 %v209, %v210
      %v212 = vsel %vm204, %v176, 0.0
      %v213 = vadd.f32 %v211, %v212
      %v214 = vsel %vm204, %v177, 0.0
      %v215 = vadd.f32 %v213, %v214
      %v216 = vsel %vm204, %v178, 0.0
      %v217 = vadd.f32 %v215, %v216
      %v218 = vsel %vm204, %v179, 0.0
      %v219 = vadd.f32 %v217, %v218
      %v220 = vsel %vm204, %v180, 0.0
      %v221 = vadd.f32 %v219, %v220
      %v222 = vsel %vm204, %v181, 0.0
      %v223 = vadd.f32 %v221, %v222
      %v224 = vsel %vm204, %v182, 0.0
      %v225 = vadd.f32 %v223, %v224
      %v226 = vsel %vm204, %v183, 0.0
      %v227 = vadd.f32 %v225, %v226
      %v228 = vsel %vm204, %v184, 0.0
      %v229 = vadd.f32 %v227, %v228
      %v230 = vsel %vm204, %v185, 0.0
      %v231 = vadd.f32 %v229, %v230
      %v232 = vsel %vm204, %v186, 0.0
      %v233 = vadd.f32 %v231, %v232
      %v234 = vsel %vm204, %v187, 0.0
      %v235 = vadd.f32 %v233, %v234
      %v236 = vsel %vm204, %v188, 0.0
      %v237 = vadd.f32 %v235, %v236
      %v238 = vsel %vm204, %v189, 0.0
      %v239 = vadd.f32 %v237, %v238
      %v240 = vsel %vm204, %v190, 0.0
      %v241 = vadd.f32 %v239, %v240
      %v242 = vsel %vm204, %v191, 0.0
      %v243 = vadd.f32 %v241, %v242
      %v244 = vsel %vm204, %v192, 0.0
      %v245 = vadd.f32 %v243, %v244
      %v246 = vsel %vm204, %v193, 0.0
      %v247 = vadd.f32 %v245, %v246
      %v248 = vsel %vm204, %v194, 0.0
      %v249 = vadd.f32 %v247, %v248
      %v250 = vsel %vm204, %v195, 0.0
      %v251 = vadd.f32 %v249, %v250
      %v252 = vsel %vm204, %v196, 0.0
      %v253 = vadd.f32 %v251, %v252
      %v254 = vsel %vm204, %v197, 0.0
      %v255 = vadd.f32 %v253, %v254
      %v256 = vsel %vm204, %v198, 0.0
      %v257 = vadd.f32 %v255, %v256
      %v258 = vsel %vm204, %v199, 0.0
      %v259 = vadd.f32 %v257, %v258
      %v260 = vsel %vm204, %v200, 0.0
      %v261 = vadd.f32 %v259, %v260
      %v262 = vsel %vm204, %v201, 0.0
      %v263 = vadd.f32 %v261, %v262
      %v264 = vsel %vm204, %v202, 0.0
      %v265 = vadd.f32 %v263, %v264
      %v266 = vsel %vm204, %v203, 0.0
      %v267 = vadd.f32 %v265, %v266
      %v268 = vrot.slane %v267, 4
      %v269 = vadd.f32 %v267, %v268
      %v270 = vrot.slane %v269, 2
      %v271 = vadd.f32 %v269, %v270
      %v272 = vrot.slane %v271, 1
      %v273 = vadd.f32 %v271, %v272
      %v274 = vrcp.pop 256.0
      %v275 = vmul.f32 %v273, %v274
      %v276 = vsub.f32 %v172, %v275
      %v277 = vsub.f32 %v173, %v275
      %v278 = vsub.f32 %v174, %v275
      %v279 = vsub.f32 %v175, %v275
      %v280 = vsub.f32 %v176, %v275
      %v281 = vsub.f32 %v177, %v275
      %v282 = vsub.f32 %v178, %v275
      %v283 = vsub.f32 %v179, %v275
      %v284 = vsub.f32 %v180, %v275
      %v285 = vsub.f32 %v181, %v275
      %v286 = vsub.f32 %v182, %v275
      %v287 = vsub.f32 %v183, %v275
      %v288 = vsub.f32 %v184, %v275
      %v289 = vsub.f32 %v185, %v275
      %v290 = vsub.f32 %v186, %v275
      %v291 = vsub.f32 %v187, %v275
      %v292 = vsub.f32 %v188, %v275
      %v293 = vsub.f32 %v189, %v275
      %v294 = vsub.f32 %v190, %v275
      %v295 = vsub.f32 %v191, %v275
      %v296 = vsub.f32 %v192, %v275
      %v297 = vsub.f32 %v193, %v275
      %v298 = vsub.f32 %v194, %v275
      %v299 = vsub.f32 %v195, %v275
      %v300 = vsub.f32 %v196, %v275
      %v301 = vsub.f32 %v197, %v275
      %v302 = vsub.f32 %v198, %v275
      %v303 = vsub.f32 %v199, %v275
      %v304 = vsub.f32 %v200, %v275
      %v305 = vsub.f32 %v201, %v275
      %v306 = vsub.f32 %v202, %v275
      %v307 = vsub.f32 %v203, %v275
      %v308 = vmul.f32 %v276, %v276
      %v309 = vmul.f32 %v277, %v277
      %v310 = vmul.f32 %v278, %v278
      %v311 = vmul.f32 %v279, %v279
      %v312 = vmul.f32 %v280, %v280
      %v313 = vmul.f32 %v281, %v281
      %v314 = vmul.f32 %v282, %v282
      %v315 = vmul.f32 %v283, %v283
      %v316 = vmul.f32 %v284, %v284
      %v317 = vmul.f32 %v285, %v285
      %v318 = vmul.f32 %v286, %v286
      %v319 = vmul.f32 %v287, %v287
      %v320 = vmul.f32 %v288, %v288
      %v321 = vmul.f32 %v289, %v289
      %v322 = vmul.f32 %v290, %v290
      %v323 = vmul.f32 %v291, %v291
      %v324 = vmul.f32 %v292, %v292
      %v325 = vmul.f32 %v293, %v293
      %v326 = vmul.f32 %v294, %v294
      %v327 = vmul.f32 %v295, %v295
      %v328 = vmul.f32 %v296, %v296
      %v329 = vmul.f32 %v297, %v297
      %v330 = vmul.f32 %v298, %v298
      %v331 = vmul.f32 %v299, %v299
      %v332 = vmul.f32 %v300, %v300
      %v333 = vmul.f32 %v301, %v301
      %v334 = vmul.f32 %v302, %v302
      %v335 = vmul.f32 %v303, %v303
      %v336 = vmul.f32 %v304, %v304
      %v337 = vmul.f32 %v305, %v305
      %v338 = vmul.f32 %v306, %v306
      %v339 = vmul.f32 %v307, %v307
      %v340 = vsel %vm204, %v308, 0.0
      %v341 = vsel %vm204, %v309, 0.0
      %v342 = vadd.f32 %v340, %v341
      %v343 = vsel %vm204, %v310, 0.0
      %v344 = vadd.f32 %v342, %v343
      %v345 = vsel %vm204, %v311, 0.0
      %v346 = vadd.f32 %v344, %v345
      %v347 = vsel %vm204, %v312, 0.0
      %v348 = vadd.f32 %v346, %v347
      %v349 = vsel %vm204, %v313, 0.0
      %v350 = vadd.f32 %v348, %v349
      %v351 = vsel %vm204, %v314, 0.0
      %v352 = vadd.f32 %v350, %v351
      %v353 = vsel %vm204, %v315, 0.0
      %v354 = vadd.f32 %v352, %v353
      %v355 = vsel %vm204, %v316, 0.0
      %v356 = vadd.f32 %v354, %v355
      %v357 = vsel %vm204, %v317, 0.0
      %v358 = vadd.f32 %v356, %v357
      %v359 = vsel %vm204, %v318, 0.0
      %v360 = vadd.f32 %v358, %v359
      %v361 = vsel %vm204, %v319, 0.0
      %v362 = vadd.f32 %v360, %v361
      %v363 = vsel %vm204, %v320, 0.0
      %v364 = vadd.f32 %v362, %v363
      %v365 = vsel %vm204, %v321, 0.0
      %v366 = vadd.f32 %v364, %v365
      %v367 = vsel %vm204, %v322, 0.0
      %v368 = vadd.f32 %v366, %v367
      %v369 = vsel %vm204, %v323, 0.0
      %v370 = vadd.f32 %v368, %v369
      %v371 = vsel %vm204, %v324, 0.0
      %v372 = vadd.f32 %v370, %v371
      %v373 = vsel %vm204, %v325, 0.0
      %v374 = vadd.f32 %v372, %v373
      %v375 = vsel %vm204, %v326, 0.0
      %v376 = vadd.f32 %v374, %v375
      %v377 = vsel %vm204, %v327, 0.0
      %v378 = vadd.f32 %v376, %v377
      %v379 = vsel %vm204, %v328, 0.0
      %v380 = vadd.f32 %v378, %v379
      %v381 = vsel %vm204, %v329, 0.0
      %v382 = vadd.f32 %v380, %v381
      %v383 = vsel %vm204, %v330, 0.0
      %v384 = vadd.f32 %v382, %v383
      %v385 = vsel %vm204, %v331, 0.0
      %v386 = vadd.f32 %v384, %v385
      %v387 = vsel %vm204, %v332, 0.0
      %v388 = vadd.f32 %v386, %v387
      %v389 = vsel %vm204, %v333, 0.0
      %v390 = vadd.f32 %v388, %v389
      %v391 = vsel %vm204, %v334, 0.0
      %v392 = vadd.f32 %v390, %v391
      %v393 = vsel %vm204, %v335, 0.0
      %v394 = vadd.f32 %v392, %v393
      %v395 = vsel %vm204, %v336, 0.0
      %v396 = vadd.f32 %v394, %v395
      %v397 = vsel %vm204, %v337, 0.0
      %v398 = vadd.f32 %v396, %v397
      %v399 = vsel %vm204, %v338, 0.0
      %v400 = vadd.f32 %v398, %v399
      %v401 = vsel %vm204, %v339, 0.0
      %v402 = vadd.f32 %v400, %v401
      %v403 = vrot.slane %v402, 4
      %v404 = vadd.f32 %v402, %v403
      %v405 = vrot.slane %v404, 2
      %v406 = vadd.f32 %v404, %v405
      %v407 = vrot.slane %v406, 1
      %v408 = vadd.f32 %v406, %v407
      %v409 = vmul.f32 %v408, %v274
      %v410 = vadd.f32 %v409, 1e-05
      %v411 = vrsqrt.pop %v410
      %v412 = vlaneseq
      %v413 = vshrl.u32 %v412, 7
      %v414 = vadd.s32 %v413, 8
      %v415 = vld [vmem:[%s165] sm:$0xff]
      %v416 = vld [vmem:[%s165 + $0x8] sm:$0xff]
      %v417 = vld [vmem:[%s165 + $0x18] sm:$0xff]
      %v418 = vld [vmem:[%s165 + $0x20] sm:$0xff]
      %v419 = vld [vmem:[%s165 + $0x30] sm:$0xff]
      %v420 = vld [vmem:[%s165 + $0x38] sm:$0xff]
      %v421 = vld [vmem:[%s165 + $0x48] sm:$0xff]
      %v422 = vld [vmem:[%s165 + $0x50] sm:$0xff]
      %v423 = vld [vmem:[%s165 + $0x60] sm:$0xff]
      %v424 = vld [vmem:[%s165 + $0x68] sm:$0xff]
      %v425 = vld [vmem:[%s165 + $0x78] sm:$0xff]
      %v426 = vld [vmem:[%s165 + $0x80] sm:$0xff]
      %v427 = vld [vmem:[%s165 + $0x90] sm:$0xff]
      %v428 = vld [vmem:[%s165 + $0x98] sm:$0xff]
      %v429 = vld [vmem:[%s165 + $0xa8] sm:$0xff]
      %v430 = vld [vmem:[%s165 + $0xb0] sm:$0xff]
      %v431 = vld [vmem:[%s165 + $0xc0] sm:$0xff]
      %v432 = vld [vmem:[%s165 + $0xc8] sm:$0xff]
      %v433 = vld [vmem:[%s165 + $0xd8] sm:$0xff]
      %v434 = vld [vmem:[%s165 + $0xe0] sm:$0xff]
      %v435 = vld [vmem:[%s165 + $0xf0] sm:$0xff]
      %v436 = vld [vmem:[%s165 + $0xf8] sm:$0xff]
      %v437 = vld [vmem:[%s165 + $0x108] sm:$0xff]
      %v438 = vld [vmem:[%s165 + $0x110] sm:$0xff]
      %v439 = vld [vmem:[%s165 + $0x120] sm:$0xff]
      %v440 = vld [vmem:[%s165 + $0x128] sm:$0xff]
      %v441 = vld [vmem:[%s165 + $0x138] sm:$0xff]
      %v442 = vld [vmem:[%s165 + $0x140] sm:$0xff]
      %v443 = vld [vmem:[%s165 + $0x150] sm:$0xff]
      %v444 = vld [vmem:[%s165 + $0x158] sm:$0xff]
      %v445 = vld [vmem:[%s165 + $0x168] sm:$0xff]
      %v446 = vld [vmem:[%s165 + $0x170] sm:$0xff]
      %v447 = vsub.f32 %v415, %v275
      %v448 = vsub.f32 %v416, %v275
      %v449 = vsub.f32 %v417, %v275
      %v450 = vsub.f32 %v418, %v275
      %v451 = vsub.f32 %v419, %v275
      %v452 = vsub.f32 %v420, %v275
      %v453 = vsub.f32 %v421, %v275
      %v454 = vsub.f32 %v422, %v275
      %v455 = vsub.f32 %v423, %v275
      %v456 = vsub.f32 %v424, %v275
      %v457 = vsub.f32 %v425, %v275
      %v458 = vsub.f32 %v426, %v275
      %v459 = vsub.f32 %v427, %v275
      %v460 = vsub.f32 %v428, %v275
      %v461 = vsub.f32 %v429, %v275
      %v462 = vsub.f32 %v430, %v275
      %v463 = vsub.f32 %v431, %v275
      %v464 = vsub.f32 %v432, %v275
      %v465 = vsub.f32 %v433, %v275
      %v466 = vsub.f32 %v434, %v275
      %v467 = vsub.f32 %v435, %v275
      %v468 = vsub.f32 %v436, %v275
      %v469 = vsub.f32 %v437, %v275
      %v470 = vsub.f32 %v438, %v275
      %v471 = vsub.f32 %v439, %v275
      %v472 = vsub.f32 %v440, %v275
      %v473 = vsub.f32 %v441, %v275
      %v474 = vsub.f32 %v442, %v275
      %v475 = vsub.f32 %v443, %v275
      %v476 = vsub.f32 %v444, %v275
      %v477 = vsub.f32 %v445, %v275
      %v478 = vsub.f32 %v446, %v275
      %v479 = vmul.f32 %v447, %v411
      %v480 = vmul.f32 %v448, %v411
      %v481 = vmul.f32 %v449, %v411
      %v482 = vmul.f32 %v450, %v411
      %v483 = vmul.f32 %v451, %v411
      %v484 = vmul.f32 %v452, %v411
      %v485 = vmul.f32 %v453, %v411
      %v486 = vmul.f32 %v454, %v411
      %v487 = vmul.f32 %v455, %v411
      %v488 = vmul.f32 %v456, %v411
      %v489 = vmul.f32 %v457, %v411
      %v490 = vmul.f32 %v458, %v411
      %v491 = vmul.f32 %v459, %v411
      %v492 = vmul.f32 %v460, %v411
      %v493 = vmul.f32 %v461, %v411
      %v494 = vmul.f32 %v462, %v411
      %v495 = vmul.f32 %v463, %v411
      %v496 = vmul.f32 %v464, %v411
      %v497 = vmul.f32 %v465, %v411
      %v498 = vmul.f32 %v466, %v411
      %v499 = vmul.f32 %v467, %v411
      %v500 = vmul.f32 %v468, %v411
      %v501 = vmul.f32 %v469, %v411
      %v502 = vmul.f32 %v470, %v411
      %v503 = vmul.f32 %v471, %v411
      %v504 = vmul.f32 %v472, %v411
      %v505 = vmul.f32 %v473, %v411
      %v506 = vmul.f32 %v474, %v411
      %v507 = vmul.f32 %v475, %v411
      %v508 = vmul.f32 %v476, %v411
      %v509 = vmul.f32 %v477, %v411
      %v510 = vmul.f32 %v478, %v411
      %vm511 = vcmp.ge.s32.totalorder %v413, 1
      %vm512 = vcmp.ge.s32.totalorder %v414, 1
      %vm513 = vmand 0, %vm511
      %vm514 = vmand 0, %vm512
      %vm515 = vmand 1, %vm511
      %vm516 = vmand 1, %vm512
      %vm517 = vcmp.le.s32.totalorder %v413, 16
      %vm518 = vcmp.le.s32.totalorder %v414, 16
      %vm519 = vmand %vm513, %vm517
      %vm520 = vmand %vm514, %vm518
      %vm521 = vmand %vm515, %vm517
      %vm522 = vmand %vm516, %vm518
      %v523 = vsel %vm519, %v479, 0.0
      %v524 = vsel %vm520, %v480, 0.0
      %v525 = vsel %vm521, %v481, 0.0
      %v526 = vsel %vm522, %v482, 0.0
      %v527 = vsel %vm521, %v483, 0.0
      %v528 = vsel %vm522, %v484, 0.0
      %v529 = vsel %vm521, %v485, 0.0
      %v530 = vsel %vm522, %v486, 0.0
      %v531 = vsel %vm521, %v487, 0.0
      %v532 = vsel %vm522, %v488, 0.0
      %v533 = vsel %vm521, %v489, 0.0
      %v534 = vsel %vm522, %v490, 0.0
      %v535 = vsel %vm521, %v491, 0.0
      %v536 = vsel %vm522, %v492, 0.0
      %v537 = vsel %vm521, %v493, 0.0
      %v538 = vsel %vm522, %v494, 0.0
      %v539 = vsel %vm521, %v495, 0.0
      %v540 = vsel %vm522, %v496, 0.0
      %v541 = vsel %vm521, %v497, 0.0
      %v542 = vsel %vm522, %v498, 0.0
      %v543 = vsel %vm521, %v499, 0.0
      %v544 = vsel %vm522, %v500, 0.0
      %v545 = vsel %vm521, %v501, 0.0
      %v546 = vsel %vm522, %v502, 0.0
      %v547 = vsel %vm521, %v503, 0.0
      %v548 = vsel %vm522, %v504, 0.0
      %v549 = vsel %vm521, %v505, 0.0
      %v550 = vsel %vm522, %v506, 0.0
      %v551 = vsel %vm521, %v507, 0.0
      %v552 = vsel %vm522, %v508, 0.0
      %v553 = vsel %vm521, %v509, 0.0
      %v554 = vsel %vm522, %v510, 0.0
      %v555 = vld [vmem:[%s1] sm:$0x1f]
      %v556 = vld [vmem:[%s165 + $0x1] sm:$0xff]
      %v557 = vld [vmem:[%s165 + $0x9] sm:$0xff]
      %v558 = vld [vmem:[%s165 + $0x19] sm:$0xff]
      %v559 = vld [vmem:[%s165 + $0x21] sm:$0xff]
      %v560 = vld [vmem:[%s165 + $0x31] sm:$0xff]
      %v561 = vld [vmem:[%s165 + $0x39] sm:$0xff]
      %v562 = vld [vmem:[%s165 + $0x49] sm:$0xff]
      %v563 = vld [vmem:[%s165 + $0x51] sm:$0xff]
      %v564 = vld [vmem:[%s165 + $0x61] sm:$0xff]
      %v565 = vld [vmem:[%s165 + $0x69] sm:$0xff]
      %v566 = vld [vmem:[%s165 + $0x79] sm:$0xff]
      %v567 = vld [vmem:[%s165 + $0x81] sm:$0xff]
      %v568 = vld [vmem:[%s165 + $0x91] sm:$0xff]
      %v569 = vld [vmem:[%s165 + $0x99] sm:$0xff]
      %v570 = vld [vmem:[%s165 + $0xa9] sm:$0xff]
      %v571 = vld [vmem:[%s165 + $0xb1] sm:$0xff]
      %v572 = vld [vmem:[%s165 + $0xc1] sm:$0xff]
      %v573 = vld [vmem:[%s165 + $0xc9] sm:$0xff]
      %v574 = vld [vmem:[%s165 + $0xd9] sm:$0xff]
      %v575 = vld [vmem:[%s165 + $0xe1] sm:$0xff]
      %v576 = vld [vmem:[%s165 + $0xf1] sm:$0xff]
      %v577 = vld [vmem:[%s165 + $0xf9] sm:$0xff]
      %v578 = vld [vmem:[%s165 + $0x109] sm:$0xff]
      %v579 = vld [vmem:[%s165 + $0x111] sm:$0xff]
      %v580 = vld [vmem:[%s165 + $0x121] sm:$0xff]
      %v581 = vld [vmem:[%s165 + $0x129] sm:$0xff]
      %v582 = vld [vmem:[%s165 + $0x139] sm:$0xff]
      %v583 = vld [vmem:[%s165 + $0x141] sm:$0xff]
      %v584 = vld [vmem:[%s165 + $0x151] sm:$0xff]
      %v585 = vld [vmem:[%s165 + $0x159] sm:$0xff]
      %v586 = vld [vmem:[%s165 + $0x169] sm:$0xff]
      %v587 = vld [vmem:[%s165 + $0x171] sm:$0xff]
      %v588 = vsub.f32 %v556, %v275
      %v589 = vsub.f32 %v557, %v275
      %v590 = vsub.f32 %v558, %v275
      %v591 = vsub.f32 %v559, %v275
      %v592 = vsub.f32 %v560, %v275
      %v593 = vsub.f32 %v561, %v275
      %v594 = vsub.f32 %v562, %v275
      %v595 = vsub.f32 %v563, %v275
      %v596 = vsub.f32 %v564, %v275
      %v597 = vsub.f32 %v565, %v275
      %v598 = vsub.f32 %v566, %v275
      %v599 = vsub.f32 %v567, %v275
      %v600 = vsub.f32 %v568, %v275
      %v601 = vsub.f32 %v569, %v275
      %v602 = vsub.f32 %v570, %v275
      %v603 = vsub.f32 %v571, %v275
      %v604 = vsub.f32 %v572, %v275
      %v605 = vsub.f32 %v573, %v275
      %v606 = vsub.f32 %v574, %v275
      %v607 = vsub.f32 %v575, %v275
      %v608 = vsub.f32 %v576, %v275
      %v609 = vsub.f32 %v577, %v275
      %v610 = vsub.f32 %v578, %v275
      %v611 = vsub.f32 %v579, %v275
      %v612 = vsub.f32 %v580, %v275
      %v613 = vsub.f32 %v581, %v275
      %v614 = vsub.f32 %v582, %v275
      %v615 = vsub.f32 %v583, %v275
      %v616 = vsub.f32 %v584, %v275
      %v617 = vsub.f32 %v585, %v275
      %v618 = vsub.f32 %v586, %v275
      %v619 = vsub.f32 %v587, %v275
      %v620 = vmul.f32 %v588, %v411
      %v621 = vmul.f32 %v589, %v411
      %v622 = vmul.f32 %v590, %v411
      %v623 = vmul.f32 %v591, %v411
      %v624 = vmul.f32 %v592, %v411
      %v625 = vmul.f32 %v593, %v411
      %v626 = vmul.f32 %v594, %v411
      %v627 = vmul.f32 %v595, %v411
      %v628 = vmul.f32 %v596, %v411
      %v629 = vmul.f32 %v597, %v411
      %v630 = vmul.f32 %v598, %v411
      %v631 = vmul.f32 %v599, %v411
      %v632 = vmul.f32 %v600, %v411
      %v633 = vmul.f32 %v601, %v411
      %v634 = vmul.f32 %v602, %v411
      %v635 = vmul.f32 %v603, %v411
      %v636 = vmul.f32 %v604, %v411
      %v637 = vmul.f32 %v605, %v411
      %v638 = vmul.f32 %v606, %v411
      %v639 = vmul.f32 %v607, %v411
      %v640 = vmul.f32 %v608, %v411
      %v641 = vmul.f32 %v609, %v411
      %v642 = vmul.f32 %v610, %v411
      %v643 = vmul.f32 %v611, %v411
      %v644 = vmul.f32 %v612, %v411
      %v645 = vmul.f32 %v613, %v411
      %v646 = vmul.f32 %v614, %v411
      %v647 = vmul.f32 %v615, %v411
      %v648 = vmul.f32 %v616, %v411
      %v649 = vmul.f32 %v617, %v411
      %v650 = vmul.f32 %v618, %v411
      %v651 = vmul.f32 %v619, %v411
      %v652 = vadd.s32 %v413, 1
      %v653 = vadd.s32 %v414, 1
      %vm654 = vcmp.ge.s32.totalorder %v652, 1
      %vm655 = vcmp.ge.s32.totalorder %v653, 1
      %vm656 = vmand 0, %vm654
      %vm657 = vmand 0, %vm655
      %vm658 = vmand 1, %vm654
      %vm659 = vmand 1, %vm655
      %vm660 = vcmp.le.s32.totalorder %v652, 16
      %vm661 = vcmp.le.s32.totalorder %v653, 16
      %vm662 = vmand %vm656, %vm660
      %vm663 = vmand %vm657, %vm661
      %vm664 = vmand %vm658, %vm660
      %vm665 = vmand %vm659, %vm661
      %v666 = vsel %vm662, %v620, 0.0
      %v667 = vsel %vm663, %v621, 0.0
      %v668 = vsel %vm664, %v622, 0.0
      %v669 = vsel %vm665, %v623, 0.0
      %v670 = vsel %vm664, %v624, 0.0
      %v671 = vsel %vm665, %v625, 0.0
      %v672 = vsel %vm664, %v626, 0.0
      %v673 = vsel %vm665, %v627, 0.0
      %v674 = vsel %vm664, %v628, 0.0
      %v675 = vsel %vm665, %v629, 0.0
      %v676 = vsel %vm664, %v630, 0.0
      %v677 = vsel %vm665, %v631, 0.0
      %v678 = vsel %vm664, %v632, 0.0
      %v679 = vsel %vm665, %v633, 0.0
      %v680 = vsel %vm664, %v634, 0.0
      %v681 = vsel %vm665, %v635, 0.0
      %v682 = vsel %vm664, %v636, 0.0
      %v683 = vsel %vm665, %v637, 0.0
      %v684 = vsel %vm664, %v638, 0.0
      %v685 = vsel %vm665, %v639, 0.0
      %v686 = vsel %vm664, %v640, 0.0
      %v687 = vsel %vm665, %v641, 0.0
      %v688 = vsel %vm664, %v642, 0.0
      %v689 = vsel %vm665, %v643, 0.0
      %v690 = vsel %vm664, %v644, 0.0
      %v691 = vsel %vm665, %v645, 0.0
      %v692 = vsel %vm664, %v646, 0.0
      %v693 = vsel %vm665, %v647, 0.0
      %v694 = vsel %vm664, %v648, 0.0
      %v695 = vsel %vm665, %v649, 0.0
      %v696 = vsel %vm664, %v650, 0.0
      %v697 = vsel %vm665, %v651, 0.0
      %v698 = vld [vmem:[%s1 + $0x5] sm:$0x1f]
      %v700 = vsel %vm204, %v666, 0
      %v703 = vsel %vm204, %v667, 0
      %v706 = vsel %vm204, %v668, 0
      %v709 = vsel %vm204, %v669, 0
      %v712 = vsel %vm204, %v670, 0
      %v715 = vsel %vm204, %v671, 0
      %v718 = vsel %vm204, %v672, 0
      %v721 = vsel %vm204, %v673, 0
      %v724 = vsel %vm204, %v674, 0
      %v727 = vsel %vm204, %v675, 0
      %v730 = vsel %vm204, %v676, 0
      %v733 = vsel %vm204, %v677, 0
      %v736 = vsel %vm204, %v678, 0
      %v739 = vsel %vm204, %v679, 0
      %v742 = vsel %vm204, %v680, 0
      %v745 = vsel %vm204, %v681, 0
      %v748 = vsel %vm204, %v682, 0
      %v751 = vsel %vm204, %v683, 0
      %v754 = vsel %vm204, %v684, 0
      %v757 = vsel %vm204, %v685, 0
      %v760 = vsel %vm204, %v686, 0
      %v763 = vsel %vm204, %v687, 0
      %v766 = vsel %vm204, %v688, 0
      %v769 = vsel %vm204, %v689, 0
      %v772 = vsel %vm204, %v690, 0
      %v775 = vsel %vm204, %v691, 0
      %v778 = vsel %vm204, %v692, 0
      %v781 = vsel %vm204, %v693, 0
      %v784 = vsel %vm204, %v694, 0
      %v787 = vsel %vm204, %v695, 0
      %v790 = vsel %vm204, %v696, 0
      %v793 = vsel %vm204, %v697, 0
      %vm795 = vcmask 1044480
      %v797 = vsel %vm795, %v698, 0
      %799 = vmatprep.subr.mxu0 0.0
      %800 = vmatpush1.msra.mxu0 0.0
      %801 = vmatprep.subr.mxu0 0.0
      %802 = vmatpush1.msra.mxu0 0.0
      %803 = vmatprep.subr.mxu0 0.0
      %804 = vmatpush1.msra.mxu0 0.0
      %805 = vmatprep.subr.mxu0 0.0
      %806 = vmatpush1.msra.mxu0 0.0
      %807 = vmatprep.subr.mxu0 0.0
      %808 = vmatpush1.msra.mxu0 0.0
      %809 = vmatprep.subr.mxu0 0.0
      %810 = vmatpush1.msra.mxu0 0.0
      %811 = vmatprep.subr.mxu0 0.0
      %812 = vmatpush1.msra.mxu0 0.0
      %813 = vmatprep.subr.mxu0 0.0
      %814 = vmatpush1.msra.mxu0 0.0
      %815 = vmatprep.subr.mxu0 0.0
      %816 = vmatpush1.msra.mxu0 0.0
      %817 = vmatprep.subr.mxu0 0.0
      %818 = vmatpush1.msra.mxu0 0.0
      %819 = vmatprep.subr.mxu0 0.0
      %820 = vmatpush1.msra.mxu0 0.0
      %821 = vmatprep.subr.mxu0 0.0
      %822 = vmatpush1.msra.mxu0 0.0
      %823 = vmatprep.subr.mxu0 0.0
      %824 = vmatpush1.msra.mxu0 0.0
      %825 = vmatprep.subr.mxu0 0.0
      %826 = vmatpush1.msra.mxu0 0.0
      %827 = vmatprep.subr.mxu0 0.0
      %828 = vmatpush1.msra.mxu0 0.0
      %829 = vmatprep.subr.mxu0 0.0
      %830 = vmatpush1.msra.mxu0 %v797
      %831 = vmatprep.subr.mxu0 0.0
      %832 = vmatpush2.msra.mxu0 0.0
      %833 = vmatprep.subr.mxu0 0.0
      %834 = vmatpush2.msra.mxu0 0.0
      %835 = vmatprep.subr.mxu0 0.0
      %836 = vmatpush2.msra.mxu0 0.0
      %837 = vmatprep.subr.mxu0 0.0
      %838 = vmatpush2.msra.mxu0 0.0
      %839 = vmatprep.subr.mxu0 0.0
      %840 = vmatpush2.msra.mxu0 0.0
      %841 = vmatprep.subr.mxu0 0.0
      %842 = vmatpush2.msra.mxu0 0.0
      %843 = vmatprep.subr.mxu0 0.0
      %844 = vmatpush2.msra.mxu0 0.0
      %845 = vmatprep.subr.mxu0 0.0
      %846 = vmatpush2.msra.mxu0 0.0
      %847 = vmatprep.subr.mxu0 0.0
      %848 = vmatpush2.msra.mxu0 0.0
      %849 = vmatprep.subr.mxu0 0.0
      %850 = vmatpush2.msra.mxu0 0.0
      %851 = vmatprep.subr.mxu0 0.0
      %852 = vmatpush2.msra.mxu0 0.0
      %853 = vmatprep.subr.mxu0 0.0
      %854 = vmatpush2.msra.mxu0 0.0
      %855 = vmatprep.subr.mxu0 0.0
      %856 = vmatpush2.msra.mxu0 0.0
      %857 = vmatprep.subr.mxu0 0.0
      %858 = vmatpush2.msra.mxu0 0.0
      %859 = vmatprep.subr.mxu0 0.0
      %860 = vmatpush2.msra.mxu0 0.0
      %861 = vmatprep.subr.mxu0 0.0
      %862 = vmatpush2.msra.mxu0 0.0
      %863 = vmatprep.mubr.f32.mxu0 0.0
      %864 = vmatmul.mubr.f32.gmra.mxu0 %v700
      %v865 = vpop.f32.mrf.mxu0
      %v866 = vadd.f32 0.0, %v865
      %v867 = vpop.f32.mrf.mxu0
      %868 = vmatprep.mubr.f32.mxu0 0.0
      %869 = vmatmul.mubr.f32.gmra.mxu0 %v703
      %v870 = vpop.f32.mrf.mxu0
      %v871 = vadd.f32 0.0, %v870
      %v872 = vpop.f32.mrf.mxu0
      %873 = vmatprep.mubr.f32.mxu0 0.0
      %874 = vmatmul.mubr.f32.gmra.mxu0 %v706
      %v875 = vpop.f32.mrf.mxu0
      %v876 = vadd.f32 0.0, %v875
      %v877 = vpop.f32.mrf.mxu0
      %878 = vmatprep.mubr.f32.mxu0 0.0
      %879 = vmatmul.mubr.f32.gmra.mxu0 %v709
      %v880 = vpop.f32.mrf.mxu0
      %v881 = vadd.f32 0.0, %v880
      %v882 = vpop.f32.mrf.mxu0
      %883 = vmatprep.mubr.f32.mxu0 0.0
      %884 = vmatmul.mubr.f32.gmra.mxu0 %v712
      %v885 = vpop.f32.mrf.mxu0
      %v886 = vadd.f32 0.0, %v885
      %v887 = vpop.f32.mrf.mxu0
      %888 = vmatprep.mubr.f32.mxu0 0.0
      %889 = vmatmul.mubr.f32.gmra.mxu0 %v715
      %v890 = vpop.f32.mrf.mxu0
      %v891 = vadd.f32 0.0, %v890
      %v892 = vpop.f32.mrf.mxu0
      %893 = vmatprep.mubr.f32.mxu0 0.0
      %894 = vmatmul.mubr.f32.gmra.mxu0 %v718
      %v895 = vpop.f32.mrf.mxu0
      %v896 = vadd.f32 0.0, %v895
      %v897 = vpop.f32.mrf.mxu0
      %898 = vmatprep.mubr.f32.mxu0 0.0
      %899 = vmatmul.mubr.f32.gmra.mxu0 %v721
      %v900 = vpop.f32.mrf.mxu0
      %v901 = vadd.f32 0.0, %v900
      %v902 = vpop.f32.mrf.mxu0
      %903 = vmatprep.mubr.f32.mxu0 0.0
      %904 = vmatmul.mubr.f32.gmra.mxu0 %v724
      %v905 = vpop.f32.mrf.mxu0
      %v906 = vadd.f32 0.0, %v905
      %v907 = vpop.f32.mrf.mxu0
      %908 = vmatprep.mubr.f32.mxu0 0.0
      %909 = vmatmul.mubr.f32.gmra.mxu0 %v727
      %v910 = vpop.f32.mrf.mxu0
      %v911 = vadd.f32 0.0, %v910
      %v912 = vpop.f32.mrf.mxu0
      %913 = vmatprep.mubr.f32.mxu0 0.0
      %914 = vmatmul.mubr.f32.gmra.mxu0 %v730
      %v915 = vpop.f32.mrf.mxu0
      %v916 = vadd.f32 0.0, %v915
      %v917 = vpop.f32.mrf.mxu0
      %918 = vmatprep.mubr.f32.mxu0 0.0
      %919 = vmatmul.mubr.f32.gmra.mxu0 %v733
      %v920 = vpop.f32.mrf.mxu0
      %v921 = vadd.f32 0.0, %v920
      %v922 = vpop.f32.mrf.mxu0
      %923 = vmatprep.mubr.f32.mxu0 0.0
      %924 = vmatmul.mubr.f32.gmra.mxu0 %v736
      %v925 = vpop.f32.mrf.mxu0
      %v926 = vadd.f32 0.0, %v925
      %v927 = vpop.f32.mrf.mxu0
      %928 = vmatprep.mubr.f32.mxu0 0.0
      %929 = vmatmul.mubr.f32.gmra.mxu0 %v739
      %v930 = vpop.f32.mrf.mxu0
      %v931 = vadd.f32 0.0, %v930
      %v932 = vpop.f32.mrf.mxu0
      %933 = vmatprep.mubr.f32.mxu0 0.0
      %934 = vmatmul.mubr.f32.gmra.mxu0 %v742
      %v935 = vpop.f32.mrf.mxu0
      %v936 = vadd.f32 0.0, %v935
      %v937 = vpop.f32.mrf.mxu0
      %938 = vmatprep.mubr.f32.mxu0 0.0
      %939 = vmatmul.mubr.f32.gmra.mxu0 %v745
      %v940 = vpop.f32.mrf.mxu0
      %v941 = vadd.f32 0.0, %v940
      %v942 = vpop.f32.mrf.mxu0
      %943 = vmatprep.mubr.f32.mxu0 0.0
      %944 = vmatmul.mubr.f32.gmra.mxu0 %v748
      %v945 = vpop.f32.mrf.mxu0
      %v946 = vadd.f32 0.0, %v945
      %v947 = vpop.f32.mrf.mxu0
      %948 = vmatprep.mubr.f32.mxu0 0.0
      %949 = vmatmul.mubr.f32.gmra.mxu0 %v751
      %v950 = vpop.f32.mrf.mxu0
      %v951 = vadd.f32 0.0, %v950
      %v952 = vpop.f32.mrf.mxu0
      %953 = vmatprep.mubr.f32.mxu0 0.0
      %954 = vmatmul.mubr.f32.gmra.mxu0 %v754
      %v955 = vpop.f32.mrf.mxu0
      %v956 = vadd.f32 0.0, %v955
      %v957 = vpop.f32.mrf.mxu0
      %958 = vmatprep.mubr.f32.mxu0 0.0
      %959 = vmatmul.mubr.f32.gmra.mxu0 %v757
      %v960 = vpop.f32.mrf.mxu0
      %v961 = vadd.f32 0.0, %v960
      %v962 = vpop.f32.mrf.mxu0
      %963 = vmatprep.mubr.f32.mxu0 0.0
      %964 = vmatmul.mubr.f32.gmra.mxu0 %v760
      %v965 = vpop.f32.mrf.mxu0
      %v966 = vadd.f32 0.0, %v965
      %v967 = vpop.f32.mrf.mxu0
      %968 = vmatprep.mubr.f32.mxu0 0.0
      %969 = vmatmul.mubr.f32.gmra.mxu0 %v763
      %v970 = vpop.f32.mrf.mxu0
      %v971 = vadd.f32 0.0, %v970
      %v972 = vpop.f32.mrf.mxu0
      %973 = vmatprep.mubr.f32.mxu0 0.0
      %974 = vmatmul.mubr.f32.gmra.mxu0 %v766
      %v975 = vpop.f32.mrf.mxu0
      %v976 = vadd.f32 0.0, %v975
      %v977 = vpop.f32.mrf.mxu0
      %978 = vmatprep.mubr.f32.mxu0 0.0
      %979 = vmatmul.mubr.f32.gmra.mxu0 %v769
      %v980 = vpop.f32.mrf.mxu0
      %v981 = vadd.f32 0.0, %v980
      %v982 = vpop.f32.mrf.mxu0
      %983 = vmatprep.mubr.f32.mxu0 0.0
      %984 = vmatmul.mubr.f32.gmra.mxu0 %v772
      %v985 = vpop.f32.mrf.mxu0
      %v986 = vadd.f32 0.0, %v985
      %v987 = vpop.f32.mrf.mxu0
      %988 = vmatprep.mubr.f32.mxu0 0.0
      %989 = vmatmul.mubr.f32.gmra.mxu0 %v775
      %v990 = vpop.f32.mrf.mxu0
      %v991 = vadd.f32 0.0, %v990
      %v992 = vpop.f32.mrf.mxu0
      %993 = vmatprep.mubr.f32.mxu0 0.0
      %994 = vmatmul.mubr.f32.gmra.mxu0 %v778
      %v995 = vpop.f32.mrf.mxu0
      %v996 = vadd.f32 0.0, %v995
      %v997 = vpop.f32.mrf.mxu0
      %998 = vmatprep.mubr.f32.mxu0 0.0
      %999 = vmatmul.mubr.f32.gmra.mxu0 %v781
      %v1000 = vpop.f32.mrf.mxu0
      %v1001 = vadd.f32 0.0, %v1000
      %v1002 = vpop.f32.mrf.mxu0
      %1003 = vmatprep.mubr.f32.mxu0 0.0
      %1004 = vmatmul.mubr.f32.gmra.mxu0 %v784
      %v1005 = vpop.f32.mrf.mxu0
      %v1006 = vadd.f32 0.0, %v1005
      %v1007 = vpop.f32.mrf.mxu0
      %1008 = vmatprep.mubr.f32.mxu0 0.0
      %1009 = vmatmul.mubr.f32.gmra.mxu0 %v787
      %v1010 = vpop.f32.mrf.mxu0
      %v1011 = vadd.f32 0.0, %v1010
      %v1012 = vpop.f32.mrf.mxu0
      %1013 = vmatprep.mubr.f32.mxu0 0.0
      %1014 = vmatmul.mubr.f32.gmra.mxu0 %v790
      %v1015 = vpop.f32.mrf.mxu0
      %v1016 = vadd.f32 0.0, %v1015
      %v1017 = vpop.f32.mrf.mxu0
      %1018 = vmatprep.mubr.f32.mxu0 0.0
      %1019 = vmatmul.mubr.f32.gmra.mxu0 %v793
      %v1020 = vpop.f32.mrf.mxu0
      %v1021 = vadd.f32 0.0, %v1020
      %v1022 = vpop.f32.mrf.mxu0
      %1023 = vdwg.mxu0
      %v1025 = vsel %vm204, %v523, 0
      %v1028 = vsel %vm204, %v524, 0
      %v1031 = vsel %vm204, %v525, 0
      %v1034 = vsel %vm204, %v526, 0
      %v1037 = vsel %vm204, %v527, 0
      %v1040 = vsel %vm204, %v528, 0
      %v1043 = vsel %vm204, %v529, 0
      %v1046 = vsel %vm204, %v530, 0
      %v1049 = vsel %vm204, %v531, 0
      %v1052 = vsel %vm204, %v532, 0
      %v1055 = vsel %vm204, %v533, 0
      %v1058 = vsel %vm204, %v534, 0
      %v1061 = vsel %vm204, %v535, 0
      %v1064 = vsel %vm204, %v536, 0
      %v1067 = vsel %vm204, %v537, 0
      %v1070 = vsel %vm204, %v538, 0
      %v1073 = vsel %vm204, %v539, 0
      %v1076 = vsel %vm204, %v540, 0
      %v1079 = vsel %vm204, %v541, 0
      %v1082 = vsel %vm204, %v542, 0
      %v1085 = vsel %vm204, %v543, 0
      %v1088 = vsel %vm204, %v544, 0
      %v1091 = vsel %vm204, %v545, 0
      %v1094 = vsel %vm204, %v546, 0
      %v1097 = vsel %vm204, %v547, 0
      %v1100 = vsel %vm204, %v548, 0
      %v1103 = vsel %vm204, %v549, 0
      %v1106 = vsel %vm204, %v550, 0
      %v1109 = vsel %vm204, %v551, 0
      %v1112 = vsel %vm204, %v552, 0
      %v1115 = vsel %vm204, %v553, 0
      %v1118 = vsel %vm204, %v554, 0
      %v1121 = vsel %vm795, %v555, 0
      %1123 = vmatprep.subr.mxu0 0.0
      %1124 = vmatpush1.msra.mxu0 0.0
      %1125 = vmatprep.subr.mxu0 0.0
      %1126 = vmatpush1.msra.mxu0 0.0
      %1127 = vmatprep.subr.mxu0 0.0
      %1128 = vmatpush1.msra.mxu0 0.0
      %1129 = vmatprep.subr.mxu0 0.0
      %1130 = vmatpush1.msra.mxu0 0.0
      %1131 = vmatprep.subr.mxu0 0.0
      %1132 = vmatpush1.msra.mxu0 0.0
      %1133 = vmatprep.subr.mxu0 0.0
      %1134 = vmatpush1.msra.mxu0 0.0
      %1135 = vmatprep.subr.mxu0 0.0
      %1136 = vmatpush1.msra.mxu0 0.0
      %1137 = vmatprep.subr.mxu0 0.0
      %1138 = vmatpush1.msra.mxu0 0.0
      %1139 = vmatprep.subr.mxu0 0.0
      %1140 = vmatpush1.msra.mxu0 0.0
      %1141 = vmatprep.subr.mxu0 0.0
      %1142 = vmatpush1.msra.mxu0 0.0
      %1143 = vmatprep.subr.mxu0 0.0
      %1144 = vmatpush1.msra.mxu0 0.0
      %1145 = vmatprep.subr.mxu0 0.0
      %1146 = vmatpush1.msra.mxu0 0.0
      %1147 = vmatprep.subr.mxu0 0.0
      %1148 = vmatpush1.msra.mxu0 0.0
      %1149 = vmatprep.subr.mxu0 0.0
      %1150 = vmatpush1.msra.mxu0 0.0
      %1151 = vmatprep.subr.mxu0 0.0
      %1152 = vmatpush1.msra.mxu0 0.0
      %1153 = vmatprep.subr.mxu0 0.0
      %1154 = vmatpush1.msra.mxu0 %v1121
      %1155 = vmatprep.subr.mxu0 0.0
      %1156 = vmatpush2.msra.mxu0 0.0
      %1157 = vmatprep.subr.mxu0 0.0
      %1158 = vmatpush2.msra.mxu0 0.0
      %1159 = vmatprep.subr.mxu0 0.0
      %1160 = vmatpush2.msra.mxu0 0.0
      %1161 = vmatprep.subr.mxu0 0.0
      %1162 = vmatpush2.msra.mxu0 0.0
      %1163 = vmatprep.subr.mxu0 0.0
      %1164 = vmatpush2.msra.mxu0 0.0
      %1165 = vmatprep.subr.mxu0 0.0
      %1166 = vmatpush2.msra.mxu0 0.0
      %1167 = vmatprep.subr.mxu0 0.0
      %1168 = vmatpush2.msra.mxu0 0.0
      %1169 = vmatprep.subr.mxu0 0.0
      %1170 = vmatpush2.msra.mxu0 0.0
      %1171 = vmatprep.subr.mxu0 0.0
      %1172 = vmatpush2.msra.mxu0 0.0
      %1173 = vmatprep.subr.mxu0 0.0
      %1174 = vmatpush2.msra.mxu0 0.0
      %1175 = vmatprep.subr.mxu0 0.0
      %1176 = vmatpush2.msra.mxu0 0.0
      %1177 = vmatprep.subr.mxu0 0.0
      %1178 = vmatpush2.msra.mxu0 0.0
      %1179 = vmatprep.subr.mxu0 0.0
      %1180 = vmatpush2.msra.mxu0 0.0
      %1181 = vmatprep.subr.mxu0 0.0
      %1182 = vmatpush2.msra.mxu0 0.0
      %1183 = vmatprep.subr.mxu0 0.0
      %1184 = vmatpush2.msra.mxu0 0.0
      %1185 = vmatprep.subr.mxu0 0.0
      %1186 = vmatpush2.msra.mxu0 0.0
      %1187 = vmatprep.mubr.f32.mxu0 0.0
      %1188 = vmatmul.mubr.f32.gmra.mxu0 %v1025
      %v1189 = vpop.f32.mrf.mxu0
      %v1190 = vadd.f32 %v866, %v1189
      %v1191 = vpop.f32.mrf.mxu0
      %1192 = vmatprep.mubr.f32.mxu0 0.0
      %1193 = vmatmul.mubr.f32.gmra.mxu0 %v1028
      %v1194 = vpop.f32.mrf.mxu0
      %v1195 = vadd.f32 %v871, %v1194
      %v1196 = vpop.f32.mrf.mxu0
      %1197 = vmatprep.mubr.f32.mxu0 0.0
      %1198 = vmatmul.mubr.f32.gmra.mxu0 %v1031
      %v1199 = vpop.f32.mrf.mxu0
      %v1200 = vadd.f32 %v876, %v1199
      %v1201 = vpop.f32.mrf.mxu0
      %1202 = vmatprep.mubr.f32.mxu0 0.0
      %1203 = vmatmul.mubr.f32.gmra.mxu0 %v1034
      %v1204 = vpop.f32.mrf.mxu0
      %v1205 = vadd.f32 %v881, %v1204
      %v1206 = vpop.f32.mrf.mxu0
      %1207 = vmatprep.mubr.f32.mxu0 0.0
      %1208 = vmatmul.mubr.f32.gmra.mxu0 %v1037
      %v1209 = vpop.f32.mrf.mxu0
      %v1210 = vadd.f32 %v886, %v1209
      %v1211 = vpop.f32.mrf.mxu0
      %1212 = vmatprep.mubr.f32.mxu0 0.0
      %1213 = vmatmul.mubr.f32.gmra.mxu0 %v1040
      %v1214 = vpop.f32.mrf.mxu0
      %v1215 = vadd.f32 %v891, %v1214
      %v1216 = vpop.f32.mrf.mxu0
      %1217 = vmatprep.mubr.f32.mxu0 0.0
      %1218 = vmatmul.mubr.f32.gmra.mxu0 %v1043
      %v1219 = vpop.f32.mrf.mxu0
      %v1220 = vadd.f32 %v896, %v1219
      %v1221 = vpop.f32.mrf.mxu0
      %1222 = vmatprep.mubr.f32.mxu0 0.0
      %1223 = vmatmul.mubr.f32.gmra.mxu0 %v1046
      %v1224 = vpop.f32.mrf.mxu0
      %v1225 = vadd.f32 %v901, %v1224
      %v1226 = vpop.f32.mrf.mxu0
      %1227 = vmatprep.mubr.f32.mxu0 0.0
      %1228 = vmatmul.mubr.f32.gmra.mxu0 %v1049
      %v1229 = vpop.f32.mrf.mxu0
      %v1230 = vadd.f32 %v906, %v1229
      %v1231 = vpop.f32.mrf.mxu0
      %1232 = vmatprep.mubr.f32.mxu0 0.0
      %1233 = vmatmul.mubr.f32.gmra.mxu0 %v1052
      %v1234 = vpop.f32.mrf.mxu0
      %v1235 = vadd.f32 %v911, %v1234
      %v1236 = vpop.f32.mrf.mxu0
      %1237 = vmatprep.mubr.f32.mxu0 0.0
      %1238 = vmatmul.mubr.f32.gmra.mxu0 %v1055
      %v1239 = vpop.f32.mrf.mxu0
      %v1240 = vadd.f32 %v916, %v1239
      %v1241 = vpop.f32.mrf.mxu0
      %1242 = vmatprep.mubr.f32.mxu0 0.0
      %1243 = vmatmul.mubr.f32.gmra.mxu0 %v1058
      %v1244 = vpop.f32.mrf.mxu0
      %v1245 = vadd.f32 %v921, %v1244
      %v1246 = vpop.f32.mrf.mxu0
      %1247 = vmatprep.mubr.f32.mxu0 0.0
      %1248 = vmatmul.mubr.f32.gmra.mxu0 %v1061
      %v1249 = vpop.f32.mrf.mxu0
      %v1250 = vadd.f32 %v926, %v1249
      %v1251 = vpop.f32.mrf.mxu0
      %1252 = vmatprep.mubr.f32.mxu0 0.0
      %1253 = vmatmul.mubr.f32.gmra.mxu0 %v1064
      %v1254 = vpop.f32.mrf.mxu0
      %v1255 = vadd.f32 %v931, %v1254
      %v1256 = vpop.f32.mrf.mxu0
      %1257 = vmatprep.mubr.f32.mxu0 0.0
      %1258 = vmatmul.mubr.f32.gmra.mxu0 %v1067
      %v1259 = vpop.f32.mrf.mxu0
      %v1260 = vadd.f32 %v936, %v1259
      %v1261 = vpop.f32.mrf.mxu0
      %1262 = vmatprep.mubr.f32.mxu0 0.0
      %1263 = vmatmul.mubr.f32.gmra.mxu0 %v1070
      %v1264 = vpop.f32.mrf.mxu0
      %v1265 = vadd.f32 %v941, %v1264
      %v1266 = vpop.f32.mrf.mxu0
      %1267 = vmatprep.mubr.f32.mxu0 0.0
      %1268 = vmatmul.mubr.f32.gmra.mxu0 %v1073
      %v1269 = vpop.f32.mrf.mxu0
      %v1270 = vadd.f32 %v946, %v1269
      %v1271 = vpop.f32.mrf.mxu0
      %1272 = vmatprep.mubr.f32.mxu0 0.0
      %1273 = vmatmul.mubr.f32.gmra.mxu0 %v1076
      %v1274 = vpop.f32.mrf.mxu0
      %v1275 = vadd.f32 %v951, %v1274
      %v1276 = vpop.f32.mrf.mxu0
      %1277 = vmatprep.mubr.f32.mxu0 0.0
      %1278 = vmatmul.mubr.f32.gmra.mxu0 %v1079
      %v1279 = vpop.f32.mrf.mxu0
      %v1280 = vadd.f32 %v956, %v1279
      %v1281 = vpop.f32.mrf.mxu0
      %1282 = vmatprep.mubr.f32.mxu0 0.0
      %1283 = vmatmul.mubr.f32.gmra.mxu0 %v1082
      %v1284 = vpop.f32.mrf.mxu0
      %v1285 = vadd.f32 %v961, %v1284
      %v1286 = vpop.f32.mrf.mxu0
      %1287 = vmatprep.mubr.f32.mxu0 0.0
      %1288 = vmatmul.mubr.f32.gmra.mxu0 %v1085
      %v1289 = vpop.f32.mrf.mxu0
      %v1290 = vadd.f32 %v966, %v1289
      %v1291 = vpop.f32.mrf.mxu0
      %1292 = vmatprep.mubr.f32.mxu0 0.0
      %1293 = vmatmul.mubr.f32.gmra.mxu0 %v1088
      %v1294 = vpop.f32.mrf.mxu0
      %v1295 = vadd.f32 %v971, %v1294
      %v1296 = vpop.f32.mrf.mxu0
      %1297 = vmatprep.mubr.f32.mxu0 0.0
      %1298 = vmatmul.mubr.f32.gmra.mxu0 %v1091
      %v1299 = vpop.f32.mrf.mxu0
      %v1300 = vadd.f32 %v976, %v1299
      %v1301 = vpop.f32.mrf.mxu0
      %1302 = vmatprep.mubr.f32.mxu0 0.0
      %1303 = vmatmul.mubr.f32.gmra.mxu0 %v1094
      %v1304 = vpop.f32.mrf.mxu0
      %v1305 = vadd.f32 %v981, %v1304
      %v1306 = vpop.f32.mrf.mxu0
      %1307 = vmatprep.mubr.f32.mxu0 0.0
      %1308 = vmatmul.mubr.f32.gmra.mxu0 %v1097
      %v1309 = vpop.f32.mrf.mxu0
      %v1310 = vadd.f32 %v986, %v1309
      %v1311 = vpop.f32.mrf.mxu0
      %1312 = vmatprep.mubr.f32.mxu0 0.0
      %1313 = vmatmul.mubr.f32.gmra.mxu0 %v1100
      %v1314 = vpop.f32.mrf.mxu0
      %v1315 = vadd.f32 %v991, %v1314
      %v1316 = vpop.f32.mrf.mxu0
      %1317 = vmatprep.mubr.f32.mxu0 0.0
      %1318 = vmatmul.mubr.f32.gmra.mxu0 %v1103
      %v1319 = vpop.f32.mrf.mxu0
      %v1320 = vadd.f32 %v996, %v1319
      %v1321 = vpop.f32.mrf.mxu0
      %1322 = vmatprep.mubr.f32.mxu0 0.0
      %1323 = vmatmul.mubr.f32.gmra.mxu0 %v1106
      %v1324 = vpop.f32.mrf.mxu0
      %v1325 = vadd.f32 %v1001, %v1324
      %v1326 = vpop.f32.mrf.mxu0
      %1327 = vmatprep.mubr.f32.mxu0 0.0
      %1328 = vmatmul.mubr.f32.gmra.mxu0 %v1109
      %v1329 = vpop.f32.mrf.mxu0
      %v1330 = vadd.f32 %v1006, %v1329
      %v1331 = vpop.f32.mrf.mxu0
      %1332 = vmatprep.mubr.f32.mxu0 0.0
      %1333 = vmatmul.mubr.f32.gmra.mxu0 %v1112
      %v1334 = vpop.f32.mrf.mxu0
      %v1335 = vadd.f32 %v1011, %v1334
      %v1336 = vpop.f32.mrf.mxu0
      %1337 = vmatprep.mubr.f32.mxu0 0.0
      %1338 = vmatmul.mubr.f32.gmra.mxu0 %v1115
      %v1339 = vpop.f32.mrf.mxu0
      %v1340 = vadd.f32 %v1016, %v1339
      %v1341 = vpop.f32.mrf.mxu0
      %1342 = vmatprep.mubr.f32.mxu0 0.0
      %1343 = vmatmul.mubr.f32.gmra.mxu0 %v1118
      %v1344 = vpop.f32.mrf.mxu0
      %v1345 = vadd.f32 %v1021, %v1344
      %v1346 = vpop.f32.mrf.mxu0
      %1347 = vdwg.mxu0
      %v1348 = vld [vmem:[%s165 + $0x2] sm:$0xff]
      %v1349 = vld [vmem:[%s165 + $0xa] sm:$0xff]
      %v1350 = vld [vmem:[%s165 + $0x1a] sm:$0xff]
      %v1351 = vld [vmem:[%s165 + $0x22] sm:$0xff]
      %v1352 = vld [vmem:[%s165 + $0x32] sm:$0xff]
      %v1353 = vld [vmem:[%s165 + $0x3a] sm:$0xff]
      %v1354 = vld [vmem:[%s165 + $0x4a] sm:$0xff]
      %v1355 = vld [vmem:[%s165 + $0x52] sm:$0xff]
      %v1356 = vld [vmem:[%s165 + $0x62] sm:$0xff]
      %v1357 = vld [vmem:[%s165 + $0x6a] sm:$0xff]
      %v1358 = vld [vmem:[%s165 + $0x7a] sm:$0xff]
      %v1359 = vld [vmem:[%s165 + $0x82] sm:$0xff]
      %v1360 = vld [vmem:[%s165 + $0x92] sm:$0xff]
      %v1361 = vld [vmem:[%s165 + $0x9a] sm:$0xff]
      %v1362 = vld [vmem:[%s165 + $0xaa] sm:$0xff]
      %v1363 = vld [vmem:[%s165 + $0xb2] sm:$0xff]
      %v1364 = vld [vmem:[%s165 + $0xc2] sm:$0xff]
      %v1365 = vld [vmem:[%s165 + $0xca] sm:$0xff]
      %v1366 = vld [vmem:[%s165 + $0xda] sm:$0xff]
      %v1367 = vld [vmem:[%s165 + $0xe2] sm:$0xff]
      %v1368 = vld [vmem:[%s165 + $0xf2] sm:$0xff]
      %v1369 = vld [vmem:[%s165 + $0xfa] sm:$0xff]
      %v1370 = vld [vmem:[%s165 + $0x10a] sm:$0xff]
      %v1371 = vld [vmem:[%s165 + $0x112] sm:$0xff]
      %v1372 = vld [vmem:[%s165 + $0x122] sm:$0xff]
      %v1373 = vld [vmem:[%s165 + $0x12a] sm:$0xff]
      %v1374 = vld [vmem:[%s165 + $0x13a] sm:$0xff]
      %v1375 = vld [vmem:[%s165 + $0x142] sm:$0xff]
      %v1376 = vld [vmem:[%s165 + $0x152] sm:$0xff]
      %v1377 = vld [vmem:[%s165 + $0x15a] sm:$0xff]
      %v1378 = vld [vmem:[%s165 + $0x16a] sm:$0xff]
      %v1379 = vld [vmem:[%s165 + $0x172] sm:$0xff]
      %v1380 = vsub.f32 %v1348, %v275
      %v1381 = vsub.f32 %v1349, %v275
      %v1382 = vsub.f32 %v1350, %v275
      %v1383 = vsub.f32 %v1351, %v275
      %v1384 = vsub.f32 %v1352, %v275
      %v1385 = vsub.f32 %v1353, %v275
      %v1386 = vsub.f32 %v1354, %v275
      %v1387 = vsub.f32 %v1355, %v275
      %v1388 = vsub.f32 %v1356, %v275
      %v1389 = vsub.f32 %v1357, %v275
      %v1390 = vsub.f32 %v1358, %v275
      %v1391 = vsub.f32 %v1359, %v275
      %v1392 = vsub.f32 %v1360, %v275
      %v1393 = vsub.f32 %v1361, %v275
      %v1394 = vsub.f32 %v1362, %v275
      %v1395 = vsub.f32 %v1363, %v275
      %v1396 = vsub.f32 %v1364, %v275
      %v1397 = vsub.f32 %v1365, %v275
      %v1398 = vsub.f32 %v1366, %v275
      %v1399 = vsub.f32 %v1367, %v275
      %v1400 = vsub.f32 %v1368, %v275
      %v1401 = vsub.f32 %v1369, %v275
      %v1402 = vsub.f32 %v1370, %v275
      %v1403 = vsub.f32 %v1371, %v275
      %v1404 = vsub.f32 %v1372, %v275
      %v1405 = vsub.f32 %v1373, %v275
      %v1406 = vsub.f32 %v1374, %v275
      %v1407 = vsub.f32 %v1375, %v275
      %v1408 = vsub.f32 %v1376, %v275
      %v1409 = vsub.f32 %v1377, %v275
      %v1410 = vsub.f32 %v1378, %v275
      %v1411 = vsub.f32 %v1379, %v275
      %v1412 = vmul.f32 %v1380, %v411
      %v1413 = vmul.f32 %v1381, %v411
      %v1414 = vmul.f32 %v1382, %v411
      %v1415 = vmul.f32 %v1383, %v411
      %v1416 = vmul.f32 %v1384, %v411
      %v1417 = vmul.f32 %v1385, %v411
      %v1418 = vmul.f32 %v1386, %v411
      %v1419 = vmul.f32 %v1387, %v411
      %v1420 = vmul.f32 %v1388, %v411
      %v1421 = vmul.f32 %v1389, %v411
      %v1422 = vmul.f32 %v1390, %v411
      %v1423 = vmul.f32 %v1391, %v411
      %v1424 = vmul.f32 %v1392, %v411
      %v1425 = vmul.f32 %v1393, %v411
      %v1426 = vmul.f32 %v1394, %v411
      %v1427 = vmul.f32 %v1395, %v411
      %v1428 = vmul.f32 %v1396, %v411
      %v1429 = vmul.f32 %v1397, %v411
      %v1430 = vmul.f32 %v1398, %v411
      %v1431 = vmul.f32 %v1399, %v411
      %v1432 = vmul.f32 %v1400, %v411
      %v1433 = vmul.f32 %v1401, %v411
      %v1434 = vmul.f32 %v1402, %v411
      %v1435 = vmul.f32 %v1403, %v411
      %v1436 = vmul.f32 %v1404, %v411
      %v1437 = vmul.f32 %v1405, %v411
      %v1438 = vmul.f32 %v1406, %v411
      %v1439 = vmul.f32 %v1407, %v411
      %v1440 = vmul.f32 %v1408, %v411
      %v1441 = vmul.f32 %v1409, %v411
      %v1442 = vmul.f32 %v1410, %v411
      %v1443 = vmul.f32 %v1411, %v411
      %v1444 = vadd.s32 %v413, 2
      %v1445 = vadd.s32 %v414, 2
      %vm1446 = vcmp.ge.s32.totalorder %v1444, 1
      %vm1447 = vcmp.ge.s32.totalorder %v1445, 1
      %vm1448 = vmand 0, %vm1446
      %vm1449 = vmand 0, %vm1447
      %vm1450 = vmand 1, %vm1446
      %vm1451 = vmand 1, %vm1447
      %vm1452 = vcmp.le.s32.totalorder %v1444, 16
      %vm1453 = vcmp.le.s32.totalorder %v1445, 16
      %vm1454 = vmand %vm1448, %vm1452
      %vm1455 = vmand %vm1449, %vm1453
      %vm1456 = vmand %vm1450, %vm1452
      %vm1457 = vmand %vm1451, %vm1453
      %v1458 = vsel %vm1454, %v1412, 0.0
      %v1459 = vsel %vm1455, %v1413, 0.0
      %v1460 = vsel %vm1456, %v1414, 0.0
      %v1461 = vsel %vm1457, %v1415, 0.0
      %v1462 = vsel %vm1456, %v1416, 0.0
      %v1463 = vsel %vm1457, %v1417, 0.0
      %v1464 = vsel %vm1456, %v1418, 0.0
      %v1465 = vsel %vm1457, %v1419, 0.0
      %v1466 = vsel %vm1456, %v1420, 0.0
      %v1467 = vsel %vm1457, %v1421, 0.0
      %v1468 = vsel %vm1456, %v1422, 0.0
      %v1469 = vsel %vm1457, %v1423, 0.0
      %v1470 = vsel %vm1456, %v1424, 0.0
      %v1471 = vsel %vm1457, %v1425, 0.0
      %v1472 = vsel %vm1456, %v1426, 0.0
      %v1473 = vsel %vm1457, %v1427, 0.0
      %v1474 = vsel %vm1456, %v1428, 0.0
      %v1475 = vsel %vm1457, %v1429, 0.0
      %v1476 = vsel %vm1456, %v1430, 0.0
      %v1477 = vsel %vm1457, %v1431, 0.0
      %v1478 = vsel %vm1456, %v1432, 0.0
      %v1479 = vsel %vm1457, %v1433, 0.0
      %v1480 = vsel %vm1456, %v1434, 0.0
      %v1481 = vsel %vm1457, %v1435, 0.0
      %v1482 = vsel %vm1456, %v1436, 0.0
      %v1483 = vsel %vm1457, %v1437, 0.0
      %v1484 = vsel %vm1456, %v1438, 0.0
      %v1485 = vsel %vm1457, %v1439, 0.0
      %v1486 = vsel %vm1456, %v1440, 0.0
      %v1487 = vsel %vm1457, %v1441, 0.0
      %v1488 = vsel %vm1456, %v1442, 0.0
      %v1489 = vsel %vm1457, %v1443, 0.0
      %v1490 = vld [vmem:[%s1 + $0xa] sm:$0x1f]
      %v1492 = vsel %vm204, %v1458, 0
      %v1495 = vsel %vm204, %v1459, 0
      %v1498 = vsel %vm204, %v1460, 0
      %v1501 = vsel %vm204, %v1461, 0
      %v1504 = vsel %vm204, %v1462, 0
      %v1507 = vsel %vm204, %v1463, 0
      %v1510 = vsel %vm204, %v1464, 0
      %v1513 = vsel %vm204, %v1465, 0
      %v1516 = vsel %vm204, %v1466, 0
      %v1519 = vsel %vm204, %v1467, 0
      %v1522 = vsel %vm204, %v1468, 0
      %v1525 = vsel %vm204, %v1469, 0
      %v1528 = vsel %vm204, %v1470, 0
      %v1531 = vsel %vm204, %v1471, 0
      %v1534 = vsel %vm204, %v1472, 0
      %v1537 = vsel %vm204, %v1473, 0
      %v1540 = vsel %vm204, %v1474, 0
      %v1543 = vsel %vm204, %v1475, 0
      %v1546 = vsel %vm204, %v1476, 0
      %v1549 = vsel %vm204, %v1477, 0
      %v1552 = vsel %vm204, %v1478, 0
      %v1555 = vsel %vm204, %v1479, 0
      %v1558 = vsel %vm204, %v1480, 0
      %v1561 = vsel %vm204, %v1481, 0
      %v1564 = vsel %vm204, %v1482, 0
      %v1567 = vsel %vm204, %v1483, 0
      %v1570 = vsel %vm204, %v1484, 0
      %v1573 = vsel %vm204, %v1485, 0
      %v1576 = vsel %vm204, %v1486, 0
      %v1579 = vsel %vm204, %v1487, 0
      %v1582 = vsel %vm204, %v1488, 0
      %v1585 = vsel %vm204, %v1489, 0
      %v1588 = vsel %vm795, %v1490, 0
      %1590 = vmatprep.subr.mxu0 0.0
      %1591 = vmatpush1.msra.mxu0 0.0
      %1592 = vmatprep.subr.mxu0 0.0
      %1593 = vmatpush1.msra.mxu0 0.0
      %1594 = vmatprep.subr.mxu0 0.0
      %1595 = vmatpush1.msra.mxu0 0.0
      %1596 = vmatprep.subr.mxu0 0.0
      %1597 = vmatpush1.msra.mxu0 0.0
      %1598 = vmatprep.subr.mxu0 0.0
      %1599 = vmatpush1.msra.mxu0 0.0
      %1600 = vmatprep.subr.mxu0 0.0
      %1601 = vmatpush1.msra.mxu0 0.0
      %1602 = vmatprep.subr.mxu0 0.0
      %1603 = vmatpush1.msra.mxu0 0.0
      %1604 = vmatprep.subr.mxu0 0.0
      %1605 = vmatpush1.msra.mxu0 0.0
      %1606 = vmatprep.subr.mxu0 0.0
      %1607 = vmatpush1.msra.mxu0 0.0
      %1608 = vmatprep.subr.mxu0 0.0
      %1609 = vmatpush1.msra.mxu0 0.0
      %1610 = vmatprep.subr.mxu0 0.0
      %1611 = vmatpush1.msra.mxu0 0.0
      %1612 = vmatprep.subr.mxu0 0.0
      %1613 = vmatpush1.msra.mxu0 0.0
      %1614 = vmatprep.subr.mxu0 0.0
      %1615 = vmatpush1.msra.mxu0 0.0
      %1616 = vmatprep.subr.mxu0 0.0
      %1617 = vmatpush1.msra.mxu0 0.0
      %1618 = vmatprep.subr.mxu0 0.0
      %1619 = vmatpush1.msra.mxu0 0.0
      %1620 = vmatprep.subr.mxu0 0.0
      %1621 = vmatpush1.msra.mxu0 %v1588
      %1622 = vmatprep.subr.mxu0 0.0
      %1623 = vmatpush2.msra.mxu0 0.0
      %1624 = vmatprep.subr.mxu0 0.0
      %1625 = vmatpush2.msra.mxu0 0.0
      %1626 = vmatprep.subr.mxu0 0.0
      %1627 = vmatpush2.msra.mxu0 0.0
      %1628 = vmatprep.subr.mxu0 0.0
      %1629 = vmatpush2.msra.mxu0 0.0
      %1630 = vmatprep.subr.mxu0 0.0
      %1631 = vmatpush2.msra.mxu0 0.0
      %1632 = vmatprep.subr.mxu0 0.0
      %1633 = vmatpush2.msra.mxu0 0.0
      %1634 = vmatprep.subr.mxu0 0.0
      %1635 = vmatpush2.msra.mxu0 0.0
      %1636 = vmatprep.subr.mxu0 0.0
      %1637 = vmatpush2.msra.mxu0 0.0
      %1638 = vmatprep.subr.mxu0 0.0
      %1639 = vmatpush2.msra.mxu0 0.0
      %1640 = vmatprep.subr.mxu0 0.0
      %1641 = vmatpush2.msra.mxu0 0.0
      %1642 = vmatprep.subr.mxu0 0.0
      %1643 = vmatpush2.msra.mxu0 0.0
      %1644 = vmatprep.subr.mxu0 0.0
      %1645 = vmatpush2.msra.mxu0 0.0
      %1646 = vmatprep.subr.mxu0 0.0
      %1647 = vmatpush2.msra.mxu0 0.0
      %1648 = vmatprep.subr.mxu0 0.0
      %1649 = vmatpush2.msra.mxu0 0.0
      %1650 = vmatprep.subr.mxu0 0.0
      %1651 = vmatpush2.msra.mxu0 0.0
      %1652 = vmatprep.subr.mxu0 0.0
      %1653 = vmatpush2.msra.mxu0 0.0
      %1654 = vmatprep.mubr.f32.mxu0 0.0
      %1655 = vmatmul.mubr.f32.gmra.mxu0 %v1492
      %v1656 = vpop.f32.mrf.mxu0
      %v1657 = vadd.f32 0.0, %v1656
      %v1658 = vpop.f32.mrf.mxu0
      %1659 = vmatprep.mubr.f32.mxu0 0.0
      %1660 = vmatmul.mubr.f32.gmra.mxu0 %v1495
      %v1661 = vpop.f32.mrf.mxu0
      %v1662 = vadd.f32 0.0, %v1661
      %v1663 = vpop.f32.mrf.mxu0
      %1664 = vmatprep.mubr.f32.mxu0 0.0
      %1665 = vmatmul.mubr.f32.gmra.mxu0 %v1498
      %v1666 = vpop.f32.mrf.mxu0
      %v1667 = vadd.f32 0.0, %v1666
      %v1668 = vpop.f32.mrf.mxu0
      %1669 = vmatprep.mubr.f32.mxu0 0.0
      %1670 = vmatmul.mubr.f32.gmra.mxu0 %v1501
      %v1671 = vpop.f32.mrf.mxu0
      %v1672 = vadd.f32 0.0, %v1671
      %v1673 = vpop.f32.mrf.mxu0
      %1674 = vmatprep.mubr.f32.mxu0 0.0
      %1675 = vmatmul.mubr.f32.gmra.mxu0 %v1504
      %v1676 = vpop.f32.mrf.mxu0
      %v1677 = vadd.f32 0.0, %v1676
      %v1678 = vpop.f32.mrf.mxu0
      %1679 = vmatprep.mubr.f32.mxu0 0.0
      %1680 = vmatmul.mubr.f32.gmra.mxu0 %v1507
      %v1681 = vpop.f32.mrf.mxu0
      %v1682 = vadd.f32 0.0, %v1681
      %v1683 = vpop.f32.mrf.mxu0
      %1684 = vmatprep.mubr.f32.mxu0 0.0
      %1685 = vmatmul.mubr.f32.gmra.mxu0 %v1510
      %v1686 = vpop.f32.mrf.mxu0
      %v1687 = vadd.f32 0.0, %v1686
      %v1688 = vpop.f32.mrf.mxu0
      %1689 = vmatprep.mubr.f32.mxu0 0.0
      %1690 = vmatmul.mubr.f32.gmra.mxu0 %v1513
      %v1691 = vpop.f32.mrf.mxu0
      %v1692 = vadd.f32 0.0, %v1691
      %v1693 = vpop.f32.mrf.mxu0
      %1694 = vmatprep.mubr.f32.mxu0 0.0
      %1695 = vmatmul.mubr.f32.gmra.mxu0 %v1516
      %v1696 = vpop.f32.mrf.mxu0
      %v1697 = vadd.f32 0.0, %v1696
      %v1698 = vpop.f32.mrf.mxu0
      %1699 = vmatprep.mubr.f32.mxu0 0.0
      %1700 = vmatmul.mubr.f32.gmra.mxu0 %v1519
      %v1701 = vpop.f32.mrf.mxu0
      %v1702 = vadd.f32 0.0, %v1701
      %v1703 = vpop.f32.mrf.mxu0
      %1704 = vmatprep.mubr.f32.mxu0 0.0
      %1705 = vmatmul.mubr.f32.gmra.mxu0 %v1522
      %v1706 = vpop.f32.mrf.mxu0
      %v1707 = vadd.f32 0.0, %v1706
      %v1708 = vpop.f32.mrf.mxu0
      %1709 = vmatprep.mubr.f32.mxu0 0.0
      %1710 = vmatmul.mubr.f32.gmra.mxu0 %v1525
      %v1711 = vpop.f32.mrf.mxu0
      %v1712 = vadd.f32 0.0, %v1711
      %v1713 = vpop.f32.mrf.mxu0
      %1714 = vmatprep.mubr.f32.mxu0 0.0
      %1715 = vmatmul.mubr.f32.gmra.mxu0 %v1528
      %v1716 = vpop.f32.mrf.mxu0
      %v1717 = vadd.f32 0.0, %v1716
      %v1718 = vpop.f32.mrf.mxu0
      %1719 = vmatprep.mubr.f32.mxu0 0.0
      %1720 = vmatmul.mubr.f32.gmra.mxu0 %v1531
      %v1721 = vpop.f32.mrf.mxu0
      %v1722 = vadd.f32 0.0, %v1721
      %v1723 = vpop.f32.mrf.mxu0
      %1724 = vmatprep.mubr.f32.mxu0 0.0
      %1725 = vmatmul.mubr.f32.gmra.mxu0 %v1534
      %v1726 = vpop.f32.mrf.mxu0
      %v1727 = vadd.f32 0.0, %v1726
      %v1728 = vpop.f32.mrf.mxu0
      %1729 = vmatprep.mubr.f32.mxu0 0.0
      %1730 = vmatmul.mubr.f32.gmra.mxu0 %v1537
      %v1731 = vpop.f32.mrf.mxu0
      %v1732 = vadd.f32 0.0, %v1731
      %v1733 = vpop.f32.mrf.mxu0
      %1734 = vmatprep.mubr.f32.mxu0 0.0
      %1735 = vmatmul.mubr.f32.gmra.mxu0 %v1540
      %v1736 = vpop.f32.mrf.mxu0
      %v1737 = vadd.f32 0.0, %v1736
      %v1738 = vpop.f32.mrf.mxu0
      %1739 = vmatprep.mubr.f32.mxu0 0.0
      %1740 = vmatmul.mubr.f32.gmra.mxu0 %v1543
      %v1741 = vpop.f32.mrf.mxu0
      %v1742 = vadd.f32 0.0, %v1741
      %v1743 = vpop.f32.mrf.mxu0
      %1744 = vmatprep.mubr.f32.mxu0 0.0
      %1745 = vmatmul.mubr.f32.gmra.mxu0 %v1546
      %v1746 = vpop.f32.mrf.mxu0
      %v1747 = vadd.f32 0.0, %v1746
      %v1748 = vpop.f32.mrf.mxu0
      %1749 = vmatprep.mubr.f32.mxu0 0.0
      %1750 = vmatmul.mubr.f32.gmra.mxu0 %v1549
      %v1751 = vpop.f32.mrf.mxu0
      %v1752 = vadd.f32 0.0, %v1751
      %v1753 = vpop.f32.mrf.mxu0
      %1754 = vmatprep.mubr.f32.mxu0 0.0
      %1755 = vmatmul.mubr.f32.gmra.mxu0 %v1552
      %v1756 = vpop.f32.mrf.mxu0
      %v1757 = vadd.f32 0.0, %v1756
      %v1758 = vpop.f32.mrf.mxu0
      %1759 = vmatprep.mubr.f32.mxu0 0.0
      %1760 = vmatmul.mubr.f32.gmra.mxu0 %v1555
      %v1761 = vpop.f32.mrf.mxu0
      %v1762 = vadd.f32 0.0, %v1761
      %v1763 = vpop.f32.mrf.mxu0
      %1764 = vmatprep.mubr.f32.mxu0 0.0
      %1765 = vmatmul.mubr.f32.gmra.mxu0 %v1558
      %v1766 = vpop.f32.mrf.mxu0
      %v1767 = vadd.f32 0.0, %v1766
      %v1768 = vpop.f32.mrf.mxu0
      %1769 = vmatprep.mubr.f32.mxu0 0.0
      %1770 = vmatmul.mubr.f32.gmra.mxu0 %v1561
      %v1771 = vpop.f32.mrf.mxu0
      %v1772 = vadd.f32 0.0, %v1771
      %v1773 = vpop.f32.mrf.mxu0
      %1774 = vmatprep.mubr.f32.mxu0 0.0
      %1775 = vmatmul.mubr.f32.gmra.mxu0 %v1564
      %v1776 = vpop.f32.mrf.mxu0
      %v1777 = vadd.f32 0.0, %v1776
      %v1778 = vpop.f32.mrf.mxu0
      %1779 = vmatprep.mubr.f32.mxu0 0.0
      %1780 = vmatmul.mubr.f32.gmra.mxu0 %v1567
      %v1781 = vpop.f32.mrf.mxu0
      %v1782 = vadd.f32 0.0, %v1781
      %v1783 = vpop.f32.mrf.mxu0
      %1784 = vmatprep.mubr.f32.mxu0 0.0
      %1785 = vmatmul.mubr.f32.gmra.mxu0 %v1570
      %v1786 = vpop.f32.mrf.mxu0
      %v1787 = vadd.f32 0.0, %v1786
      %v1788 = vpop.f32.mrf.mxu0
      %1789 = vmatprep.mubr.f32.mxu0 0.0
      %1790 = vmatmul.mubr.f32.gmra.mxu0 %v1573
      %v1791 = vpop.f32.mrf.mxu0
      %v1792 = vadd.f32 0.0, %v1791
      %v1793 = vpop.f32.mrf.mxu0
      %1794 = vmatprep.mubr.f32.mxu0 0.0
      %1795 = vmatmul.mubr.f32.gmra.mxu0 %v1576
      %v1796 = vpop.f32.mrf.mxu0
      %v1797 = vadd.f32 0.0, %v1796
      %v1798 = vpop.f32.mrf.mxu0
      %1799 = vmatprep.mubr.f32.mxu0 0.0
      %1800 = vmatmul.mubr.f32.gmra.mxu0 %v1579
      %v1801 = vpop.f32.mrf.mxu0
      %v1802 = vadd.f32 0.0, %v1801
      %v1803 = vpop.f32.mrf.mxu0
      %1804 = vmatprep.mubr.f32.mxu0 0.0
      %1805 = vmatmul.mubr.f32.gmra.mxu0 %v1582
      %v1806 = vpop.f32.mrf.mxu0
      %v1807 = vadd.f32 0.0, %v1806
      %v1808 = vpop.f32.mrf.mxu0
      %1809 = vmatprep.mubr.f32.mxu0 0.0
      %1810 = vmatmul.mubr.f32.gmra.mxu0 %v1585
      %v1811 = vpop.f32.mrf.mxu0
      %v1812 = vadd.f32 0.0, %v1811
      %v1813 = vpop.f32.mrf.mxu0
      %1814 = vdwg.mxu0
      %v1815 = vadd.f32 %v1190, %v1657
      %v1816 = vadd.f32 %v1195, %v1662
      %v1817 = vadd.f32 %v1200, %v1667
      %v1818 = vadd.f32 %v1205, %v1672
      %v1819 = vadd.f32 %v1210, %v1677
      %v1820 = vadd.f32 %v1215, %v1682
      %v1821 = vadd.f32 %v1220, %v1687
      %v1822 = vadd.f32 %v1225, %v1692
      %v1823 = vadd.f32 %v1230, %v1697
      %v1824 = vadd.f32 %v1235, %v1702
      %v1825 = vadd.f32 %v1240, %v1707
      %v1826 = vadd.f32 %v1245, %v1712
      %v1827 = vadd.f32 %v1250, %v1717
      %v1828 = vadd.f32 %v1255, %v1722
      %v1829 = vadd.f32 %v1260, %v1727
      %v1830 = vadd.f32 %v1265, %v1732
      %v1831 = vadd.f32 %v1270, %v1737
      %v1832 = vadd.f32 %v1275, %v1742
      %v1833 = vadd.f32 %v1280, %v1747
      %v1834 = vadd.f32 %v1285, %v1752
      %v1835 = vadd.f32 %v1290, %v1757
      %v1836 = vadd.f32 %v1295, %v1762
      %v1837 = vadd.f32 %v1300, %v1767
      %v1838 = vadd.f32 %v1305, %v1772
      %v1839 = vadd.f32 %v1310, %v1777
      %v1840 = vadd.f32 %v1315, %v1782
      %v1841 = vadd.f32 %v1320, %v1787
      %v1842 = vadd.f32 %v1325, %v1792
      %v1843 = vadd.f32 %v1330, %v1797
      %v1844 = vadd.f32 %v1335, %v1802
      %v1845 = vadd.f32 %v1340, %v1807
      %v1846 = vadd.f32 %v1345, %v1812
      %v1847 = vld [vmem:[%s171] sm:$0xff]
      %v1848 = vld [vmem:[%s171 + $0x8] sm:$0xff]
      %v1849 = vld [vmem:[%s171 + $0x18] sm:$0xff]
      %v1850 = vld [vmem:[%s171 + $0x20] sm:$0xff]
      %v1851 = vld [vmem:[%s171 + $0x30] sm:$0xff]
      %v1852 = vld [vmem:[%s171 + $0x38] sm:$0xff]
      %v1853 = vld [vmem:[%s171 + $0x48] sm:$0xff]
      %v1854 = vld [vmem:[%s171 + $0x50] sm:$0xff]
      %v1855 = vld [vmem:[%s171 + $0x60] sm:$0xff]
      %v1856 = vld [vmem:[%s171 + $0x68] sm:$0xff]
      %v1857 = vld [vmem:[%s171 + $0x78] sm:$0xff]
      %v1858 = vld [vmem:[%s171 + $0x80] sm:$0xff]
      %v1859 = vld [vmem:[%s171 + $0x90] sm:$0xff]
      %v1860 = vld [vmem:[%s171 + $0x98] sm:$0xff]
      %v1861 = vld [vmem:[%s171 + $0xa8] sm:$0xff]
      %v1862 = vld [vmem:[%s171 + $0xb0] sm:$0xff]
      %v1863 = vld [vmem:[%s171 + $0xc0] sm:$0xff]
      %v1864 = vld [vmem:[%s171 + $0xc8] sm:$0xff]
      %v1865 = vld [vmem:[%s171 + $0xd8] sm:$0xff]
      %v1866 = vld [vmem:[%s171 + $0xe0] sm:$0xff]
      %v1867 = vld [vmem:[%s171 + $0xf0] sm:$0xff]
      %v1868 = vld [vmem:[%s171 + $0xf8] sm:$0xff]
      %v1869 = vld [vmem:[%s171 + $0x108] sm:$0xff]
      %v1870 = vld [vmem:[%s171 + $0x110] sm:$0xff]
      %v1871 = vld [vmem:[%s171 + $0x120] sm:$0xff]
      %v1872 = vld [vmem:[%s171 + $0x128] sm:$0xff]
      %v1873 = vld [vmem:[%s171 + $0x138] sm:$0xff]
      %v1874 = vld [vmem:[%s171 + $0x140] sm:$0xff]
      %v1875 = vld [vmem:[%s171 + $0x150] sm:$0xff]
      %v1876 = vld [vmem:[%s171 + $0x158] sm:$0xff]
      %v1877 = vld [vmem:[%s171 + $0x168] sm:$0xff]
      %v1878 = vld [vmem:[%s171 + $0x170] sm:$0xff]
      %v1879 = vsub.f32 %v1847, %v275
      %v1880 = vsub.f32 %v1848, %v275
      %v1881 = vsub.f32 %v1849, %v275
      %v1882 = vsub.f32 %v1850, %v275
      %v1883 = vsub.f32 %v1851, %v275
      %v1884 = vsub.f32 %v1852, %v275
      %v1885 = vsub.f32 %v1853, %v275
      %v1886 = vsub.f32 %v1854, %v275
      %v1887 = vsub.f32 %v1855, %v275
      %v1888 = vsub.f32 %v1856, %v275
      %v1889 = vsub.f32 %v1857, %v275
      %v1890 = vsub.f32 %v1858, %v275
      %v1891 = vsub.f32 %v1859, %v275
      %v1892 = vsub.f32 %v1860, %v275
      %v1893 = vsub.f32 %v1861, %v275
      %v1894 = vsub.f32 %v1862, %v275
      %v1895 = vsub.f32 %v1863, %v275
      %v1896 = vsub.f32 %v1864, %v275
      %v1897 = vsub.f32 %v1865, %v275
      %v1898 = vsub.f32 %v1866, %v275
      %v1899 = vsub.f32 %v1867, %v275
      %v1900 = vsub.f32 %v1868, %v275
      %v1901 = vsub.f32 %v1869, %v275
      %v1902 = vsub.f32 %v1870, %v275
      %v1903 = vsub.f32 %v1871, %v275
      %v1904 = vsub.f32 %v1872, %v275
      %v1905 = vsub.f32 %v1873, %v275
      %v1906 = vsub.f32 %v1874, %v275
      %v1907 = vsub.f32 %v1875, %v275
      %v1908 = vsub.f32 %v1876, %v275
      %v1909 = vsub.f32 %v1877, %v275
      %v1910 = vsub.f32 %v1878, %v275
      %v1911 = vmul.f32 %v1879, %v411
      %v1912 = vmul.f32 %v1880, %v411
      %v1913 = vmul.f32 %v1881, %v411
      %v1914 = vmul.f32 %v1882, %v411
      %v1915 = vmul.f32 %v1883, %v411
      %v1916 = vmul.f32 %v1884, %v411
      %v1917 = vmul.f32 %v1885, %v411
      %v1918 = vmul.f32 %v1886, %v411
      %v1919 = vmul.f32 %v1887, %v411
      %v1920 = vmul.f32 %v1888, %v411
      %v1921 = vmul.f32 %v1889, %v411
      %v1922 = vmul.f32 %v1890, %v411
      %v1923 = vmul.f32 %v1891, %v411
      %v1924 = vmul.f32 %v1892, %v411
      %v1925 = vmul.f32 %v1893, %v411
      %v1926 = vmul.f32 %v1894, %v411
      %v1927 = vmul.f32 %v1895, %v411
      %v1928 = vmul.f32 %v1896, %v411
      %v1929 = vmul.f32 %v1897, %v411
      %v1930 = vmul.f32 %v1898, %v411
      %v1931 = vmul.f32 %v1899, %v411
      %v1932 = vmul.f32 %v1900, %v411
      %v1933 = vmul.f32 %v1901, %v411
      %v1934 = vmul.f32 %v1902, %v411
      %v1935 = vmul.f32 %v1903, %v411
      %v1936 = vmul.f32 %v1904, %v411
      %v1937 = vmul.f32 %v1905, %v411
      %v1938 = vmul.f32 %v1906, %v411
      %v1939 = vmul.f32 %v1907, %v411
      %v1940 = vmul.f32 %v1908, %v411
      %v1941 = vmul.f32 %v1909, %v411
      %v1942 = vmul.f32 %v1910, %v411
      %v1943 = vsel %vm521, %v1911, 0.0
      %v1944 = vsel %vm522, %v1912, 0.0
      %v1945 = vsel %vm521, %v1913, 0.0
      %v1946 = vsel %vm522, %v1914, 0.0
      %v1947 = vsel %vm521, %v1915, 0.0
      %v1948 = vsel %vm522, %v1916, 0.0
      %v1949 = vsel %vm521, %v1917, 0.0
      %v1950 = vsel %vm522, %v1918, 0.0
      %v1951 = vsel %vm521, %v1919, 0.0
      %v1952 = vsel %vm522, %v1920, 0.0
      %v1953 = vsel %vm521, %v1921, 0.0
      %v1954 = vsel %vm522, %v1922, 0.0
      %v1955 = vsel %vm521, %v1923, 0.0
      %v1956 = vsel %vm522, %v1924, 0.0
      %v1957 = vsel %vm521, %v1925, 0.0
      %v1958 = vsel %vm522, %v1926, 0.0
      %v1959 = vsel %vm521, %v1927, 0.0
      %v1960 = vsel %vm522, %v1928, 0.0
      %v1961 = vsel %vm521, %v1929, 0.0
      %v1962 = vsel %vm522, %v1930, 0.0
      %v1963 = vsel %vm521, %v1931, 0.0
      %v1964 = vsel %vm522, %v1932, 0.0
      %v1965 = vsel %vm521, %v1933, 0.0
      %v1966 = vsel %vm522, %v1934, 0.0
      %v1967 = vsel %vm521, %v1935, 0.0
      %v1968 = vsel %vm522, %v1936, 0.0
      %v1969 = vsel %vm521, %v1937, 0.0
      %v1970 = vsel %vm522, %v1938, 0.0
      %v1971 = vsel %vm521, %v1939, 0.0
      %v1972 = vsel %vm522, %v1940, 0.0
      %v1973 = vsel %vm521, %v1941, 0.0
      %v1974 = vsel %vm522, %v1942, 0.0
      %v1975 = vld [vmem:[%s1 + $0xf] sm:$0x1f]
      %v1977 = vsel %vm204, %v1943, 0
      %v1980 = vsel %vm204, %v1944, 0
      %v1983 = vsel %vm204, %v1945, 0
      %v1986 = vsel %vm204, %v1946, 0
      %v1989 = vsel %vm204, %v1947, 0
      %v1992 = vsel %vm204, %v1948, 0
      %v1995 = vsel %vm204, %v1949, 0
      %v1998 = vsel %vm204, %v1950, 0
      %v2001 = vsel %vm204, %v1951, 0
      %v2004 = vsel %vm204, %v1952, 0
      %v2007 = vsel %vm204, %v1953, 0
      %v2010 = vsel %vm204, %v1954, 0
      %v2013 = vsel %vm204, %v1955, 0
      %v2016 = vsel %vm204, %v1956, 0
      %v2019 = vsel %vm204, %v1957, 0
      %v2022 = vsel %vm204, %v1958, 0
      %v2025 = vsel %vm204, %v1959, 0
      %v2028 = vsel %vm204, %v1960, 0
      %v2031 = vsel %vm204, %v1961, 0
      %v2034 = vsel %vm204, %v1962, 0
      %v2037 = vsel %vm204, %v1963, 0
      %v2040 = vsel %vm204, %v1964, 0
      %v2043 = vsel %vm204, %v1965, 0
      %v2046 = vsel %vm204, %v1966, 0
      %v2049 = vsel %vm204, %v1967, 0
      %v2052 = vsel %vm204, %v1968, 0
      %v2055 = vsel %vm204, %v1969, 0
      %v2058 = vsel %vm204, %v1970, 0
      %v2061 = vsel %vm204, %v1971, 0
      %v2064 = vsel %vm204, %v1972, 0
      %v2067 = vsel %vm204, %v1973, 0
      %v2070 = vsel %vm204, %v1974, 0
      %v2073 = vsel %vm795, %v1975, 0
      %2075 = vmatprep.subr.mxu0 0.0
      %2076 = vmatpush1.msra.mxu0 0.0
      %2077 = vmatprep.subr.mxu0 0.0
      %2078 = vmatpush1.msra.mxu0 0.0
      %2079 = vmatprep.subr.mxu0 0.0
      %2080 = vmatpush1.msra.mxu0 0.0
      %2081 = vmatprep.subr.mxu0 0.0
      %2082 = vmatpush1.msra.mxu0 0.0
      %2083 = vmatprep.subr.mxu0 0.0
      %2084 = vmatpush1.msra.mxu0 0.0
      %2085 = vmatprep.subr.mxu0 0.0
      %2086 = vmatpush1.msra.mxu0 0.0
      %2087 = vmatprep.subr.mxu0 0.0
      %2088 = vmatpush1.msra.mxu0 0.0
      %2089 = vmatprep.subr.mxu0 0.0
      %2090 = vmatpush1.msra.mxu0 0.0
      %2091 = vmatprep.subr.mxu0 0.0
      %2092 = vmatpush1.msra.mxu0 0.0
      %2093 = vmatprep.subr.mxu0 0.0
      %2094 = vmatpush1.msra.mxu0 0.0
      %2095 = vmatprep.subr.mxu0 0.0
      %2096 = vmatpush1.msra.mxu0 0.0
      %2097 = vmatprep.subr.mxu0 0.0
      %2098 = vmatpush1.msra.mxu0 0.0
      %2099 = vmatprep.subr.mxu0 0.0
      %2100 = vmatpush1.msra.mxu0 0.0
      %2101 = vmatprep.subr.mxu0 0.0
      %2102 = vmatpush1.msra.mxu0 0.0
      %2103 = vmatprep.subr.mxu0 0.0
      %2104 = vmatpush1.msra.mxu0 0.0
      %2105 = vmatprep.subr.mxu0 0.0
      %2106 = vmatpush1.msra.mxu0 %v2073
      %2107 = vmatprep.subr.mxu0 0.0
      %2108 = vmatpush2.msra.mxu0 0.0
      %2109 = vmatprep.subr.mxu0 0.0
      %2110 = vmatpush2.msra.mxu0 0.0
      %2111 = vmatprep.subr.mxu0 0.0
      %2112 = vmatpush2.msra.mxu0 0.0
      %2113 = vmatprep.subr.mxu0 0.0
      %2114 = vmatpush2.msra.mxu0 0.0
      %2115 = vmatprep.subr.mxu0 0.0
      %2116 = vmatpush2.msra.mxu0 0.0
      %2117 = vmatprep.subr.mxu0 0.0
      %2118 = vmatpush2.msra.mxu0 0.0
      %2119 = vmatprep.subr.mxu0 0.0
      %2120 = vmatpush2.msra.mxu0 0.0
      %2121 = vmatprep.subr.mxu0 0.0
      %2122 = vmatpush2.msra.mxu0 0.0
      %2123 = vmatprep.subr.mxu0 0.0
      %2124 = vmatpush2.msra.mxu0 0.0
      %2125 = vmatprep.subr.mxu0 0.0
      %2126 = vmatpush2.msra.mxu0 0.0
      %2127 = vmatprep.subr.mxu0 0.0
      %2128 = vmatpush2.msra.mxu0 0.0
      %2129 = vmatprep.subr.mxu0 0.0
      %2130 = vmatpush2.msra.mxu0 0.0
      %2131 = vmatprep.subr.mxu0 0.0
      %2132 = vmatpush2.msra.mxu0 0.0
      %2133 = vmatprep.subr.mxu0 0.0
      %2134 = vmatpush2.msra.mxu0 0.0
      %2135 = vmatprep.subr.mxu0 0.0
      %2136 = vmatpush2.msra.mxu0 0.0
      %2137 = vmatprep.subr.mxu0 0.0
      %2138 = vmatpush2.msra.mxu0 0.0
      %2139 = vmatprep.mubr.f32.mxu0 0.0
      %2140 = vmatmul.mubr.f32.gmra.mxu0 %v1977
      %v2141 = vpop.f32.mrf.mxu0
      %v2142 = vadd.f32 0.0, %v2141
      %v2143 = vpop.f32.mrf.mxu0
      %2144 = vmatprep.mubr.f32.mxu0 0.0
      %2145 = vmatmul.mubr.f32.gmra.mxu0 %v1980
      %v2146 = vpop.f32.mrf.mxu0
      %v2147 = vadd.f32 0.0, %v2146
      %v2148 = vpop.f32.mrf.mxu0
      %2149 = vmatprep.mubr.f32.mxu0 0.0
      %2150 = vmatmul.mubr.f32.gmra.mxu0 %v1983
      %v2151 = vpop.f32.mrf.mxu0
      %v2152 = vadd.f32 0.0, %v2151
      %v2153 = vpop.f32.mrf.mxu0
      %2154 = vmatprep.mubr.f32.mxu0 0.0
      %2155 = vmatmul.mubr.f32.gmra.mxu0 %v1986
      %v2156 = vpop.f32.mrf.mxu0
      %v2157 = vadd.f32 0.0, %v2156
      %v2158 = vpop.f32.mrf.mxu0
      %2159 = vmatprep.mubr.f32.mxu0 0.0
      %2160 = vmatmul.mubr.f32.gmra.mxu0 %v1989
      %v2161 = vpop.f32.mrf.mxu0
      %v2162 = vadd.f32 0.0, %v2161
      %v2163 = vpop.f32.mrf.mxu0
      %2164 = vmatprep.mubr.f32.mxu0 0.0
      %2165 = vmatmul.mubr.f32.gmra.mxu0 %v1992
      %v2166 = vpop.f32.mrf.mxu0
      %v2167 = vadd.f32 0.0, %v2166
      %v2168 = vpop.f32.mrf.mxu0
      %2169 = vmatprep.mubr.f32.mxu0 0.0
      %2170 = vmatmul.mubr.f32.gmra.mxu0 %v1995
      %v2171 = vpop.f32.mrf.mxu0
      %v2172 = vadd.f32 0.0, %v2171
      %v2173 = vpop.f32.mrf.mxu0
      %2174 = vmatprep.mubr.f32.mxu0 0.0
      %2175 = vmatmul.mubr.f32.gmra.mxu0 %v1998
      %v2176 = vpop.f32.mrf.mxu0
      %v2177 = vadd.f32 0.0, %v2176
      %v2178 = vpop.f32.mrf.mxu0
      %2179 = vmatprep.mubr.f32.mxu0 0.0
      %2180 = vmatmul.mubr.f32.gmra.mxu0 %v2001
      %v2181 = vpop.f32.mrf.mxu0
      %v2182 = vadd.f32 0.0, %v2181
      %v2183 = vpop.f32.mrf.mxu0
      %2184 = vmatprep.mubr.f32.mxu0 0.0
      %2185 = vmatmul.mubr.f32.gmra.mxu0 %v2004
      %v2186 = vpop.f32.mrf.mxu0
      %v2187 = vadd.f32 0.0, %v2186
      %v2188 = vpop.f32.mrf.mxu0
      %2189 = vmatprep.mubr.f32.mxu0 0.0
      %2190 = vmatmul.mubr.f32.gmra.mxu0 %v2007
      %v2191 = vpop.f32.mrf.mxu0
      %v2192 = vadd.f32 0.0, %v2191
      %v2193 = vpop.f32.mrf.mxu0
      %2194 = vmatprep.mubr.f32.mxu0 0.0
      %2195 = vmatmul.mubr.f32.gmra.mxu0 %v2010
      %v2196 = vpop.f32.mrf.mxu0
      %v2197 = vadd.f32 0.0, %v2196
      %v2198 = vpop.f32.mrf.mxu0
      %2199 = vmatprep.mubr.f32.mxu0 0.0
      %2200 = vmatmul.mubr.f32.gmra.mxu0 %v2013
      %v2201 = vpop.f32.mrf.mxu0
      %v2202 = vadd.f32 0.0, %v2201
      %v2203 = vpop.f32.mrf.mxu0
      %2204 = vmatprep.mubr.f32.mxu0 0.0
      %2205 = vmatmul.mubr.f32.gmra.mxu0 %v2016
      %v2206 = vpop.f32.mrf.mxu0
      %v2207 = vadd.f32 0.0, %v2206
      %v2208 = vpop.f32.mrf.mxu0
      %2209 = vmatprep.mubr.f32.mxu0 0.0
      %2210 = vmatmul.mubr.f32.gmra.mxu0 %v2019
      %v2211 = vpop.f32.mrf.mxu0
      %v2212 = vadd.f32 0.0, %v2211
      %v2213 = vpop.f32.mrf.mxu0
      %2214 = vmatprep.mubr.f32.mxu0 0.0
      %2215 = vmatmul.mubr.f32.gmra.mxu0 %v2022
      %v2216 = vpop.f32.mrf.mxu0
      %v2217 = vadd.f32 0.0, %v2216
      %v2218 = vpop.f32.mrf.mxu0
      %2219 = vmatprep.mubr.f32.mxu0 0.0
      %2220 = vmatmul.mubr.f32.gmra.mxu0 %v2025
      %v2221 = vpop.f32.mrf.mxu0
      %v2222 = vadd.f32 0.0, %v2221
      %v2223 = vpop.f32.mrf.mxu0
      %2224 = vmatprep.mubr.f32.mxu0 0.0
      %2225 = vmatmul.mubr.f32.gmra.mxu0 %v2028
      %v2226 = vpop.f32.mrf.mxu0
      %v2227 = vadd.f32 0.0, %v2226
      %v2228 = vpop.f32.mrf.mxu0
      %2229 = vmatprep.mubr.f32.mxu0 0.0
      %2230 = vmatmul.mubr.f32.gmra.mxu0 %v2031
      %v2231 = vpop.f32.mrf.mxu0
      %v2232 = vadd.f32 0.0, %v2231
      %v2233 = vpop.f32.mrf.mxu0
      %2234 = vmatprep.mubr.f32.mxu0 0.0
      %2235 = vmatmul.mubr.f32.gmra.mxu0 %v2034
      %v2236 = vpop.f32.mrf.mxu0
      %v2237 = vadd.f32 0.0, %v2236
      %v2238 = vpop.f32.mrf.mxu0
      %2239 = vmatprep.mubr.f32.mxu0 0.0
      %2240 = vmatmul.mubr.f32.gmra.mxu0 %v2037
      %v2241 = vpop.f32.mrf.mxu0
      %v2242 = vadd.f32 0.0, %v2241
      %v2243 = vpop.f32.mrf.mxu0
      %2244 = vmatprep.mubr.f32.mxu0 0.0
      %2245 = vmatmul.mubr.f32.gmra.mxu0 %v2040
      %v2246 = vpop.f32.mrf.mxu0
      %v2247 = vadd.f32 0.0, %v2246
      %v2248 = vpop.f32.mrf.mxu0
      %2249 = vmatprep.mubr.f32.mxu0 0.0
      %2250 = vmatmul.mubr.f32.gmra.mxu0 %v2043
      %v2251 = vpop.f32.mrf.mxu0
      %v2252 = vadd.f32 0.0, %v2251
      %v2253 = vpop.f32.mrf.mxu0
      %2254 = vmatprep.mubr.f32.mxu0 0.0
      %2255 = vmatmul.mubr.f32.gmra.mxu0 %v2046
      %v2256 = vpop.f32.mrf.mxu0
      %v2257 = vadd.f32 0.0, %v2256
      %v2258 = vpop.f32.mrf.mxu0
      %2259 = vmatprep.mubr.f32.mxu0 0.0
      %2260 = vmatmul.mubr.f32.gmra.mxu0 %v2049
      %v2261 = vpop.f32.mrf.mxu0
      %v2262 = vadd.f32 0.0, %v2261
      %v2263 = vpop.f32.mrf.mxu0
      %2264 = vmatprep.mubr.f32.mxu0 0.0
      %2265 = vmatmul.mubr.f32.gmra.mxu0 %v2052
      %v2266 = vpop.f32.mrf.mxu0
      %v2267 = vadd.f32 0.0, %v2266
      %v2268 = vpop.f32.mrf.mxu0
      %2269 = vmatprep.mubr.f32.mxu0 0.0
      %2270 = vmatmul.mubr.f32.gmra.mxu0 %v2055
      %v2271 = vpop.f32.mrf.mxu0
      %v2272 = vadd.f32 0.0, %v2271
      %v2273 = vpop.f32.mrf.mxu0
      %2274 = vmatprep.mubr.f32.mxu0 0.0
      %2275 = vmatmul.mubr.f32.gmra.mxu0 %v2058
      %v2276 = vpop.f32.mrf.mxu0
      %v2277 = vadd.f32 0.0, %v2276
      %v2278 = vpop.f32.mrf.mxu0
      %2279 = vmatprep.mubr.f32.mxu0 0.0
      %2280 = vmatmul.mubr.f32.gmra.mxu0 %v2061
      %v2281 = vpop.f32.mrf.mxu0
      %v2282 = vadd.f32 0.0, %v2281
      %v2283 = vpop.f32.mrf.mxu0
      %2284 = vmatprep.mubr.f32.mxu0 0.0
      %2285 = vmatmul.mubr.f32.gmra.mxu0 %v2064
      %v2286 = vpop.f32.mrf.mxu0
      %v2287 = vadd.f32 0.0, %v2286
      %v2288 = vpop.f32.mrf.mxu0
      %2289 = vmatprep.mubr.f32.mxu0 0.0
      %2290 = vmatmul.mubr.f32.gmra.mxu0 %v2067
      %v2291 = vpop.f32.mrf.mxu0
      %v2292 = vadd.f32 0.0, %v2291
      %v2293 = vpop.f32.mrf.mxu0
      %2294 = vmatprep.mubr.f32.mxu0 0.0
      %2295 = vmatmul.mubr.f32.gmra.mxu0 %v2070
      %v2296 = vpop.f32.mrf.mxu0
      %v2297 = vadd.f32 0.0, %v2296
      %v2298 = vpop.f32.mrf.mxu0
      %2299 = vdwg.mxu0
      %v2300 = vadd.f32 %v1815, %v2142
      %v2301 = vadd.f32 %v1816, %v2147
      %v2302 = vadd.f32 %v1817, %v2152
      %v2303 = vadd.f32 %v1818, %v2157
      %v2304 = vadd.f32 %v1819, %v2162
      %v2305 = vadd.f32 %v1820, %v2167
      %v2306 = vadd.f32 %v1821, %v2172
      %v2307 = vadd.f32 %v1822, %v2177
      %v2308 = vadd.f32 %v1823, %v2182
      %v2309 = vadd.f32 %v1824, %v2187
      %v2310 = vadd.f32 %v1825, %v2192
      %v2311 = vadd.f32 %v1826, %v2197
      %v2312 = vadd.f32 %v1827, %v2202
      %v2313 = vadd.f32 %v1828, %v2207
      %v2314 = vadd.f32 %v1829, %v2212
      %v2315 = vadd.f32 %v1830, %v2217
      %v2316 = vadd.f32 %v1831, %v2222
      %v2317 = vadd.f32 %v1832, %v2227
      %v2318 = vadd.f32 %v1833, %v2232
      %v2319 = vadd.f32 %v1834, %v2237
      %v2320 = vadd.f32 %v1835, %v2242
      %v2321 = vadd.f32 %v1836, %v2247
      %v2322 = vadd.f32 %v1837, %v2252
      %v2323 = vadd.f32 %v1838, %v2257
      %v2324 = vadd.f32 %v1839, %v2262
      %v2325 = vadd.f32 %v1840, %v2267
      %v2326 = vadd.f32 %v1841, %v2272
      %v2327 = vadd.f32 %v1842, %v2277
      %v2328 = vadd.f32 %v1843, %v2282
      %v2329 = vadd.f32 %v1844, %v2287
      %v2330 = vadd.f32 %v1845, %v2292
      %v2331 = vadd.f32 %v1846, %v2297
      %v2332 = vmul.f32 %v276, %v411
      %v2333 = vmul.f32 %v277, %v411
      %v2334 = vmul.f32 %v278, %v411
      %v2335 = vmul.f32 %v279, %v411
      %v2336 = vmul.f32 %v280, %v411
      %v2337 = vmul.f32 %v281, %v411
      %v2338 = vmul.f32 %v282, %v411
      %v2339 = vmul.f32 %v283, %v411
      %v2340 = vmul.f32 %v284, %v411
      %v2341 = vmul.f32 %v285, %v411
      %v2342 = vmul.f32 %v286, %v411
      %v2343 = vmul.f32 %v287, %v411
      %v2344 = vmul.f32 %v288, %v411
      %v2345 = vmul.f32 %v289, %v411
      %v2346 = vmul.f32 %v290, %v411
      %v2347 = vmul.f32 %v291, %v411
      %v2348 = vmul.f32 %v292, %v411
      %v2349 = vmul.f32 %v293, %v411
      %v2350 = vmul.f32 %v294, %v411
      %v2351 = vmul.f32 %v295, %v411
      %v2352 = vmul.f32 %v296, %v411
      %v2353 = vmul.f32 %v297, %v411
      %v2354 = vmul.f32 %v298, %v411
      %v2355 = vmul.f32 %v299, %v411
      %v2356 = vmul.f32 %v300, %v411
      %v2357 = vmul.f32 %v301, %v411
      %v2358 = vmul.f32 %v302, %v411
      %v2359 = vmul.f32 %v303, %v411
      %v2360 = vmul.f32 %v304, %v411
      %v2361 = vmul.f32 %v305, %v411
      %v2362 = vmul.f32 %v306, %v411
      %v2363 = vmul.f32 %v307, %v411
      %v2364 = vsel %vm664, %v2332, 0.0
      %v2365 = vsel %vm665, %v2333, 0.0
      %v2366 = vsel %vm664, %v2334, 0.0
      %v2367 = vsel %vm665, %v2335, 0.0
      %v2368 = vsel %vm664, %v2336, 0.0
      %v2369 = vsel %vm665, %v2337, 0.0
      %v2370 = vsel %vm664, %v2338, 0.0
      %v2371 = vsel %vm665, %v2339, 0.0
      %v2372 = vsel %vm664, %v2340, 0.0
      %v2373 = vsel %vm665, %v2341, 0.0
      %v2374 = vsel %vm664, %v2342, 0.0
      %v2375 = vsel %vm665, %v2343, 0.0
      %v2376 = vsel %vm664, %v2344, 0.0
      %v2377 = vsel %vm665, %v2345, 0.0
      %v2378 = vsel %vm664, %v2346, 0.0
      %v2379 = vsel %vm665, %v2347, 0.0
      %v2380 = vsel %vm664, %v2348, 0.0
      %v2381 = vsel %vm665, %v2349, 0.0
      %v2382 = vsel %vm664, %v2350, 0.0
      %v2383 = vsel %vm665, %v2351, 0.0
      %v2384 = vsel %vm664, %v2352, 0.0
      %v2385 = vsel %vm665, %v2353, 0.0
      %v2386 = vsel %vm664, %v2354, 0.0
      %v2387 = vsel %vm665, %v2355, 0.0
      %v2388 = vsel %vm664, %v2356, 0.0
      %v2389 = vsel %vm665, %v2357, 0.0
      %v2390 = vsel %vm664, %v2358, 0.0
      %v2391 = vsel %vm665, %v2359, 0.0
      %v2392 = vsel %vm664, %v2360, 0.0
      %v2393 = vsel %vm665, %v2361, 0.0
      %v2394 = vsel %vm664, %v2362, 0.0
      %v2395 = vsel %vm665, %v2363, 0.0
      %v2396 = vld [vmem:[%s1 + $0x14] sm:$0x1f]
      %v2398 = vsel %vm204, %v2364, 0
      %v2401 = vsel %vm204, %v2365, 0
      %v2404 = vsel %vm204, %v2366, 0
      %v2407 = vsel %vm204, %v2367, 0
      %v2410 = vsel %vm204, %v2368, 0
      %v2413 = vsel %vm204, %v2369, 0
      %v2416 = vsel %vm204, %v2370, 0
      %v2419 = vsel %vm204, %v2371, 0
      %v2422 = vsel %vm204, %v2372, 0
      %v2425 = vsel %vm204, %v2373, 0
      %v2428 = vsel %vm204, %v2374, 0
      %v2431 = vsel %vm204, %v2375, 0
      %v2434 = vsel %vm204, %v2376, 0
      %v2437 = vsel %vm204, %v2377, 0
      %v2440 = vsel %vm204, %v2378, 0
      %v2443 = vsel %vm204, %v2379, 0
      %v2446 = vsel %vm204, %v2380, 0
      %v2449 = vsel %vm204, %v2381, 0
      %v2452 = vsel %vm204, %v2382, 0
      %v2455 = vsel %vm204, %v2383, 0
      %v2458 = vsel %vm204, %v2384, 0
      %v2461 = vsel %vm204, %v2385, 0
      %v2464 = vsel %vm204, %v2386, 0
      %v2467 = vsel %vm204, %v2387, 0
      %v2470 = vsel %vm204, %v2388, 0
      %v2473 = vsel %vm204, %v2389, 0
      %v2476 = vsel %vm204, %v2390, 0
      %v2479 = vsel %vm204, %v2391, 0
      %v2482 = vsel %vm204, %v2392, 0
      %v2485 = vsel %vm204, %v2393, 0
      %v2488 = vsel %vm204, %v2394, 0
      %v2491 = vsel %vm204, %v2395, 0
      %v2494 = vsel %vm795, %v2396, 0
      %2496 = vmatprep.subr.mxu0 0.0
      %2497 = vmatpush1.msra.mxu0 0.0
      %2498 = vmatprep.subr.mxu0 0.0
      %2499 = vmatpush1.msra.mxu0 0.0
      %2500 = vmatprep.subr.mxu0 0.0
      %2501 = vmatpush1.msra.mxu0 0.0
      %2502 = vmatprep.subr.mxu0 0.0
      %2503 = vmatpush1.msra.mxu0 0.0
      %2504 = vmatprep.subr.mxu0 0.0
      %2505 = vmatpush1.msra.mxu0 0.0
      %2506 = vmatprep.subr.mxu0 0.0
      %2507 = vmatpush1.msra.mxu0 0.0
      %2508 = vmatprep.subr.mxu0 0.0
      %2509 = vmatpush1.msra.mxu0 0.0
      %2510 = vmatprep.subr.mxu0 0.0
      %2511 = vmatpush1.msra.mxu0 0.0
      %2512 = vmatprep.subr.mxu0 0.0
      %2513 = vmatpush1.msra.mxu0 0.0
      %2514 = vmatprep.subr.mxu0 0.0
      %2515 = vmatpush1.msra.mxu0 0.0
      %2516 = vmatprep.subr.mxu0 0.0
      %2517 = vmatpush1.msra.mxu0 0.0
      %2518 = vmatprep.subr.mxu0 0.0
      %2519 = vmatpush1.msra.mxu0 0.0
      %2520 = vmatprep.subr.mxu0 0.0
      %2521 = vmatpush1.msra.mxu0 0.0
      %2522 = vmatprep.subr.mxu0 0.0
      %2523 = vmatpush1.msra.mxu0 0.0
      %2524 = vmatprep.subr.mxu0 0.0
      %2525 = vmatpush1.msra.mxu0 0.0
      %2526 = vmatprep.subr.mxu0 0.0
      %2527 = vmatpush1.msra.mxu0 %v2494
      %2528 = vmatprep.subr.mxu0 0.0
      %2529 = vmatpush2.msra.mxu0 0.0
      %2530 = vmatprep.subr.mxu0 0.0
      %2531 = vmatpush2.msra.mxu0 0.0
      %2532 = vmatprep.subr.mxu0 0.0
      %2533 = vmatpush2.msra.mxu0 0.0
      %2534 = vmatprep.subr.mxu0 0.0
      %2535 = vmatpush2.msra.mxu0 0.0
      %2536 = vmatprep.subr.mxu0 0.0
      %2537 = vmatpush2.msra.mxu0 0.0
      %2538 = vmatprep.subr.mxu0 0.0
      %2539 = vmatpush2.msra.mxu0 0.0
      %2540 = vmatprep.subr.mxu0 0.0
      %2541 = vmatpush2.msra.mxu0 0.0
      %2542 = vmatprep.subr.mxu0 0.0
      %2543 = vmatpush2.msra.mxu0 0.0
      %2544 = vmatprep.subr.mxu0 0.0
      %2545 = vmatpush2.msra.mxu0 0.0
      %2546 = vmatprep.subr.mxu0 0.0
      %2547 = vmatpush2.msra.mxu0 0.0
      %2548 = vmatprep.subr.mxu0 0.0
      %2549 = vmatpush2.msra.mxu0 0.0
      %2550 = vmatprep.subr.mxu0 0.0
      %2551 = vmatpush2.msra.mxu0 0.0
      %2552 = vmatprep.subr.mxu0 0.0
      %2553 = vmatpush2.msra.mxu0 0.0
      %2554 = vmatprep.subr.mxu0 0.0
      %2555 = vmatpush2.msra.mxu0 0.0
      %2556 = vmatprep.subr.mxu0 0.0
      %2557 = vmatpush2.msra.mxu0 0.0
      %2558 = vmatprep.subr.mxu0 0.0
      %2559 = vmatpush2.msra.mxu0 0.0
      %2560 = vmatprep.mubr.f32.mxu0 0.0
      %2561 = vmatmul.mubr.f32.gmra.mxu0 %v2398
      %v2562 = vpop.f32.mrf.mxu0
      %v2563 = vadd.f32 0.0, %v2562
      %v2564 = vpop.f32.mrf.mxu0
      %2565 = vmatprep.mubr.f32.mxu0 0.0
      %2566 = vmatmul.mubr.f32.gmra.mxu0 %v2401
      %v2567 = vpop.f32.mrf.mxu0
      %v2568 = vadd.f32 0.0, %v2567
      %v2569 = vpop.f32.mrf.mxu0
      %2570 = vmatprep.mubr.f32.mxu0 0.0
      %2571 = vmatmul.mubr.f32.gmra.mxu0 %v2404
      %v2572 = vpop.f32.mrf.mxu0
      %v2573 = vadd.f32 0.0, %v2572
      %v2574 = vpop.f32.mrf.mxu0
      %2575 = vmatprep.mubr.f32.mxu0 0.0
      %2576 = vmatmul.mubr.f32.gmra.mxu0 %v2407
      %v2577 = vpop.f32.mrf.mxu0
      %v2578 = vadd.f32 0.0, %v2577
      %v2579 = vpop.f32.mrf.mxu0
      %2580 = vmatprep.mubr.f32.mxu0 0.0
      %2581 = vmatmul.mubr.f32.gmra.mxu0 %v2410
      %v2582 = vpop.f32.mrf.mxu0
      %v2583 = vadd.f32 0.0, %v2582
      %v2584 = vpop.f32.mrf.mxu0
      %2585 = vmatprep.mubr.f32.mxu0 0.0
      %2586 = vmatmul.mubr.f32.gmra.mxu0 %v2413
      %v2587 = vpop.f32.mrf.mxu0
      %v2588 = vadd.f32 0.0, %v2587
      %v2589 = vpop.f32.mrf.mxu0
      %2590 = vmatprep.mubr.f32.mxu0 0.0
      %2591 = vmatmul.mubr.f32.gmra.mxu0 %v2416
      %v2592 = vpop.f32.mrf.mxu0
      %v2593 = vadd.f32 0.0, %v2592
      %v2594 = vpop.f32.mrf.mxu0
      %2595 = vmatprep.mubr.f32.mxu0 0.0
      %2596 = vmatmul.mubr.f32.gmra.mxu0 %v2419
      %v2597 = vpop.f32.mrf.mxu0
      %v2598 = vadd.f32 0.0, %v2597
      %v2599 = vpop.f32.mrf.mxu0
      %2600 = vmatprep.mubr.f32.mxu0 0.0
      %2601 = vmatmul.mubr.f32.gmra.mxu0 %v2422
      %v2602 = vpop.f32.mrf.mxu0
      %v2603 = vadd.f32 0.0, %v2602
      %v2604 = vpop.f32.mrf.mxu0
      %2605 = vmatprep.mubr.f32.mxu0 0.0
      %2606 = vmatmul.mubr.f32.gmra.mxu0 %v2425
      %v2607 = vpop.f32.mrf.mxu0
      %v2608 = vadd.f32 0.0, %v2607
      %v2609 = vpop.f32.mrf.mxu0
      %2610 = vmatprep.mubr.f32.mxu0 0.0
      %2611 = vmatmul.mubr.f32.gmra.mxu0 %v2428
      %v2612 = vpop.f32.mrf.mxu0
      %v2613 = vadd.f32 0.0, %v2612
      %v2614 = vpop.f32.mrf.mxu0
      %2615 = vmatprep.mubr.f32.mxu0 0.0
      %2616 = vmatmul.mubr.f32.gmra.mxu0 %v2431
      %v2617 = vpop.f32.mrf.mxu0
      %v2618 = vadd.f32 0.0, %v2617
      %v2619 = vpop.f32.mrf.mxu0
      %2620 = vmatprep.mubr.f32.mxu0 0.0
      %2621 = vmatmul.mubr.f32.gmra.mxu0 %v2434
      %v2622 = vpop.f32.mrf.mxu0
      %v2623 = vadd.f32 0.0, %v2622
      %v2624 = vpop.f32.mrf.mxu0
      %2625 = vmatprep.mubr.f32.mxu0 0.0
      %2626 = vmatmul.mubr.f32.gmra.mxu0 %v2437
      %v2627 = vpop.f32.mrf.mxu0
      %v2628 = vadd.f32 0.0, %v2627
      %v2629 = vpop.f32.mrf.mxu0
      %2630 = vmatprep.mubr.f32.mxu0 0.0
      %2631 = vmatmul.mubr.f32.gmra.mxu0 %v2440
      %v2632 = vpop.f32.mrf.mxu0
      %v2633 = vadd.f32 0.0, %v2632
      %v2634 = vpop.f32.mrf.mxu0
      %2635 = vmatprep.mubr.f32.mxu0 0.0
      %2636 = vmatmul.mubr.f32.gmra.mxu0 %v2443
      %v2637 = vpop.f32.mrf.mxu0
      %v2638 = vadd.f32 0.0, %v2637
      %v2639 = vpop.f32.mrf.mxu0
      %2640 = vmatprep.mubr.f32.mxu0 0.0
      %2641 = vmatmul.mubr.f32.gmra.mxu0 %v2446
      %v2642 = vpop.f32.mrf.mxu0
      %v2643 = vadd.f32 0.0, %v2642
      %v2644 = vpop.f32.mrf.mxu0
      %2645 = vmatprep.mubr.f32.mxu0 0.0
      %2646 = vmatmul.mubr.f32.gmra.mxu0 %v2449
      %v2647 = vpop.f32.mrf.mxu0
      %v2648 = vadd.f32 0.0, %v2647
      %v2649 = vpop.f32.mrf.mxu0
      %2650 = vmatprep.mubr.f32.mxu0 0.0
      %2651 = vmatmul.mubr.f32.gmra.mxu0 %v2452
      %v2652 = vpop.f32.mrf.mxu0
      %v2653 = vadd.f32 0.0, %v2652
      %v2654 = vpop.f32.mrf.mxu0
      %2655 = vmatprep.mubr.f32.mxu0 0.0
      %2656 = vmatmul.mubr.f32.gmra.mxu0 %v2455
      %v2657 = vpop.f32.mrf.mxu0
      %v2658 = vadd.f32 0.0, %v2657
      %v2659 = vpop.f32.mrf.mxu0
      %2660 = vmatprep.mubr.f32.mxu0 0.0
      %2661 = vmatmul.mubr.f32.gmra.mxu0 %v2458
      %v2662 = vpop.f32.mrf.mxu0
      %v2663 = vadd.f32 0.0, %v2662
      %v2664 = vpop.f32.mrf.mxu0
      %2665 = vmatprep.mubr.f32.mxu0 0.0
      %2666 = vmatmul.mubr.f32.gmra.mxu0 %v2461
      %v2667 = vpop.f32.mrf.mxu0
      %v2668 = vadd.f32 0.0, %v2667
      %v2669 = vpop.f32.mrf.mxu0
      %2670 = vmatprep.mubr.f32.mxu0 0.0
      %2671 = vmatmul.mubr.f32.gmra.mxu0 %v2464
      %v2672 = vpop.f32.mrf.mxu0
      %v2673 = vadd.f32 0.0, %v2672
      %v2674 = vpop.f32.mrf.mxu0
      %2675 = vmatprep.mubr.f32.mxu0 0.0
      %2676 = vmatmul.mubr.f32.gmra.mxu0 %v2467
      %v2677 = vpop.f32.mrf.mxu0
      %v2678 = vadd.f32 0.0, %v2677
      %v2679 = vpop.f32.mrf.mxu0
      %2680 = vmatprep.mubr.f32.mxu0 0.0
      %2681 = vmatmul.mubr.f32.gmra.mxu0 %v2470
      %v2682 = vpop.f32.mrf.mxu0
      %v2683 = vadd.f32 0.0, %v2682
      %v2684 = vpop.f32.mrf.mxu0
      %2685 = vmatprep.mubr.f32.mxu0 0.0
      %2686 = vmatmul.mubr.f32.gmra.mxu0 %v2473
      %v2687 = vpop.f32.mrf.mxu0
      %v2688 = vadd.f32 0.0, %v2687
      %v2689 = vpop.f32.mrf.mxu0
      %2690 = vmatprep.mubr.f32.mxu0 0.0
      %2691 = vmatmul.mubr.f32.gmra.mxu0 %v2476
      %v2692 = vpop.f32.mrf.mxu0
      %v2693 = vadd.f32 0.0, %v2692
      %v2694 = vpop.f32.mrf.mxu0
      %2695 = vmatprep.mubr.f32.mxu0 0.0
      %2696 = vmatmul.mubr.f32.gmra.mxu0 %v2479
      %v2697 = vpop.f32.mrf.mxu0
      %v2698 = vadd.f32 0.0, %v2697
      %v2699 = vpop.f32.mrf.mxu0
      %2700 = vmatprep.mubr.f32.mxu0 0.0
      %2701 = vmatmul.mubr.f32.gmra.mxu0 %v2482
      %v2702 = vpop.f32.mrf.mxu0
      %v2703 = vadd.f32 0.0, %v2702
      %v2704 = vpop.f32.mrf.mxu0
      %2705 = vmatprep.mubr.f32.mxu0 0.0
      %2706 = vmatmul.mubr.f32.gmra.mxu0 %v2485
      %v2707 = vpop.f32.mrf.mxu0
      %v2708 = vadd.f32 0.0, %v2707
      %v2709 = vpop.f32.mrf.mxu0
      %2710 = vmatprep.mubr.f32.mxu0 0.0
      %2711 = vmatmul.mubr.f32.gmra.mxu0 %v2488
      %v2712 = vpop.f32.mrf.mxu0
      %v2713 = vadd.f32 0.0, %v2712
      %v2714 = vpop.f32.mrf.mxu0
      %2715 = vmatprep.mubr.f32.mxu0 0.0
      %2716 = vmatmul.mubr.f32.gmra.mxu0 %v2491
      %v2717 = vpop.f32.mrf.mxu0
      %v2718 = vadd.f32 0.0, %v2717
      %v2719 = vpop.f32.mrf.mxu0
      %2720 = vdwg.mxu0
      %v2721 = vadd.f32 %v2300, %v2563
      %v2722 = vadd.f32 %v2301, %v2568
      %v2723 = vadd.f32 %v2302, %v2573
      %v2724 = vadd.f32 %v2303, %v2578
      %v2725 = vadd.f32 %v2304, %v2583
      %v2726 = vadd.f32 %v2305, %v2588
      %v2727 = vadd.f32 %v2306, %v2593
      %v2728 = vadd.f32 %v2307, %v2598
      %v2729 = vadd.f32 %v2308, %v2603
      %v2730 = vadd.f32 %v2309, %v2608
      %v2731 = vadd.f32 %v2310, %v2613
      %v2732 = vadd.f32 %v2311, %v2618
      %v2733 = vadd.f32 %v2312, %v2623
      %v2734 = vadd.f32 %v2313, %v2628
      %v2735 = vadd.f32 %v2314, %v2633
      %v2736 = vadd.f32 %v2315, %v2638
      %v2737 = vadd.f32 %v2316, %v2643
      %v2738 = vadd.f32 %v2317, %v2648
      %v2739 = vadd.f32 %v2318, %v2653
      %v2740 = vadd.f32 %v2319, %v2658
      %v2741 = vadd.f32 %v2320, %v2663
      %v2742 = vadd.f32 %v2321, %v2668
      %v2743 = vadd.f32 %v2322, %v2673
      %v2744 = vadd.f32 %v2323, %v2678
      %v2745 = vadd.f32 %v2324, %v2683
      %v2746 = vadd.f32 %v2325, %v2688
      %v2747 = vadd.f32 %v2326, %v2693
      %v2748 = vadd.f32 %v2327, %v2698
      %v2749 = vadd.f32 %v2328, %v2703
      %v2750 = vadd.f32 %v2329, %v2708
      %v2751 = vadd.f32 %v2330, %v2713
      %v2752 = vadd.f32 %v2331, %v2718
      %v2753 = vld [vmem:[%s171 + $0x2] sm:$0xff]
      %v2754 = vld [vmem:[%s171 + $0xa] sm:$0xff]
      %v2755 = vld [vmem:[%s171 + $0x1a] sm:$0xff]
      %v2756 = vld [vmem:[%s171 + $0x22] sm:$0xff]
      %v2757 = vld [vmem:[%s171 + $0x32] sm:$0xff]
      %v2758 = vld [vmem:[%s171 + $0x3a] sm:$0xff]
      %v2759 = vld [vmem:[%s171 + $0x4a] sm:$0xff]
      %v2760 = vld [vmem:[%s171 + $0x52] sm:$0xff]
      %v2761 = vld [vmem:[%s171 + $0x62] sm:$0xff]
      %v2762 = vld [vmem:[%s171 + $0x6a] sm:$0xff]
      %v2763 = vld [vmem:[%s171 + $0x7a] sm:$0xff]
      %v2764 = vld [vmem:[%s171 + $0x82] sm:$0xff]
      %v2765 = vld [vmem:[%s171 + $0x92] sm:$0xff]
      %v2766 = vld [vmem:[%s171 + $0x9a] sm:$0xff]
      %v2767 = vld [vmem:[%s171 + $0xaa] sm:$0xff]
      %v2768 = vld [vmem:[%s171 + $0xb2] sm:$0xff]
      %v2769 = vld [vmem:[%s171 + $0xc2] sm:$0xff]
      %v2770 = vld [vmem:[%s171 + $0xca] sm:$0xff]
      %v2771 = vld [vmem:[%s171 + $0xda] sm:$0xff]
      %v2772 = vld [vmem:[%s171 + $0xe2] sm:$0xff]
      %v2773 = vld [vmem:[%s171 + $0xf2] sm:$0xff]
      %v2774 = vld [vmem:[%s171 + $0xfa] sm:$0xff]
      %v2775 = vld [vmem:[%s171 + $0x10a] sm:$0xff]
      %v2776 = vld [vmem:[%s171 + $0x112] sm:$0xff]
      %v2777 = vld [vmem:[%s171 + $0x122] sm:$0xff]
      %v2778 = vld [vmem:[%s171 + $0x12a] sm:$0xff]
      %v2779 = vld [vmem:[%s171 + $0x13a] sm:$0xff]
      %v2780 = vld [vmem:[%s171 + $0x142] sm:$0xff]
      %v2781 = vld [vmem:[%s171 + $0x152] sm:$0xff]
      %v2782 = vld [vmem:[%s171 + $0x15a] sm:$0xff]
      %v2783 = vld [vmem:[%s171 + $0x16a] sm:$0xff]
      %v2784 = vld [vmem:[%s171 + $0x172] sm:$0xff]
      %v2785 = vsub.f32 %v2753, %v275
      %v2786 = vsub.f32 %v2754, %v275
      %v2787 = vsub.f32 %v2755, %v275
      %v2788 = vsub.f32 %v2756, %v275
      %v2789 = vsub.f32 %v2757, %v275
      %v2790 = vsub.f32 %v2758, %v275
      %v2791 = vsub.f32 %v2759, %v275
      %v2792 = vsub.f32 %v2760, %v275
      %v2793 = vsub.f32 %v2761, %v275
      %v2794 = vsub.f32 %v2762, %v275
      %v2795 = vsub.f32 %v2763, %v275
      %v2796 = vsub.f32 %v2764, %v275
      %v2797 = vsub.f32 %v2765, %v275
      %v2798 = vsub.f32 %v2766, %v275
      %v2799 = vsub.f32 %v2767, %v275
      %v2800 = vsub.f32 %v2768, %v275
      %v2801 = vsub.f32 %v2769, %v275
      %v2802 = vsub.f32 %v2770, %v275
      %v2803 = vsub.f32 %v2771, %v275
      %v2804 = vsub.f32 %v2772, %v275
      %v2805 = vsub.f32 %v2773, %v275
      %v2806 = vsub.f32 %v2774, %v275
      %v2807 = vsub.f32 %v2775, %v275
      %v2808 = vsub.f32 %v2776, %v275
      %v2809 = vsub.f32 %v2777, %v275
      %v2810 = vsub.f32 %v2778, %v275
      %v2811 = vsub.f32 %v2779, %v275
      %v2812 = vsub.f32 %v2780, %v275
      %v2813 = vsub.f32 %v2781, %v275
      %v2814 = vsub.f32 %v2782, %v275
      %v2815 = vsub.f32 %v2783, %v275
      %v2816 = vsub.f32 %v2784, %v275
      %v2817 = vmul.f32 %v2785, %v411
      %v2818 = vmul.f32 %v2786, %v411
      %v2819 = vmul.f32 %v2787, %v411
      %v2820 = vmul.f32 %v2788, %v411
      %v2821 = vmul.f32 %v2789, %v411
      %v2822 = vmul.f32 %v2790, %v411
      %v2823 = vmul.f32 %v2791, %v411
      %v2824 = vmul.f32 %v2792, %v411
      %v2825 = vmul.f32 %v2793, %v411
      %v2826 = vmul.f32 %v2794, %v411
      %v2827 = vmul.f32 %v2795, %v411
      %v2828 = vmul.f32 %v2796, %v411
      %v2829 = vmul.f32 %v2797, %v411
      %v2830 = vmul.f32 %v2798, %v411
      %v2831 = vmul.f32 %v2799, %v411
      %v2832 = vmul.f32 %v2800, %v411
      %v2833 = vmul.f32 %v2801, %v411
      %v2834 = vmul.f32 %v2802, %v411
      %v2835 = vmul.f32 %v2803, %v411
      %v2836 = vmul.f32 %v2804, %v411
      %v2837 = vmul.f32 %v2805, %v411
      %v2838 = vmul.f32 %v2806, %v411
      %v2839 = vmul.f32 %v2807, %v411
      %v2840 = vmul.f32 %v2808, %v411
      %v2841 = vmul.f32 %v2809, %v411
      %v2842 = vmul.f32 %v2810, %v411
      %v2843 = vmul.f32 %v2811, %v411
      %v2844 = vmul.f32 %v2812, %v411
      %v2845 = vmul.f32 %v2813, %v411
      %v2846 = vmul.f32 %v2814, %v411
      %v2847 = vmul.f32 %v2815, %v411
      %v2848 = vmul.f32 %v2816, %v411
      %v2849 = vsel %vm1456, %v2817, 0.0
      %v2850 = vsel %vm1457, %v2818, 0.0
      %v2851 = vsel %vm1456, %v2819, 0.0
      %v2852 = vsel %vm1457, %v2820, 0.0
      %v2853 = vsel %vm1456, %v2821, 0.0
      %v2854 = vsel %vm1457, %v2822, 0.0
      %v2855 = vsel %vm1456, %v2823, 0.0
      %v2856 = vsel %vm1457, %v2824, 0.0
      %v2857 = vsel %vm1456, %v2825, 0.0
      %v2858 = vsel %vm1457, %v2826, 0.0
      %v2859 = vsel %vm1456, %v2827, 0.0
      %v2860 = vsel %vm1457, %v2828, 0.0
      %v2861 = vsel %vm1456, %v2829, 0.0
      %v2862 = vsel %vm1457, %v2830, 0.0
      %v2863 = vsel %vm1456, %v2831, 0.0
      %v2864 = vsel %vm1457, %v2832, 0.0
      %v2865 = vsel %vm1456, %v2833, 0.0
      %v2866 = vsel %vm1457, %v2834, 0.0
      %v2867 = vsel %vm1456, %v2835, 0.0
      %v2868 = vsel %vm1457, %v2836, 0.0
      %v2869 = vsel %vm1456, %v2837, 0.0
      %v2870 = vsel %vm1457, %v2838, 0.0
      %v2871 = vsel %vm1456, %v2839, 0.0
      %v2872 = vsel %vm1457, %v2840, 0.0
      %v2873 = vsel %vm1456, %v2841, 0.0
      %v2874 = vsel %vm1457, %v2842, 0.0
      %v2875 = vsel %vm1456, %v2843, 0.0
      %v2876 = vsel %vm1457, %v2844, 0.0
      %v2877 = vsel %vm1456, %v2845, 0.0
      %v2878 = vsel %vm1457, %v2846, 0.0
      %v2879 = vsel %vm1456, %v2847, 0.0
      %v2880 = vsel %vm1457, %v2848, 0.0
      %v2881 = vld [vmem:[%s1 + $0x19] sm:$0x1f]
      %v2883 = vsel %vm204, %v2849, 0
      %v2886 = vsel %vm204, %v2850, 0
      %v2889 = vsel %vm204, %v2851, 0
      %v2892 = vsel %vm204, %v2852, 0
      %v2895 = vsel %vm204, %v2853, 0
      %v2898 = vsel %vm204, %v2854, 0
      %v2901 = vsel %vm204, %v2855, 0
      %v2904 = vsel %vm204, %v2856, 0
      %v2907 = vsel %vm204, %v2857, 0
      %v2910 = vsel %vm204, %v2858, 0
      %v2913 = vsel %vm204, %v2859, 0
      %v2916 = vsel %vm204, %v2860, 0
      %v2919 = vsel %vm204, %v2861, 0
      %v2922 = vsel %vm204, %v2862, 0
      %v2925 = vsel %vm204, %v2863, 0
      %v2928 = vsel %vm204, %v2864, 0
      %v2931 = vsel %vm204, %v2865, 0
      %v2934 = vsel %vm204, %v2866, 0
      %v2937 = vsel %vm204, %v2867, 0
      %v2940 = vsel %vm204, %v2868, 0
      %v2943 = vsel %vm204, %v2869, 0
      %v2946 = vsel %vm204, %v2870, 0
      %v2949 = vsel %vm204, %v2871, 0
      %v2952 = vsel %vm204, %v2872, 0
      %v2955 = vsel %vm204, %v2873, 0
      %v2958 = vsel %vm204, %v2874, 0
      %v2961 = vsel %vm204, %v2875, 0
      %v2964 = vsel %vm204, %v2876, 0
      %v2967 = vsel %vm204, %v2877, 0
      %v2970 = vsel %vm204, %v2878, 0
      %v2973 = vsel %vm204, %v2879, 0
      %v2976 = vsel %vm204, %v2880, 0
      %v2979 = vsel %vm795, %v2881, 0
      %2981 = vmatprep.subr.mxu0 0.0
      %2982 = vmatpush1.msra.mxu0 0.0
      %2983 = vmatprep.subr.mxu0 0.0
      %2984 = vmatpush1.msra.mxu0 0.0
      %2985 = vmatprep.subr.mxu0 0.0
      %2986 = vmatpush1.msra.mxu0 0.0
      %2987 = vmatprep.subr.mxu0 0.0
      %2988 = vmatpush1.msra.mxu0 0.0
      %2989 = vmatprep.subr.mxu0 0.0
      %2990 = vmatpush1.msra.mxu0 0.0
      %2991 = vmatprep.subr.mxu0 0.0
      %2992 = vmatpush1.msra.mxu0 0.0
      %2993 = vmatprep.subr.mxu0 0.0
      %2994 = vmatpush1.msra.mxu0 0.0
      %2995 = vmatprep.subr.mxu0 0.0
      %2996 = vmatpush1.msra.mxu0 0.0
      %2997 = vmatprep.subr.mxu0 0.0
      %2998 = vmatpush1.msra.mxu0 0.0
      %2999 = vmatprep.subr.mxu0 0.0
      %3000 = vmatpush1.msra.mxu0 0.0
      %3001 = vmatprep.subr.mxu0 0.0
      %3002 = vmatpush1.msra.mxu0 0.0
      %3003 = vmatprep.subr.mxu0 0.0
      %3004 = vmatpush1.msra.mxu0 0.0
      %3005 = vmatprep.subr.mxu0 0.0
      %3006 = vmatpush1.msra.mxu0 0.0
      %3007 = vmatprep.subr.mxu0 0.0
      %3008 = vmatpush1.msra.mxu0 0.0
      %3009 = vmatprep.subr.mxu0 0.0
      %3010 = vmatpush1.msra.mxu0 0.0
      %3011 = vmatprep.subr.mxu0 0.0
      %3012 = vmatpush1.msra.mxu0 %v2979
      %3013 = vmatprep.subr.mxu0 0.0
      %3014 = vmatpush2.msra.mxu0 0.0
      %3015 = vmatprep.subr.mxu0 0.0
      %3016 = vmatpush2.msra.mxu0 0.0
      %3017 = vmatprep.subr.mxu0 0.0
      %3018 = vmatpush2.msra.mxu0 0.0
      %3019 = vmatprep.subr.mxu0 0.0
      %3020 = vmatpush2.msra.mxu0 0.0
      %3021 = vmatprep.subr.mxu0 0.0
      %3022 = vmatpush2.msra.mxu0 0.0
      %3023 = vmatprep.subr.mxu0 0.0
      %3024 = vmatpush2.msra.mxu0 0.0
      %3025 = vmatprep.subr.mxu0 0.0
      %3026 = vmatpush2.msra.mxu0 0.0
      %3027 = vmatprep.subr.mxu0 0.0
      %3028 = vmatpush2.msra.mxu0 0.0
      %3029 = vmatprep.subr.mxu0 0.0
      %3030 = vmatpush2.msra.mxu0 0.0
      %3031 = vmatprep.subr.mxu0 0.0
      %3032 = vmatpush2.msra.mxu0 0.0
      %3033 = vmatprep.subr.mxu0 0.0
      %3034 = vmatpush2.msra.mxu0 0.0
      %3035 = vmatprep.subr.mxu0 0.0
      %3036 = vmatpush2.msra.mxu0 0.0
      %3037 = vmatprep.subr.mxu0 0.0
      %3038 = vmatpush2.msra.mxu0 0.0
      %3039 = vmatprep.subr.mxu0 0.0
      %3040 = vmatpush2.msra.mxu0 0.0
      %3041 = vmatprep.subr.mxu0 0.0
      %3042 = vmatpush2.msra.mxu0 0.0
      %3043 = vmatprep.subr.mxu0 0.0
      %3044 = vmatpush2.msra.mxu0 0.0
      %3045 = vmatprep.mubr.f32.mxu0 0.0
      %3046 = vmatmul.mubr.f32.gmra.mxu0 %v2883
      %v3047 = vpop.f32.mrf.mxu0
      %v3048 = vadd.f32 0.0, %v3047
      %v3049 = vpop.f32.mrf.mxu0
      %3050 = vmatprep.mubr.f32.mxu0 0.0
      %3051 = vmatmul.mubr.f32.gmra.mxu0 %v2886
      %v3052 = vpop.f32.mrf.mxu0
      %v3053 = vadd.f32 0.0, %v3052
      %v3054 = vpop.f32.mrf.mxu0
      %3055 = vmatprep.mubr.f32.mxu0 0.0
      %3056 = vmatmul.mubr.f32.gmra.mxu0 %v2889
      %v3057 = vpop.f32.mrf.mxu0
      %v3058 = vadd.f32 0.0, %v3057
      %v3059 = vpop.f32.mrf.mxu0
      %3060 = vmatprep.mubr.f32.mxu0 0.0
      %3061 = vmatmul.mubr.f32.gmra.mxu0 %v2892
      %v3062 = vpop.f32.mrf.mxu0
      %v3063 = vadd.f32 0.0, %v3062
      %v3064 = vpop.f32.mrf.mxu0
      %3065 = vmatprep.mubr.f32.mxu0 0.0
      %3066 = vmatmul.mubr.f32.gmra.mxu0 %v2895
      %v3067 = vpop.f32.mrf.mxu0
      %v3068 = vadd.f32 0.0, %v3067
      %v3069 = vpop.f32.mrf.mxu0
      %3070 = vmatprep.mubr.f32.mxu0 0.0
      %3071 = vmatmul.mubr.f32.gmra.mxu0 %v2898
      %v3072 = vpop.f32.mrf.mxu0
      %v3073 = vadd.f32 0.0, %v3072
      %v3074 = vpop.f32.mrf.mxu0
      %3075 = vmatprep.mubr.f32.mxu0 0.0
      %3076 = vmatmul.mubr.f32.gmra.mxu0 %v2901
      %v3077 = vpop.f32.mrf.mxu0
      %v3078 = vadd.f32 0.0, %v3077
      %v3079 = vpop.f32.mrf.mxu0
      %3080 = vmatprep.mubr.f32.mxu0 0.0
      %3081 = vmatmul.mubr.f32.gmra.mxu0 %v2904
      %v3082 = vpop.f32.mrf.mxu0
      %v3083 = vadd.f32 0.0, %v3082
      %v3084 = vpop.f32.mrf.mxu0
      %3085 = vmatprep.mubr.f32.mxu0 0.0
      %3086 = vmatmul.mubr.f32.gmra.mxu0 %v2907
      %v3087 = vpop.f32.mrf.mxu0
      %v3088 = vadd.f32 0.0, %v3087
      %v3089 = vpop.f32.mrf.mxu0
      %3090 = vmatprep.mubr.f32.mxu0 0.0
      %3091 = vmatmul.mubr.f32.gmra.mxu0 %v2910
      %v3092 = vpop.f32.mrf.mxu0
      %v3093 = vadd.f32 0.0, %v3092
      %v3094 = vpop.f32.mrf.mxu0
      %3095 = vmatprep.mubr.f32.mxu0 0.0
      %3096 = vmatmul.mubr.f32.gmra.mxu0 %v2913
      %v3097 = vpop.f32.mrf.mxu0
      %v3098 = vadd.f32 0.0, %v3097
      %v3099 = vpop.f32.mrf.mxu0
      %3100 = vmatprep.mubr.f32.mxu0 0.0
      %3101 = vmatmul.mubr.f32.gmra.mxu0 %v2916
      %v3102 = vpop.f32.mrf.mxu0
      %v3103 = vadd.f32 0.0, %v3102
      %v3104 = vpop.f32.mrf.mxu0
      %3105 = vmatprep.mubr.f32.mxu0 0.0
      %3106 = vmatmul.mubr.f32.gmra.mxu0 %v2919
      %v3107 = vpop.f32.mrf.mxu0
      %v3108 = vadd.f32 0.0, %v3107
      %v3109 = vpop.f32.mrf.mxu0
      %3110 = vmatprep.mubr.f32.mxu0 0.0
      %3111 = vmatmul.mubr.f32.gmra.mxu0 %v2922
      %v3112 = vpop.f32.mrf.mxu0
      %v3113 = vadd.f32 0.0, %v3112
      %v3114 = vpop.f32.mrf.mxu0
      %3115 = vmatprep.mubr.f32.mxu0 0.0
      %3116 = vmatmul.mubr.f32.gmra.mxu0 %v2925
      %v3117 = vpop.f32.mrf.mxu0
      %v3118 = vadd.f32 0.0, %v3117
      %v3119 = vpop.f32.mrf.mxu0
      %3120 = vmatprep.mubr.f32.mxu0 0.0
      %3121 = vmatmul.mubr.f32.gmra.mxu0 %v2928
      %v3122 = vpop.f32.mrf.mxu0
      %v3123 = vadd.f32 0.0, %v3122
      %v3124 = vpop.f32.mrf.mxu0
      %3125 = vmatprep.mubr.f32.mxu0 0.0
      %3126 = vmatmul.mubr.f32.gmra.mxu0 %v2931
      %v3127 = vpop.f32.mrf.mxu0
      %v3128 = vadd.f32 0.0, %v3127
      %v3129 = vpop.f32.mrf.mxu0
      %3130 = vmatprep.mubr.f32.mxu0 0.0
      %3131 = vmatmul.mubr.f32.gmra.mxu0 %v2934
      %v3132 = vpop.f32.mrf.mxu0
      %v3133 = vadd.f32 0.0, %v3132
      %v3134 = vpop.f32.mrf.mxu0
      %3135 = vmatprep.mubr.f32.mxu0 0.0
      %3136 = vmatmul.mubr.f32.gmra.mxu0 %v2937
      %v3137 = vpop.f32.mrf.mxu0
      %v3138 = vadd.f32 0.0, %v3137
      %v3139 = vpop.f32.mrf.mxu0
      %3140 = vmatprep.mubr.f32.mxu0 0.0
      %3141 = vmatmul.mubr.f32.gmra.mxu0 %v2940
      %v3142 = vpop.f32.mrf.mxu0
      %v3143 = vadd.f32 0.0, %v3142
      %v3144 = vpop.f32.mrf.mxu0
      %3145 = vmatprep.mubr.f32.mxu0 0.0
      %3146 = vmatmul.mubr.f32.gmra.mxu0 %v2943
      %v3147 = vpop.f32.mrf.mxu0
      %v3148 = vadd.f32 0.0, %v3147
      %v3149 = vpop.f32.mrf.mxu0
      %3150 = vmatprep.mubr.f32.mxu0 0.0
      %3151 = vmatmul.mubr.f32.gmra.mxu0 %v2946
      %v3152 = vpop.f32.mrf.mxu0
      %v3153 = vadd.f32 0.0, %v3152
      %v3154 = vpop.f32.mrf.mxu0
      %3155 = vmatprep.mubr.f32.mxu0 0.0
      %3156 = vmatmul.mubr.f32.gmra.mxu0 %v2949
      %v3157 = vpop.f32.mrf.mxu0
      %v3158 = vadd.f32 0.0, %v3157
      %v3159 = vpop.f32.mrf.mxu0
      %3160 = vmatprep.mubr.f32.mxu0 0.0
      %3161 = vmatmul.mubr.f32.gmra.mxu0 %v2952
      %v3162 = vpop.f32.mrf.mxu0
      %v3163 = vadd.f32 0.0, %v3162
      %v3164 = vpop.f32.mrf.mxu0
      %3165 = vmatprep.mubr.f32.mxu0 0.0
      %3166 = vmatmul.mubr.f32.gmra.mxu0 %v2955
      %v3167 = vpop.f32.mrf.mxu0
      %v3168 = vadd.f32 0.0, %v3167
      %v3169 = vpop.f32.mrf.mxu0
      %3170 = vmatprep.mubr.f32.mxu0 0.0
      %3171 = vmatmul.mubr.f32.gmra.mxu0 %v2958
      %v3172 = vpop.f32.mrf.mxu0
      %v3173 = vadd.f32 0.0, %v3172
      %v3174 = vpop.f32.mrf.mxu0
      %3175 = vmatprep.mubr.f32.mxu0 0.0
      %3176 = vmatmul.mubr.f32.gmra.mxu0 %v2961
      %v3177 = vpop.f32.mrf.mxu0
      %v3178 = vadd.f32 0.0, %v3177
      %v3179 = vpop.f32.mrf.mxu0
      %3180 = vmatprep.mubr.f32.mxu0 0.0
      %3181 = vmatmul.mubr.f32.gmra.mxu0 %v2964
      %v3182 = vpop.f32.mrf.mxu0
      %v3183 = vadd.f32 0.0, %v3182
      %v3184 = vpop.f32.mrf.mxu0
      %3185 = vmatprep.mubr.f32.mxu0 0.0
      %3186 = vmatmul.mubr.f32.gmra.mxu0 %v2967
      %v3187 = vpop.f32.mrf.mxu0
      %v3188 = vadd.f32 0.0, %v3187
      %v3189 = vpop.f32.mrf.mxu0
      %3190 = vmatprep.mubr.f32.mxu0 0.0
      %3191 = vmatmul.mubr.f32.gmra.mxu0 %v2970
      %v3192 = vpop.f32.mrf.mxu0
      %v3193 = vadd.f32 0.0, %v3192
      %v3194 = vpop.f32.mrf.mxu0
      %3195 = vmatprep.mubr.f32.mxu0 0.0
      %3196 = vmatmul.mubr.f32.gmra.mxu0 %v2973
      %v3197 = vpop.f32.mrf.mxu0
      %v3198 = vadd.f32 0.0, %v3197
      %v3199 = vpop.f32.mrf.mxu0
      %3200 = vmatprep.mubr.f32.mxu0 0.0
      %3201 = vmatmul.mubr.f32.gmra.mxu0 %v2976
      %v3202 = vpop.f32.mrf.mxu0
      %v3203 = vadd.f32 0.0, %v3202
      %v3204 = vpop.f32.mrf.mxu0
      %3205 = vdwg.mxu0
      %v3206 = vadd.f32 %v2721, %v3048
      %v3207 = vadd.f32 %v2722, %v3053
      %v3208 = vadd.f32 %v2723, %v3058
      %v3209 = vadd.f32 %v2724, %v3063
      %v3210 = vadd.f32 %v2725, %v3068
      %v3211 = vadd.f32 %v2726, %v3073
      %v3212 = vadd.f32 %v2727, %v3078
      %v3213 = vadd.f32 %v2728, %v3083
      %v3214 = vadd.f32 %v2729, %v3088
      %v3215 = vadd.f32 %v2730, %v3093
      %v3216 = vadd.f32 %v2731, %v3098
      %v3217 = vadd.f32 %v2732, %v3103
      %v3218 = vadd.f32 %v2733, %v3108
      %v3219 = vadd.f32 %v2734, %v3113
      %v3220 = vadd.f32 %v2735, %v3118
      %v3221 = vadd.f32 %v2736, %v3123
      %v3222 = vadd.f32 %v2737, %v3128
      %v3223 = vadd.f32 %v2738, %v3133
      %v3224 = vadd.f32 %v2739, %v3138
      %v3225 = vadd.f32 %v2740, %v3143
      %v3226 = vadd.f32 %v2741, %v3148
      %v3227 = vadd.f32 %v2742, %v3153
      %v3228 = vadd.f32 %v2743, %v3158
      %v3229 = vadd.f32 %v2744, %v3163
      %v3230 = vadd.f32 %v2745, %v3168
      %v3231 = vadd.f32 %v2746, %v3173
      %v3232 = vadd.f32 %v2747, %v3178
      %v3233 = vadd.f32 %v2748, %v3183
      %v3234 = vadd.f32 %v2749, %v3188
      %v3235 = vadd.f32 %v2750, %v3193
      %v3236 = vadd.f32 %v2751, %v3198
      %v3237 = vadd.f32 %v2752, %v3203
      %s3238 = scalar_lea.vmem %s165, 48
      %v3239 = vld [vmem:[%s3238] sm:$0xff]
      %v3240 = vld [vmem:[%s3238 + $0x8] sm:$0xff]
      %v3241 = vld [vmem:[%s3238 + $0x18] sm:$0xff]
      %v3242 = vld [vmem:[%s3238 + $0x20] sm:$0xff]
      %v3243 = vld [vmem:[%s3238 + $0x30] sm:$0xff]
      %v3244 = vld [vmem:[%s3238 + $0x38] sm:$0xff]
      %v3245 = vld [vmem:[%s3238 + $0x48] sm:$0xff]
      %v3246 = vld [vmem:[%s3238 + $0x50] sm:$0xff]
      %v3247 = vld [vmem:[%s3238 + $0x60] sm:$0xff]
      %v3248 = vld [vmem:[%s3238 + $0x68] sm:$0xff]
      %v3249 = vld [vmem:[%s3238 + $0x78] sm:$0xff]
      %v3250 = vld [vmem:[%s3238 + $0x80] sm:$0xff]
      %v3251 = vld [vmem:[%s3238 + $0x90] sm:$0xff]
      %v3252 = vld [vmem:[%s3238 + $0x98] sm:$0xff]
      %v3253 = vld [vmem:[%s3238 + $0xa8] sm:$0xff]
      %v3254 = vld [vmem:[%s3238 + $0xb0] sm:$0xff]
      %v3255 = vld [vmem:[%s3238 + $0xc0] sm:$0xff]
      %v3256 = vld [vmem:[%s3238 + $0xc8] sm:$0xff]
      %v3257 = vld [vmem:[%s3238 + $0xd8] sm:$0xff]
      %v3258 = vld [vmem:[%s3238 + $0xe0] sm:$0xff]
      %v3259 = vld [vmem:[%s3238 + $0xf0] sm:$0xff]
      %v3260 = vld [vmem:[%s3238 + $0xf8] sm:$0xff]
      %v3261 = vld [vmem:[%s3238 + $0x108] sm:$0xff]
      %v3262 = vld [vmem:[%s3238 + $0x110] sm:$0xff]
      %v3263 = vld [vmem:[%s3238 + $0x120] sm:$0xff]
      %v3264 = vld [vmem:[%s3238 + $0x128] sm:$0xff]
      %v3265 = vld [vmem:[%s3238 + $0x138] sm:$0xff]
      %v3266 = vld [vmem:[%s3238 + $0x140] sm:$0xff]
      %v3267 = vld [vmem:[%s3238 + $0x150] sm:$0xff]
      %v3268 = vld [vmem:[%s3238 + $0x158] sm:$0xff]
      %v3269 = vld [vmem:[%s3238 + $0x168] sm:$0xff]
      %v3270 = vld [vmem:[%s3238 + $0x170] sm:$0xff]
      %v3271 = vsub.f32 %v3239, %v275
      %v3272 = vsub.f32 %v3240, %v275
      %v3273 = vsub.f32 %v3241, %v275
      %v3274 = vsub.f32 %v3242, %v275
      %v3275 = vsub.f32 %v3243, %v275
      %v3276 = vsub.f32 %v3244, %v275
      %v3277 = vsub.f32 %v3245, %v275
      %v3278 = vsub.f32 %v3246, %v275
      %v3279 = vsub.f32 %v3247, %v275
      %v3280 = vsub.f32 %v3248, %v275
      %v3281 = vsub.f32 %v3249, %v275
      %v3282 = vsub.f32 %v3250, %v275
      %v3283 = vsub.f32 %v3251, %v275
      %v3284 = vsub.f32 %v3252, %v275
      %v3285 = vsub.f32 %v3253, %v275
      %v3286 = vsub.f32 %v3254, %v275
      %v3287 = vsub.f32 %v3255, %v275
      %v3288 = vsub.f32 %v3256, %v275
      %v3289 = vsub.f32 %v3257, %v275
      %v3290 = vsub.f32 %v3258, %v275
      %v3291 = vsub.f32 %v3259, %v275
      %v3292 = vsub.f32 %v3260, %v275
      %v3293 = vsub.f32 %v3261, %v275
      %v3294 = vsub.f32 %v3262, %v275
      %v3295 = vsub.f32 %v3263, %v275
      %v3296 = vsub.f32 %v3264, %v275
      %v3297 = vsub.f32 %v3265, %v275
      %v3298 = vsub.f32 %v3266, %v275
      %v3299 = vsub.f32 %v3267, %v275
      %v3300 = vsub.f32 %v3268, %v275
      %v3301 = vsub.f32 %v3269, %v275
      %v3302 = vsub.f32 %v3270, %v275
      %v3303 = vmul.f32 %v3271, %v411
      %v3304 = vmul.f32 %v3272, %v411
      %v3305 = vmul.f32 %v3273, %v411
      %v3306 = vmul.f32 %v3274, %v411
      %v3307 = vmul.f32 %v3275, %v411
      %v3308 = vmul.f32 %v3276, %v411
      %v3309 = vmul.f32 %v3277, %v411
      %v3310 = vmul.f32 %v3278, %v411
      %v3311 = vmul.f32 %v3279, %v411
      %v3312 = vmul.f32 %v3280, %v411
      %v3313 = vmul.f32 %v3281, %v411
      %v3314 = vmul.f32 %v3282, %v411
      %v3315 = vmul.f32 %v3283, %v411
      %v3316 = vmul.f32 %v3284, %v411
      %v3317 = vmul.f32 %v3285, %v411
      %v3318 = vmul.f32 %v3286, %v411
      %v3319 = vmul.f32 %v3287, %v411
      %v3320 = vmul.f32 %v3288, %v411
      %v3321 = vmul.f32 %v3289, %v411
      %v3322 = vmul.f32 %v3290, %v411
      %v3323 = vmul.f32 %v3291, %v411
      %v3324 = vmul.f32 %v3292, %v411
      %v3325 = vmul.f32 %v3293, %v411
      %v3326 = vmul.f32 %v3294, %v411
      %v3327 = vmul.f32 %v3295, %v411
      %v3328 = vmul.f32 %v3296, %v411
      %v3329 = vmul.f32 %v3297, %v411
      %v3330 = vmul.f32 %v3298, %v411
      %v3331 = vmul.f32 %v3299, %v411
      %v3332 = vmul.f32 %v3300, %v411
      %v3333 = vmul.f32 %v3301, %v411
      %v3334 = vmul.f32 %v3302, %v411
      %v3335 = vsel %vm521, %v3303, 0.0
      %v3336 = vsel %vm522, %v3304, 0.0
      %v3337 = vsel %vm521, %v3305, 0.0
      %v3338 = vsel %vm522, %v3306, 0.0
      %v3339 = vsel %vm521, %v3307, 0.0
      %v3340 = vsel %vm522, %v3308, 0.0
      %v3341 = vsel %vm521, %v3309, 0.0
      %v3342 = vsel %vm522, %v3310, 0.0
      %v3343 = vsel %vm521, %v3311, 0.0
      %v3344 = vsel %vm522, %v3312, 0.0
      %v3345 = vsel %vm521, %v3313, 0.0
      %v3346 = vsel %vm522, %v3314, 0.0
      %v3347 = vsel %vm521, %v3315, 0.0
      %v3348 = vsel %vm522, %v3316, 0.0
      %v3349 = vsel %vm521, %v3317, 0.0
      %v3350 = vsel %vm522, %v3318, 0.0
      %v3351 = vsel %vm521, %v3319, 0.0
      %v3352 = vsel %vm522, %v3320, 0.0
      %v3353 = vsel %vm521, %v3321, 0.0
      %v3354 = vsel %vm522, %v3322, 0.0
      %v3355 = vsel %vm521, %v3323, 0.0
      %v3356 = vsel %vm522, %v3324, 0.0
      %v3357 = vsel %vm521, %v3325, 0.0
      %v3358 = vsel %vm522, %v3326, 0.0
      %v3359 = vsel %vm521, %v3327, 0.0
      %v3360 = vsel %vm522, %v3328, 0.0
      %v3361 = vsel %vm521, %v3329, 0.0
      %v3362 = vsel %vm522, %v3330, 0.0
      %v3363 = vsel %vm521, %v3331, 0.0
      %v3364 = vsel %vm522, %v3332, 0.0
      %v3365 = vsel %vm519, %v3333, 0.0
      %v3366 = vsel %vm520, %v3334, 0.0
      %v3367 = vld [vmem:[%s1 + $0x1e] sm:$0x1f]
      %v3369 = vsel %vm204, %v3335, 0
      %v3372 = vsel %vm204, %v3336, 0
      %v3375 = vsel %vm204, %v3337, 0
      %v3378 = vsel %vm204, %v3338, 0
      %v3381 = vsel %vm204, %v3339, 0
      %v3384 = vsel %vm204, %v3340, 0
      %v3387 = vsel %vm204, %v3341, 0
      %v3390 = vsel %vm204, %v3342, 0
      %v3393 = vsel %vm204, %v3343, 0
      %v3396 = vsel %vm204, %v3344, 0
      %v3399 = vsel %vm204, %v3345, 0
      %v3402 = vsel %vm204, %v3346, 0
      %v3405 = vsel %vm204, %v3347, 0
      %v3408 = vsel %vm204, %v3348, 0
      %v3411 = vsel %vm204, %v3349, 0
      %v3414 = vsel %vm204, %v3350, 0
      %v3417 = vsel %vm204, %v3351, 0
      %v3420 = vsel %vm204, %v3352, 0
      %v3423 = vsel %vm204, %v3353, 0
      %v3426 = vsel %vm204, %v3354, 0
      %v3429 = vsel %vm204, %v3355, 0
      %v3432 = vsel %vm204, %v3356, 0
      %v3435 = vsel %vm204, %v3357, 0
      %v3438 = vsel %vm204, %v3358, 0
      %v3441 = vsel %vm204, %v3359, 0
      %v3444 = vsel %vm204, %v3360, 0
      %v3447 = vsel %vm204, %v3361, 0
      %v3450 = vsel %vm204, %v3362, 0
      %v3453 = vsel %vm204, %v3363, 0
      %v3456 = vsel %vm204, %v3364, 0
      %v3459 = vsel %vm204, %v3365, 0
      %v3462 = vsel %vm204, %v3366, 0
      %v3465 = vsel %vm795, %v3367, 0
      %3467 = vmatprep.subr.mxu0 0.0
      %3468 = vmatpush1.msra.mxu0 0.0
      %3469 = vmatprep.subr.mxu0 0.0
      %3470 = vmatpush1.msra.mxu0 0.0
      %3471 = vmatprep.subr.mxu0 0.0
      %3472 = vmatpush1.msra.mxu0 0.0
      %3473 = vmatprep.subr.mxu0 0.0
      %3474 = vmatpush1.msra.mxu0 0.0
      %3475 = vmatprep.subr.mxu0 0.0
      %3476 = vmatpush1.msra.mxu0 0.0
      %3477 = vmatprep.subr.mxu0 0.0
      %3478 = vmatpush1.msra.mxu0 0.0
      %3479 = vmatprep.subr.mxu0 0.0
      %3480 = vmatpush1.msra.mxu0 0.0
      %3481 = vmatprep.subr.mxu0 0.0
      %3482 = vmatpush1.msra.mxu0 0.0
      %3483 = vmatprep.subr.mxu0 0.0
      %3484 = vmatpush1.msra.mxu0 0.0
      %3485 = vmatprep.subr.mxu0 0.0
      %3486 = vmatpush1.msra.mxu0 0.0
      %3487 = vmatprep.subr.mxu0 0.0
      %3488 = vmatpush1.msra.mxu0 0.0
      %3489 = vmatprep.subr.mxu0 0.0
      %3490 = vmatpush1.msra.mxu0 0.0
      %3491 = vmatprep.subr.mxu0 0.0
      %3492 = vmatpush1.msra.mxu0 0.0
      %3493 = vmatprep.subr.mxu0 0.0
      %3494 = vmatpush1.msra.mxu0 0.0
      %3495 = vmatprep.subr.mxu0 0.0
      %3496 = vmatpush1.msra.mxu0 0.0
      %3497 = vmatprep.subr.mxu0 0.0
      %3498 = vmatpush1.msra.mxu0 %v3465
      %3499 = vmatprep.subr.mxu0 0.0
      %3500 = vmatpush2.msra.mxu0 0.0
      %3501 = vmatprep.subr.mxu0 0.0
      %3502 = vmatpush2.msra.mxu0 0.0
      %3503 = vmatprep.subr.mxu0 0.0
      %3504 = vmatpush2.msra.mxu0 0.0
      %3505 = vmatprep.subr.mxu0 0.0
      %3506 = vmatpush2.msra.mxu0 0.0
      %3507 = vmatprep.subr.mxu0 0.0
      %3508 = vmatpush2.msra.mxu0 0.0
      %3509 = vmatprep.subr.mxu0 0.0
      %3510 = vmatpush2.msra.mxu0 0.0
      %3511 = vmatprep.subr.mxu0 0.0
      %3512 = vmatpush2.msra.mxu0 0.0
      %3513 = vmatprep.subr.mxu0 0.0
      %3514 = vmatpush2.msra.mxu0 0.0
      %3515 = vmatprep.subr.mxu0 0.0
      %3516 = vmatpush2.msra.mxu0 0.0
      %3517 = vmatprep.subr.mxu0 0.0
      %3518 = vmatpush2.msra.mxu0 0.0
      %3519 = vmatprep.subr.mxu0 0.0
      %3520 = vmatpush2.msra.mxu0 0.0
      %3521 = vmatprep.subr.mxu0 0.0
      %3522 = vmatpush2.msra.mxu0 0.0
      %3523 = vmatprep.subr.mxu0 0.0
      %3524 = vmatpush2.msra.mxu0 0.0
      %3525 = vmatprep.subr.mxu0 0.0
      %3526 = vmatpush2.msra.mxu0 0.0
      %3527 = vmatprep.subr.mxu0 0.0
      %3528 = vmatpush2.msra.mxu0 0.0
      %3529 = vmatprep.subr.mxu0 0.0
      %3530 = vmatpush2.msra.mxu0 0.0
      %3531 = vmatprep.mubr.f32.mxu0 0.0
      %3532 = vmatmul.mubr.f32.gmra.mxu0 %v3369
      %v3533 = vpop.f32.mrf.mxu0
      %v3534 = vadd.f32 0.0, %v3533
      %v3535 = vpop.f32.mrf.mxu0
      %3536 = vmatprep.mubr.f32.mxu0 0.0
      %3537 = vmatmul.mubr.f32.gmra.mxu0 %v3372
      %v3538 = vpop.f32.mrf.mxu0
      %v3539 = vadd.f32 0.0, %v3538
      %v3540 = vpop.f32.mrf.mxu0
      %3541 = vmatprep.mubr.f32.mxu0 0.0
      %3542 = vmatmul.mubr.f32.gmra.mxu0 %v3375
      %v3543 = vpop.f32.mrf.mxu0
      %v3544 = vadd.f32 0.0, %v3543
      %v3545 = vpop.f32.mrf.mxu0
      %3546 = vmatprep.mubr.f32.mxu0 0.0
      %3547 = vmatmul.mubr.f32.gmra.mxu0 %v3378
      %v3548 = vpop.f32.mrf.mxu0
      %v3549 = vadd.f32 0.0, %v3548
      %v3550 = vpop.f32.mrf.mxu0
      %3551 = vmatprep.mubr.f32.mxu0 0.0
      %3552 = vmatmul.mubr.f32.gmra.mxu0 %v3381
      %v3553 = vpop.f32.mrf.mxu0
      %v3554 = vadd.f32 0.0, %v3553
      %v3555 = vpop.f32.mrf.mxu0
      %3556 = vmatprep.mubr.f32.mxu0 0.0
      %3557 = vmatmul.mubr.f32.gmra.mxu0 %v3384
      %v3558 = vpop.f32.mrf.mxu0
      %v3559 = vadd.f32 0.0, %v3558
      %v3560 = vpop.f32.mrf.mxu0
      %3561 = vmatprep.mubr.f32.mxu0 0.0
      %3562 = vmatmul.mubr.f32.gmra.mxu0 %v3387
      %v3563 = vpop.f32.mrf.mxu0
      %v3564 = vadd.f32 0.0, %v3563
      %v3565 = vpop.f32.mrf.mxu0
      %3566 = vmatprep.mubr.f32.mxu0 0.0
      %3567 = vmatmul.mubr.f32.gmra.mxu0 %v3390
      %v3568 = vpop.f32.mrf.mxu0
      %v3569 = vadd.f32 0.0, %v3568
      %v3570 = vpop.f32.mrf.mxu0
      %3571 = vmatprep.mubr.f32.mxu0 0.0
      %3572 = vmatmul.mubr.f32.gmra.mxu0 %v3393
      %v3573 = vpop.f32.mrf.mxu0
      %v3574 = vadd.f32 0.0, %v3573
      %v3575 = vpop.f32.mrf.mxu0
      %3576 = vmatprep.mubr.f32.mxu0 0.0
      %3577 = vmatmul.mubr.f32.gmra.mxu0 %v3396
      %v3578 = vpop.f32.mrf.mxu0
      %v3579 = vadd.f32 0.0, %v3578
      %v3580 = vpop.f32.mrf.mxu0
      %3581 = vmatprep.mubr.f32.mxu0 0.0
      %3582 = vmatmul.mubr.f32.gmra.mxu0 %v3399
      %v3583 = vpop.f32.mrf.mxu0
      %v3584 = vadd.f32 0.0, %v3583
      %v3585 = vpop.f32.mrf.mxu0
      %3586 = vmatprep.mubr.f32.mxu0 0.0
      %3587 = vmatmul.mubr.f32.gmra.mxu0 %v3402
      %v3588 = vpop.f32.mrf.mxu0
      %v3589 = vadd.f32 0.0, %v3588
      %v3590 = vpop.f32.mrf.mxu0
      %3591 = vmatprep.mubr.f32.mxu0 0.0
      %3592 = vmatmul.mubr.f32.gmra.mxu0 %v3405
      %v3593 = vpop.f32.mrf.mxu0
      %v3594 = vadd.f32 0.0, %v3593
      %v3595 = vpop.f32.mrf.mxu0
      %3596 = vmatprep.mubr.f32.mxu0 0.0
      %3597 = vmatmul.mubr.f32.gmra.mxu0 %v3408
      %v3598 = vpop.f32.mrf.mxu0
      %v3599 = vadd.f32 0.0, %v3598
      %v3600 = vpop.f32.mrf.mxu0
      %3601 = vmatprep.mubr.f32.mxu0 0.0
      %3602 = vmatmul.mubr.f32.gmra.mxu0 %v3411
      %v3603 = vpop.f32.mrf.mxu0
      %v3604 = vadd.f32 0.0, %v3603
      %v3605 = vpop.f32.mrf.mxu0
      %3606 = vmatprep.mubr.f32.mxu0 0.0
      %3607 = vmatmul.mubr.f32.gmra.mxu0 %v3414
      %v3608 = vpop.f32.mrf.mxu0
      %v3609 = vadd.f32 0.0, %v3608
      %v3610 = vpop.f32.mrf.mxu0
      %3611 = vmatprep.mubr.f32.mxu0 0.0
      %3612 = vmatmul.mubr.f32.gmra.mxu0 %v3417
      %v3613 = vpop.f32.mrf.mxu0
      %v3614 = vadd.f32 0.0, %v3613
      %v3615 = vpop.f32.mrf.mxu0
      %3616 = vmatprep.mubr.f32.mxu0 0.0
      %3617 = vmatmul.mubr.f32.gmra.mxu0 %v3420
      %v3618 = vpop.f32.mrf.mxu0
      %v3619 = vadd.f32 0.0, %v3618
      %v3620 = vpop.f32.mrf.mxu0
      %3621 = vmatprep.mubr.f32.mxu0 0.0
      %3622 = vmatmul.mubr.f32.gmra.mxu0 %v3423
      %v3623 = vpop.f32.mrf.mxu0
      %v3624 = vadd.f32 0.0, %v3623
      %v3625 = vpop.f32.mrf.mxu0
      %3626 = vmatprep.mubr.f32.mxu0 0.0
      %3627 = vmatmul.mubr.f32.gmra.mxu0 %v3426
      %v3628 = vpop.f32.mrf.mxu0
      %v3629 = vadd.f32 0.0, %v3628
      %v3630 = vpop.f32.mrf.mxu0
      %3631 = vmatprep.mubr.f32.mxu0 0.0
      %3632 = vmatmul.mubr.f32.gmra.mxu0 %v3429
      %v3633 = vpop.f32.mrf.mxu0
      %v3634 = vadd.f32 0.0, %v3633
      %v3635 = vpop.f32.mrf.mxu0
      %3636 = vmatprep.mubr.f32.mxu0 0.0
      %3637 = vmatmul.mubr.f32.gmra.mxu0 %v3432
      %v3638 = vpop.f32.mrf.mxu0
      %v3639 = vadd.f32 0.0, %v3638
      %v3640 = vpop.f32.mrf.mxu0
      %3641 = vmatprep.mubr.f32.mxu0 0.0
      %3642 = vmatmul.mubr.f32.gmra.mxu0 %v3435
      %v3643 = vpop.f32.mrf.mxu0
      %v3644 = vadd.f32 0.0, %v3643
      %v3645 = vpop.f32.mrf.mxu0
      %3646 = vmatprep.mubr.f32.mxu0 0.0
      %3647 = vmatmul.mubr.f32.gmra.mxu0 %v3438
      %v3648 = vpop.f32.mrf.mxu0
      %v3649 = vadd.f32 0.0, %v3648
      %v3650 = vpop.f32.mrf.mxu0
      %3651 = vmatprep.mubr.f32.mxu0 0.0
      %3652 = vmatmul.mubr.f32.gmra.mxu0 %v3441
      %v3653 = vpop.f32.mrf.mxu0
      %v3654 = vadd.f32 0.0, %v3653
      %v3655 = vpop.f32.mrf.mxu0
      %3656 = vmatprep.mubr.f32.mxu0 0.0
      %3657 = vmatmul.mubr.f32.gmra.mxu0 %v3444
      %v3658 = vpop.f32.mrf.mxu0
      %v3659 = vadd.f32 0.0, %v3658
      %v3660 = vpop.f32.mrf.mxu0
      %3661 = vmatprep.mubr.f32.mxu0 0.0
      %3662 = vmatmul.mubr.f32.gmra.mxu0 %v3447
      %v3663 = vpop.f32.mrf.mxu0
      %v3664 = vadd.f32 0.0, %v3663
      %v3665 = vpop.f32.mrf.mxu0
      %3666 = vmatprep.mubr.f32.mxu0 0.0
      %3667 = vmatmul.mubr.f32.gmra.mxu0 %v3450
      %v3668 = vpop.f32.mrf.mxu0
      %v3669 = vadd.f32 0.0, %v3668
      %v3670 = vpop.f32.mrf.mxu0
      %3671 = vmatprep.mubr.f32.mxu0 0.0
      %3672 = vmatmul.mubr.f32.gmra.mxu0 %v3453
      %v3673 = vpop.f32.mrf.mxu0
      %v3674 = vadd.f32 0.0, %v3673
      %v3675 = vpop.f32.mrf.mxu0
      %3676 = vmatprep.mubr.f32.mxu0 0.0
      %3677 = vmatmul.mubr.f32.gmra.mxu0 %v3456
      %v3678 = vpop.f32.mrf.mxu0
      %v3679 = vadd.f32 0.0, %v3678
      %v3680 = vpop.f32.mrf.mxu0
      %3681 = vmatprep.mubr.f32.mxu0 0.0
      %3682 = vmatmul.mubr.f32.gmra.mxu0 %v3459
      %v3683 = vpop.f32.mrf.mxu0
      %v3684 = vadd.f32 0.0, %v3683
      %v3685 = vpop.f32.mrf.mxu0
      %3686 = vmatprep.mubr.f32.mxu0 0.0
      %3687 = vmatmul.mubr.f32.gmra.mxu0 %v3462
      %v3688 = vpop.f32.mrf.mxu0
      %v3689 = vadd.f32 0.0, %v3688
      %v3690 = vpop.f32.mrf.mxu0
      %3691 = vdwg.mxu0
      %v3692 = vadd.f32 %v3206, %v3534
      %v3693 = vadd.f32 %v3207, %v3539
      %v3694 = vadd.f32 %v3208, %v3544
      %v3695 = vadd.f32 %v3209, %v3549
      %v3696 = vadd.f32 %v3210, %v3554
      %v3697 = vadd.f32 %v3211, %v3559
      %v3698 = vadd.f32 %v3212, %v3564
      %v3699 = vadd.f32 %v3213, %v3569
      %v3700 = vadd.f32 %v3214, %v3574
      %v3701 = vadd.f32 %v3215, %v3579
      %v3702 = vadd.f32 %v3216, %v3584
      %v3703 = vadd.f32 %v3217, %v3589
      %v3704 = vadd.f32 %v3218, %v3594
      %v3705 = vadd.f32 %v3219, %v3599
      %v3706 = vadd.f32 %v3220, %v3604
      %v3707 = vadd.f32 %v3221, %v3609
      %v3708 = vadd.f32 %v3222, %v3614
      %v3709 = vadd.f32 %v3223, %v3619
      %v3710 = vadd.f32 %v3224, %v3624
      %v3711 = vadd.f32 %v3225, %v3629
      %v3712 = vadd.f32 %v3226, %v3634
      %v3713 = vadd.f32 %v3227, %v3639
      %v3714 = vadd.f32 %v3228, %v3644
      %v3715 = vadd.f32 %v3229, %v3649
      %v3716 = vadd.f32 %v3230, %v3654
      %v3717 = vadd.f32 %v3231, %v3659
      %v3718 = vadd.f32 %v3232, %v3664
      %v3719 = vadd.f32 %v3233, %v3669
      %v3720 = vadd.f32 %v3234, %v3674
      %v3721 = vadd.f32 %v3235, %v3679
      %v3722 = vadd.f32 %v3236, %v3684
      %v3723 = vadd.f32 %v3237, %v3689
      %v3724 = vld [vmem:[%s3238 + $0x1] sm:$0xff]
      %v3725 = vld [vmem:[%s3238 + $0x9] sm:$0xff]
      %v3726 = vld [vmem:[%s3238 + $0x19] sm:$0xff]
      %v3727 = vld [vmem:[%s3238 + $0x21] sm:$0xff]
      %v3728 = vld [vmem:[%s3238 + $0x31] sm:$0xff]
      %v3729 = vld [vmem:[%s3238 + $0x39] sm:$0xff]
      %v3730 = vld [vmem:[%s3238 + $0x49] sm:$0xff]
      %v3731 = vld [vmem:[%s3238 + $0x51] sm:$0xff]
      %v3732 = vld [vmem:[%s3238 + $0x61] sm:$0xff]
      %v3733 = vld [vmem:[%s3238 + $0x69] sm:$0xff]
      %v3734 = vld [vmem:[%s3238 + $0x79] sm:$0xff]
      %v3735 = vld [vmem:[%s3238 + $0x81] sm:$0xff]
      %v3736 = vld [vmem:[%s3238 + $0x91] sm:$0xff]
      %v3737 = vld [vmem:[%s3238 + $0x99] sm:$0xff]
      %v3738 = vld [vmem:[%s3238 + $0xa9] sm:$0xff]
      %v3739 = vld [vmem:[%s3238 + $0xb1] sm:$0xff]
      %v3740 = vld [vmem:[%s3238 + $0xc1] sm:$0xff]
      %v3741 = vld [vmem:[%s3238 + $0xc9] sm:$0xff]
      %v3742 = vld [vmem:[%s3238 + $0xd9] sm:$0xff]
      %v3743 = vld [vmem:[%s3238 + $0xe1] sm:$0xff]
      %v3744 = vld [vmem:[%s3238 + $0xf1] sm:$0xff]
      %v3745 = vld [vmem:[%s3238 + $0xf9] sm:$0xff]
      %v3746 = vld [vmem:[%s3238 + $0x109] sm:$0xff]
      %v3747 = vld [vmem:[%s3238 + $0x111] sm:$0xff]
      %v3748 = vld [vmem:[%s3238 + $0x121] sm:$0xff]
      %v3749 = vld [vmem:[%s3238 + $0x129] sm:$0xff]
      %v3750 = vld [vmem:[%s3238 + $0x139] sm:$0xff]
      %v3751 = vld [vmem:[%s3238 + $0x141] sm:$0xff]
      %v3752 = vld [vmem:[%s3238 + $0x151] sm:$0xff]
      %v3753 = vld [vmem:[%s3238 + $0x159] sm:$0xff]
      %v3754 = vld [vmem:[%s3238 + $0x169] sm:$0xff]
      %v3755 = vld [vmem:[%s3238 + $0x171] sm:$0xff]
      %v3756 = vsub.f32 %v3724, %v275
      %v3757 = vsub.f32 %v3725, %v275
      %v3758 = vsub.f32 %v3726, %v275
      %v3759 = vsub.f32 %v3727, %v275
      %v3760 = vsub.f32 %v3728, %v275
      %v3761 = vsub.f32 %v3729, %v275
      %v3762 = vsub.f32 %v3730, %v275
      %v3763 = vsub.f32 %v3731, %v275
      %v3764 = vsub.f32 %v3732, %v275
      %v3765 = vsub.f32 %v3733, %v275
      %v3766 = vsub.f32 %v3734, %v275
      %v3767 = vsub.f32 %v3735, %v275
      %v3768 = vsub.f32 %v3736, %v275
      %v3769 = vsub.f32 %v3737, %v275
      %v3770 = vsub.f32 %v3738, %v275
      %v3771 = vsub.f32 %v3739, %v275
      %v3772 = vsub.f32 %v3740, %v275
      %v3773 = vsub.f32 %v3741, %v275
      %v3774 = vsub.f32 %v3742, %v275
      %v3775 = vsub.f32 %v3743, %v275
      %v3776 = vsub.f32 %v3744, %v275
      %v3777 = vsub.f32 %v3745, %v275
      %v3778 = vsub.f32 %v3746, %v275
      %v3779 = vsub.f32 %v3747, %v275
      %v3780 = vsub.f32 %v3748, %v275
      %v3781 = vsub.f32 %v3749, %v275
      %v3782 = vsub.f32 %v3750, %v275
      %v3783 = vsub.f32 %v3751, %v275
      %v3784 = vsub.f32 %v3752, %v275
      %v3785 = vsub.f32 %v3753, %v275
      %v3786 = vsub.f32 %v3754, %v275
      %v3787 = vsub.f32 %v3755, %v275
      %v3788 = vmul.f32 %v3756, %v411
      %v3789 = vmul.f32 %v3757, %v411
      %v3790 = vmul.f32 %v3758, %v411
      %v3791 = vmul.f32 %v3759, %v411
      %v3792 = vmul.f32 %v3760, %v411
      %v3793 = vmul.f32 %v3761, %v411
      %v3794 = vmul.f32 %v3762, %v411
      %v3795 = vmul.f32 %v3763, %v411
      %v3796 = vmul.f32 %v3764, %v411
      %v3797 = vmul.f32 %v3765, %v411
      %v3798 = vmul.f32 %v3766, %v411
      %v3799 = vmul.f32 %v3767, %v411
      %v3800 = vmul.f32 %v3768, %v411
      %v3801 = vmul.f32 %v3769, %v411
      %v3802 = vmul.f32 %v3770, %v411
      %v3803 = vmul.f32 %v3771, %v411
      %v3804 = vmul.f32 %v3772, %v411
      %v3805 = vmul.f32 %v3773, %v411
      %v3806 = vmul.f32 %v3774, %v411
      %v3807 = vmul.f32 %v3775, %v411
      %v3808 = vmul.f32 %v3776, %v411
      %v3809 = vmul.f32 %v3777, %v411
      %v3810 = vmul.f32 %v3778, %v411
      %v3811 = vmul.f32 %v3779, %v411
      %v3812 = vmul.f32 %v3780, %v411
      %v3813 = vmul.f32 %v3781, %v411
      %v3814 = vmul.f32 %v3782, %v411
      %v3815 = vmul.f32 %v3783, %v411
      %v3816 = vmul.f32 %v3784, %v411
      %v3817 = vmul.f32 %v3785, %v411
      %v3818 = vmul.f32 %v3786, %v411
      %v3819 = vmul.f32 %v3787, %v411
      %v3820 = vsel %vm664, %v3788, 0.0
      %v3821 = vsel %vm665, %v3789, 0.0
      %v3822 = vsel %vm664, %v3790, 0.0
      %v3823 = vsel %vm665, %v3791, 0.0
      %v3824 = vsel %vm664, %v3792, 0.0
      %v3825 = vsel %vm665, %v3793, 0.0
      %v3826 = vsel %vm664, %v3794, 0.0
      %v3827 = vsel %vm665, %v3795, 0.0
      %v3828 = vsel %vm664, %v3796, 0.0
      %v3829 = vsel %vm665, %v3797, 0.0
      %v3830 = vsel %vm664, %v3798, 0.0
      %v3831 = vsel %vm665, %v3799, 0.0
      %v3832 = vsel %vm664, %v3800, 0.0
      %v3833 = vsel %vm665, %v3801, 0.0
      %v3834 = vsel %vm664, %v3802, 0.0
      %v3835 = vsel %vm665, %v3803, 0.0
      %v3836 = vsel %vm664, %v3804, 0.0
      %v3837 = vsel %vm665, %v3805, 0.0
      %v3838 = vsel %vm664, %v3806, 0.0
      %v3839 = vsel %vm665, %v3807, 0.0
      %v3840 = vsel %vm664, %v3808, 0.0
      %v3841 = vsel %vm665, %v3809, 0.0
      %v3842 = vsel %vm664, %v3810, 0.0
      %v3843 = vsel %vm665, %v3811, 0.0
      %v3844 = vsel %vm664, %v3812, 0.0
      %v3845 = vsel %vm665, %v3813, 0.0
      %v3846 = vsel %vm664, %v3814, 0.0
      %v3847 = vsel %vm665, %v3815, 0.0
      %v3848 = vsel %vm664, %v3816, 0.0
      %v3849 = vsel %vm665, %v3817, 0.0
      %v3850 = vsel %vm662, %v3818, 0.0
      %v3851 = vsel %vm663, %v3819, 0.0
      %v3852 = vld [vmem:[%s1 + $0x23] sm:$0x1f]
      %v3854 = vsel %vm204, %v3820, 0
      %v3857 = vsel %vm204, %v3821, 0
      %v3860 = vsel %vm204, %v3822, 0
      %v3863 = vsel %vm204, %v3823, 0
      %v3866 = vsel %vm204, %v3824, 0
      %v3869 = vsel %vm204, %v3825, 0
      %v3872 = vsel %vm204, %v3826, 0
      %v3875 = vsel %vm204, %v3827, 0
      %v3878 = vsel %vm204, %v3828, 0
      %v3881 = vsel %vm204, %v3829, 0
      %v3884 = vsel %vm204, %v3830, 0
      %v3887 = vsel %vm204, %v3831, 0
      %v3890 = vsel %vm204, %v3832, 0
      %v3893 = vsel %vm204, %v3833, 0
      %v3896 = vsel %vm204, %v3834, 0
      %v3899 = vsel %vm204, %v3835, 0
      %v3902 = vsel %vm204, %v3836, 0
      %v3905 = vsel %vm204, %v3837, 0
      %v3908 = vsel %vm204, %v3838, 0
      %v3911 = vsel %vm204, %v3839, 0
      %v3914 = vsel %vm204, %v3840, 0
      %v3917 = vsel %vm204, %v3841, 0
      %v3920 = vsel %vm204, %v3842, 0
      %v3923 = vsel %vm204, %v3843, 0
      %v3926 = vsel %vm204, %v3844, 0
      %v3929 = vsel %vm204, %v3845, 0
      %v3932 = vsel %vm204, %v3846, 0
      %v3935 = vsel %vm204, %v3847, 0
      %v3938 = vsel %vm204, %v3848, 0
      %v3941 = vsel %vm204, %v3849, 0
      %v3944 = vsel %vm204, %v3850, 0
      %v3947 = vsel %vm204, %v3851, 0
      %v3950 = vsel %vm795, %v3852, 0
      %3952 = vmatprep.subr.mxu0 0.0
      %3953 = vmatpush1.msra.mxu0 0.0
      %3954 = vmatprep.subr.mxu0 0.0
      %3955 = vmatpush1.msra.mxu0 0.0
      %3956 = vmatprep.subr.mxu0 0.0
      %3957 = vmatpush1.msra.mxu0 0.0
      %3958 = vmatprep.subr.mxu0 0.0
      %3959 = vmatpush1.msra.mxu0 0.0
      %3960 = vmatprep.subr.mxu0 0.0
      %3961 = vmatpush1.msra.mxu0 0.0
      %3962 = vmatprep.subr.mxu0 0.0
      %3963 = vmatpush1.msra.mxu0 0.0
      %3964 = vmatprep.subr.mxu0 0.0
      %3965 = vmatpush1.msra.mxu0 0.0
      %3966 = vmatprep.subr.mxu0 0.0
      %3967 = vmatpush1.msra.mxu0 0.0
      %3968 = vmatprep.subr.mxu0 0.0
      %3969 = vmatpush1.msra.mxu0 0.0
      %3970 = vmatprep.subr.mxu0 0.0
      %3971 = vmatpush1.msra.mxu0 0.0
      %3972 = vmatprep.subr.mxu0 0.0
      %3973 = vmatpush1.msra.mxu0 0.0
      %3974 = vmatprep.subr.mxu0 0.0
      %3975 = vmatpush1.msra.mxu0 0.0
      %3976 = vmatprep.subr.mxu0 0.0
      %3977 = vmatpush1.msra.mxu0 0.0
      %3978 = vmatprep.subr.mxu0 0.0
      %3979 = vmatpush1.msra.mxu0 0.0
      %3980 = vmatprep.subr.mxu0 0.0
      %3981 = vmatpush1.msra.mxu0 0.0
      %3982 = vmatprep.subr.mxu0 0.0
      %3983 = vmatpush1.msra.mxu0 %v3950
      %3984 = vmatprep.subr.mxu0 0.0
      %3985 = vmatpush2.msra.mxu0 0.0
      %3986 = vmatprep.subr.mxu0 0.0
      %3987 = vmatpush2.msra.mxu0 0.0
      %3988 = vmatprep.subr.mxu0 0.0
      %3989 = vmatpush2.msra.mxu0 0.0
      %3990 = vmatprep.subr.mxu0 0.0
      %3991 = vmatpush2.msra.mxu0 0.0
      %3992 = vmatprep.subr.mxu0 0.0
      %3993 = vmatpush2.msra.mxu0 0.0
      %3994 = vmatprep.subr.mxu0 0.0
      %3995 = vmatpush2.msra.mxu0 0.0
      %3996 = vmatprep.subr.mxu0 0.0
      %3997 = vmatpush2.msra.mxu0 0.0
      %3998 = vmatprep.subr.mxu0 0.0
      %3999 = vmatpush2.msra.mxu0 0.0
      %4000 = vmatprep.subr.mxu0 0.0
      %4001 = vmatpush2.msra.mxu0 0.0
      %4002 = vmatprep.subr.mxu0 0.0
      %4003 = vmatpush2.msra.mxu0 0.0
      %4004 = vmatprep.subr.mxu0 0.0
      %4005 = vmatpush2.msra.mxu0 0.0
      %4006 = vmatprep.subr.mxu0 0.0
      %4007 = vmatpush2.msra.mxu0 0.0
      %4008 = vmatprep.subr.mxu0 0.0
      %4009 = vmatpush2.msra.mxu0 0.0
      %4010 = vmatprep.subr.mxu0 0.0
      %4011 = vmatpush2.msra.mxu0 0.0
      %4012 = vmatprep.subr.mxu0 0.0
      %4013 = vmatpush2.msra.mxu0 0.0
      %4014 = vmatprep.subr.mxu0 0.0
      %4015 = vmatpush2.msra.mxu0 0.0
      %4016 = vmatprep.mubr.f32.mxu0 0.0
      %4017 = vmatmul.mubr.f32.gmra.mxu0 %v3854
      %v4018 = vpop.f32.mrf.mxu0
      %v4019 = vadd.f32 0.0, %v4018
      %v4020 = vpop.f32.mrf.mxu0
      %4021 = vmatprep.mubr.f32.mxu0 0.0
      %4022 = vmatmul.mubr.f32.gmra.mxu0 %v3857
      %v4023 = vpop.f32.mrf.mxu0
      %v4024 = vadd.f32 0.0, %v4023
      %v4025 = vpop.f32.mrf.mxu0
      %4026 = vmatprep.mubr.f32.mxu0 0.0
      %4027 = vmatmul.mubr.f32.gmra.mxu0 %v3860
      %v4028 = vpop.f32.mrf.mxu0
      %v4029 = vadd.f32 0.0, %v4028
      %v4030 = vpop.f32.mrf.mxu0
      %4031 = vmatprep.mubr.f32.mxu0 0.0
      %4032 = vmatmul.mubr.f32.gmra.mxu0 %v3863
      %v4033 = vpop.f32.mrf.mxu0
      %v4034 = vadd.f32 0.0, %v4033
      %v4035 = vpop.f32.mrf.mxu0
      %4036 = vmatprep.mubr.f32.mxu0 0.0
      %4037 = vmatmul.mubr.f32.gmra.mxu0 %v3866
      %v4038 = vpop.f32.mrf.mxu0
      %v4039 = vadd.f32 0.0, %v4038
      %v4040 = vpop.f32.mrf.mxu0
      %4041 = vmatprep.mubr.f32.mxu0 0.0
      %4042 = vmatmul.mubr.f32.gmra.mxu0 %v3869
      %v4043 = vpop.f32.mrf.mxu0
      %v4044 = vadd.f32 0.0, %v4043
      %v4045 = vpop.f32.mrf.mxu0
      %4046 = vmatprep.mubr.f32.mxu0 0.0
      %4047 = vmatmul.mubr.f32.gmra.mxu0 %v3872
      %v4048 = vpop.f32.mrf.mxu0
      %v4049 = vadd.f32 0.0, %v4048
      %v4050 = vpop.f32.mrf.mxu0
      %4051 = vmatprep.mubr.f32.mxu0 0.0
      %4052 = vmatmul.mubr.f32.gmra.mxu0 %v3875
      %v4053 = vpop.f32.mrf.mxu0
      %v4054 = vadd.f32 0.0, %v4053
      %v4055 = vpop.f32.mrf.mxu0
      %4056 = vmatprep.mubr.f32.mxu0 0.0
      %4057 = vmatmul.mubr.f32.gmra.mxu0 %v3878
      %v4058 = vpop.f32.mrf.mxu0
      %v4059 = vadd.f32 0.0, %v4058
      %v4060 = vpop.f32.mrf.mxu0
      %4061 = vmatprep.mubr.f32.mxu0 0.0
      %4062 = vmatmul.mubr.f32.gmra.mxu0 %v3881
      %v4063 = vpop.f32.mrf.mxu0
      %v4064 = vadd.f32 0.0, %v4063
      %v4065 = vpop.f32.mrf.mxu0
      %4066 = vmatprep.mubr.f32.mxu0 0.0
      %4067 = vmatmul.mubr.f32.gmra.mxu0 %v3884
      %v4068 = vpop.f32.mrf.mxu0
      %v4069 = vadd.f32 0.0, %v4068
      %v4070 = vpop.f32.mrf.mxu0
      %4071 = vmatprep.mubr.f32.mxu0 0.0
      %4072 = vmatmul.mubr.f32.gmra.mxu0 %v3887
      %v4073 = vpop.f32.mrf.mxu0
      %v4074 = vadd.f32 0.0, %v4073
      %v4075 = vpop.f32.mrf.mxu0
      %4076 = vmatprep.mubr.f32.mxu0 0.0
      %4077 = vmatmul.mubr.f32.gmra.mxu0 %v3890
      %v4078 = vpop.f32.mrf.mxu0
      %v4079 = vadd.f32 0.0, %v4078
      %v4080 = vpop.f32.mrf.mxu0
      %4081 = vmatprep.mubr.f32.mxu0 0.0
      %4082 = vmatmul.mubr.f32.gmra.mxu0 %v3893
      %v4083 = vpop.f32.mrf.mxu0
      %v4084 = vadd.f32 0.0, %v4083
      %v4085 = vpop.f32.mrf.mxu0
      %4086 = vmatprep.mubr.f32.mxu0 0.0
      %4087 = vmatmul.mubr.f32.gmra.mxu0 %v3896
      %v4088 = vpop.f32.mrf.mxu0
      %v4089 = vadd.f32 0.0, %v4088
      %v4090 = vpop.f32.mrf.mxu0
      %4091 = vmatprep.mubr.f32.mxu0 0.0
      %4092 = vmatmul.mubr.f32.gmra.mxu0 %v3899
      %v4093 = vpop.f32.mrf.mxu0
      %v4094 = vadd.f32 0.0, %v4093
      %v4095 = vpop.f32.mrf.mxu0
      %4096 = vmatprep.mubr.f32.mxu0 0.0
      %4097 = vmatmul.mubr.f32.gmra.mxu0 %v3902
      %v4098 = vpop.f32.mrf.mxu0
      %v4099 = vadd.f32 0.0, %v4098
      %v4100 = vpop.f32.mrf.mxu0
      %4101 = vmatprep.mubr.f32.mxu0 0.0
      %4102 = vmatmul.mubr.f32.gmra.mxu0 %v3905
      %v4103 = vpop.f32.mrf.mxu0
      %v4104 = vadd.f32 0.0, %v4103
      %v4105 = vpop.f32.mrf.mxu0
      %4106 = vmatprep.mubr.f32.mxu0 0.0
      %4107 = vmatmul.mubr.f32.gmra.mxu0 %v3908
      %v4108 = vpop.f32.mrf.mxu0
      %v4109 = vadd.f32 0.0, %v4108
      %v4110 = vpop.f32.mrf.mxu0
      %4111 = vmatprep.mubr.f32.mxu0 0.0
      %4112 = vmatmul.mubr.f32.gmra.mxu0 %v3911
      %v4113 = vpop.f32.mrf.mxu0
      %v4114 = vadd.f32 0.0, %v4113
      %v4115 = vpop.f32.mrf.mxu0
      %4116 = vmatprep.mubr.f32.mxu0 0.0
      %4117 = vmatmul.mubr.f32.gmra.mxu0 %v3914
      %v4118 = vpop.f32.mrf.mxu0
      %v4119 = vadd.f32 0.0, %v4118
      %v4120 = vpop.f32.mrf.mxu0
      %4121 = vmatprep.mubr.f32.mxu0 0.0
      %4122 = vmatmul.mubr.f32.gmra.mxu0 %v3917
      %v4123 = vpop.f32.mrf.mxu0
      %v4124 = vadd.f32 0.0, %v4123
      %v4125 = vpop.f32.mrf.mxu0
      %4126 = vmatprep.mubr.f32.mxu0 0.0
      %4127 = vmatmul.mubr.f32.gmra.mxu0 %v3920
      %v4128 = vpop.f32.mrf.mxu0
      %v4129 = vadd.f32 0.0, %v4128
      %v4130 = vpop.f32.mrf.mxu0
      %4131 = vmatprep.mubr.f32.mxu0 0.0
      %4132 = vmatmul.mubr.f32.gmra.mxu0 %v3923
      %v4133 = vpop.f32.mrf.mxu0
      %v4134 = vadd.f32 0.0, %v4133
      %v4135 = vpop.f32.mrf.mxu0
      %4136 = vmatprep.mubr.f32.mxu0 0.0
      %4137 = vmatmul.mubr.f32.gmra.mxu0 %v3926
      %v4138 = vpop.f32.mrf.mxu0
      %v4139 = vadd.f32 0.0, %v4138
      %v4140 = vpop.f32.mrf.mxu0
      %4141 = vmatprep.mubr.f32.mxu0 0.0
      %4142 = vmatmul.mubr.f32.gmra.mxu0 %v3929
      %v4143 = vpop.f32.mrf.mxu0
      %v4144 = vadd.f32 0.0, %v4143
      %v4145 = vpop.f32.mrf.mxu0
      %4146 = vmatprep.mubr.f32.mxu0 0.0
      %4147 = vmatmul.mubr.f32.gmra.mxu0 %v3932
      %v4148 = vpop.f32.mrf.mxu0
      %v4149 = vadd.f32 0.0, %v4148
      %v4150 = vpop.f32.mrf.mxu0
      %4151 = vmatprep.mubr.f32.mxu0 0.0
      %4152 = vmatmul.mubr.f32.gmra.mxu0 %v3935
      %v4153 = vpop.f32.mrf.mxu0
      %v4154 = vadd.f32 0.0, %v4153
      %v4155 = vpop.f32.mrf.mxu0
      %4156 = vmatprep.mubr.f32.mxu0 0.0
      %4157 = vmatmul.mubr.f32.gmra.mxu0 %v3938
      %v4158 = vpop.f32.mrf.mxu0
      %v4159 = vadd.f32 0.0, %v4158
      %v4160 = vpop.f32.mrf.mxu0
      %4161 = vmatprep.mubr.f32.mxu0 0.0
      %4162 = vmatmul.mubr.f32.gmra.mxu0 %v3941
      %v4163 = vpop.f32.mrf.mxu0
      %v4164 = vadd.f32 0.0, %v4163
      %v4165 = vpop.f32.mrf.mxu0
      %4166 = vmatprep.mubr.f32.mxu0 0.0
      %4167 = vmatmul.mubr.f32.gmra.mxu0 %v3944
      %v4168 = vpop.f32.mrf.mxu0
      %v4169 = vadd.f32 0.0, %v4168
      %v4170 = vpop.f32.mrf.mxu0
      %4171 = vmatprep.mubr.f32.mxu0 0.0
      %4172 = vmatmul.mubr.f32.gmra.mxu0 %v3947
      %v4173 = vpop.f32.mrf.mxu0
      %v4174 = vadd.f32 0.0, %v4173
      %v4175 = vpop.f32.mrf.mxu0
      %4176 = vdwg.mxu0
      %v4177 = vadd.f32 %v3692, %v4019
      %v4178 = vadd.f32 %v3693, %v4024
      %v4179 = vadd.f32 %v3694, %v4029
      %v4180 = vadd.f32 %v3695, %v4034
      %v4181 = vadd.f32 %v3696, %v4039
      %v4182 = vadd.f32 %v3697, %v4044
      %v4183 = vadd.f32 %v3698, %v4049
      %v4184 = vadd.f32 %v3699, %v4054
      %v4185 = vadd.f32 %v3700, %v4059
      %v4186 = vadd.f32 %v3701, %v4064
      %v4187 = vadd.f32 %v3702, %v4069
      %v4188 = vadd.f32 %v3703, %v4074
      %v4189 = vadd.f32 %v3704, %v4079
      %v4190 = vadd.f32 %v3705, %v4084
      %v4191 = vadd.f32 %v3706, %v4089
      %v4192 = vadd.f32 %v3707, %v4094
      %v4193 = vadd.f32 %v3708, %v4099
      %v4194 = vadd.f32 %v3709, %v4104
      %v4195 = vadd.f32 %v3710, %v4109
      %v4196 = vadd.f32 %v3711, %v4114
      %v4197 = vadd.f32 %v3712, %v4119
      %v4198 = vadd.f32 %v3713, %v4124
      %v4199 = vadd.f32 %v3714, %v4129
      %v4200 = vadd.f32 %v3715, %v4134
      %v4201 = vadd.f32 %v3716, %v4139
      %v4202 = vadd.f32 %v3717, %v4144
      %v4203 = vadd.f32 %v3718, %v4149
      %v4204 = vadd.f32 %v3719, %v4154
      %v4205 = vadd.f32 %v3720, %v4159
      %v4206 = vadd.f32 %v3721, %v4164
      %v4207 = vadd.f32 %v3722, %v4169
      %v4208 = vadd.f32 %v3723, %v4174
      %v4209 = vld [vmem:[%s3238 + $0x2] sm:$0xff]
      %v4210 = vld [vmem:[%s3238 + $0xa] sm:$0xff]
      %v4211 = vld [vmem:[%s3238 + $0x1a] sm:$0xff]
      %v4212 = vld [vmem:[%s3238 + $0x22] sm:$0xff]
      %v4213 = vld [vmem:[%s3238 + $0x32] sm:$0xff]
      %v4214 = vld [vmem:[%s3238 + $0x3a] sm:$0xff]
      %v4215 = vld [vmem:[%s3238 + $0x4a] sm:$0xff]
      %v4216 = vld [vmem:[%s3238 + $0x52] sm:$0xff]
      %v4217 = vld [vmem:[%s3238 + $0x62] sm:$0xff]
      %v4218 = vld [vmem:[%s3238 + $0x6a] sm:$0xff]
      %v4219 = vld [vmem:[%s3238 + $0x7a] sm:$0xff]
      %v4220 = vld [vmem:[%s3238 + $0x82] sm:$0xff]
      %v4221 = vld [vmem:[%s3238 + $0x92] sm:$0xff]
      %v4222 = vld [vmem:[%s3238 + $0x9a] sm:$0xff]
      %v4223 = vld [vmem:[%s3238 + $0xaa] sm:$0xff]
      %v4224 = vld [vmem:[%s3238 + $0xb2] sm:$0xff]
      %v4225 = vld [vmem:[%s3238 + $0xc2] sm:$0xff]
      %v4226 = vld [vmem:[%s3238 + $0xca] sm:$0xff]
      %v4227 = vld [vmem:[%s3238 + $0xda] sm:$0xff]
      %v4228 = vld [vmem:[%s3238 + $0xe2] sm:$0xff]
      %v4229 = vld [vmem:[%s3238 + $0xf2] sm:$0xff]
      %v4230 = vld [vmem:[%s3238 + $0xfa] sm:$0xff]
      %v4231 = vld [vmem:[%s3238 + $0x10a] sm:$0xff]
      %v4232 = vld [vmem:[%s3238 + $0x112] sm:$0xff]
      %v4233 = vld [vmem:[%s3238 + $0x122] sm:$0xff]
      %v4234 = vld [vmem:[%s3238 + $0x12a] sm:$0xff]
      %v4235 = vld [vmem:[%s3238 + $0x13a] sm:$0xff]
      %v4236 = vld [vmem:[%s3238 + $0x142] sm:$0xff]
      %v4237 = vld [vmem:[%s3238 + $0x152] sm:$0xff]
      %v4238 = vld [vmem:[%s3238 + $0x15a] sm:$0xff]
      %v4239 = vld [vmem:[%s3238 + $0x16a] sm:$0xff]
      %v4240 = vld [vmem:[%s3238 + $0x172] sm:$0xff]
      %v4241 = vsub.f32 %v4209, %v275
      %v4242 = vsub.f32 %v4210, %v275
      %v4243 = vsub.f32 %v4211, %v275
      %v4244 = vsub.f32 %v4212, %v275
      %v4245 = vsub.f32 %v4213, %v275
      %v4246 = vsub.f32 %v4214, %v275
      %v4247 = vsub.f32 %v4215, %v275
      %v4248 = vsub.f32 %v4216, %v275
      %v4249 = vsub.f32 %v4217, %v275
      %v4250 = vsub.f32 %v4218, %v275
      %v4251 = vsub.f32 %v4219, %v275
      %v4252 = vsub.f32 %v4220, %v275
      %v4253 = vsub.f32 %v4221, %v275
      %v4254 = vsub.f32 %v4222, %v275
      %v4255 = vsub.f32 %v4223, %v275
      %v4256 = vsub.f32 %v4224, %v275
      %v4257 = vsub.f32 %v4225, %v275
      %v4258 = vsub.f32 %v4226, %v275
      %v4259 = vsub.f32 %v4227, %v275
      %v4260 = vsub.f32 %v4228, %v275
      %v4261 = vsub.f32 %v4229, %v275
      %v4262 = vsub.f32 %v4230, %v275
      %v4263 = vsub.f32 %v4231, %v275
      %v4264 = vsub.f32 %v4232, %v275
      %v4265 = vsub.f32 %v4233, %v275
      %v4266 = vsub.f32 %v4234, %v275
      %v4267 = vsub.f32 %v4235, %v275
      %v4268 = vsub.f32 %v4236, %v275
      %v4269 = vsub.f32 %v4237, %v275
      %v4270 = vsub.f32 %v4238, %v275
      %v4271 = vsub.f32 %v4239, %v275
      %v4272 = vsub.f32 %v4240, %v275
      %v4273 = vmul.f32 %v4241, %v411
      %v4274 = vmul.f32 %v4242, %v411
      %v4275 = vmul.f32 %v4243, %v411
      %v4276 = vmul.f32 %v4244, %v411
      %v4277 = vmul.f32 %v4245, %v411
      %v4278 = vmul.f32 %v4246, %v411
      %v4279 = vmul.f32 %v4247, %v411
      %v4280 = vmul.f32 %v4248, %v411
      %v4281 = vmul.f32 %v4249, %v411
      %v4282 = vmul.f32 %v4250, %v411
      %v4283 = vmul.f32 %v4251, %v411
      %v4284 = vmul.f32 %v4252, %v411
      %v4285 = vmul.f32 %v4253, %v411
      %v4286 = vmul.f32 %v4254, %v411
      %v4287 = vmul.f32 %v4255, %v411
      %v4288 = vmul.f32 %v4256, %v411
      %v4289 = vmul.f32 %v4257, %v411
      %v4290 = vmul.f32 %v4258, %v411
      %v4291 = vmul.f32 %v4259, %v411
      %v4292 = vmul.f32 %v4260, %v411
      %v4293 = vmul.f32 %v4261, %v411
      %v4294 = vmul.f32 %v4262, %v411
      %v4295 = vmul.f32 %v4263, %v411
      %v4296 = vmul.f32 %v4264, %v411
      %v4297 = vmul.f32 %v4265, %v411
      %v4298 = vmul.f32 %v4266, %v411
      %v4299 = vmul.f32 %v4267, %v411
      %v4300 = vmul.f32 %v4268, %v411
      %v4301 = vmul.f32 %v4269, %v411
      %v4302 = vmul.f32 %v4270, %v411
      %v4303 = vmul.f32 %v4271, %v411
      %v4304 = vmul.f32 %v4272, %v411
      %v4305 = vsel %vm1456, %v4273, 0.0
      %v4306 = vsel %vm1457, %v4274, 0.0
      %v4307 = vsel %vm1456, %v4275, 0.0
      %v4308 = vsel %vm1457, %v4276, 0.0
      %v4309 = vsel %vm1456, %v4277, 0.0
      %v4310 = vsel %vm1457, %v4278, 0.0
      %v4311 = vsel %vm1456, %v4279, 0.0
      %v4312 = vsel %vm1457, %v4280, 0.0
      %v4313 = vsel %vm1456, %v4281, 0.0
      %v4314 = vsel %vm1457, %v4282, 0.0
      %v4315 = vsel %vm1456, %v4283, 0.0
      %v4316 = vsel %vm1457, %v4284, 0.0
      %v4317 = vsel %vm1456, %v4285, 0.0
      %v4318 = vsel %vm1457, %v4286, 0.0
      %v4319 = vsel %vm1456, %v4287, 0.0
      %v4320 = vsel %vm1457, %v4288, 0.0
      %v4321 = vsel %vm1456, %v4289, 0.0
      %v4322 = vsel %vm1457, %v4290, 0.0
      %v4323 = vsel %vm1456, %v4291, 0.0
      %v4324 = vsel %vm1457, %v4292, 0.0
      %v4325 = vsel %vm1456, %v4293, 0.0
      %v4326 = vsel %vm1457, %v4294, 0.0
      %v4327 = vsel %vm1456, %v4295, 0.0
      %v4328 = vsel %vm1457, %v4296, 0.0
      %v4329 = vsel %vm1456, %v4297, 0.0
      %v4330 = vsel %vm1457, %v4298, 0.0
      %v4331 = vsel %vm1456, %v4299, 0.0
      %v4332 = vsel %vm1457, %v4300, 0.0
      %v4333 = vsel %vm1456, %v4301, 0.0
      %v4334 = vsel %vm1457, %v4302, 0.0
      %v4335 = vsel %vm1454, %v4303, 0.0
      %v4336 = vsel %vm1455, %v4304, 0.0
      %v4337 = vld [vmem:[%s1 + $0x28] sm:$0x1f]
      %v4339 = vsel %vm204, %v4305, 0
      %v4342 = vsel %vm204, %v4306, 0
      %v4345 = vsel %vm204, %v4307, 0
      %v4348 = vsel %vm204, %v4308, 0
      %v4351 = vsel %vm204, %v4309, 0
      %v4354 = vsel %vm204, %v4310, 0
      %v4357 = vsel %vm204, %v4311, 0
      %v4360 = vsel %vm204, %v4312, 0
      %v4363 = vsel %vm204, %v4313, 0
      %v4366 = vsel %vm204, %v4314, 0
      %v4369 = vsel %vm204, %v4315, 0
      %v4372 = vsel %vm204, %v4316, 0
      %v4375 = vsel %vm204, %v4317, 0
      %v4378 = vsel %vm204, %v4318, 0
      %v4381 = vsel %vm204, %v4319, 0
      %v4384 = vsel %vm204, %v4320, 0
      %v4387 = vsel %vm204, %v4321, 0
      %v4390 = vsel %vm204, %v4322, 0
      %v4393 = vsel %vm204, %v4323, 0
      %v4396 = vsel %vm204, %v4324, 0
      %v4399 = vsel %vm204, %v4325, 0
      %v4402 = vsel %vm204, %v4326, 0
      %v4405 = vsel %vm204, %v4327, 0
      %v4408 = vsel %vm204, %v4328, 0
      %v4411 = vsel %vm204, %v4329, 0
      %v4414 = vsel %vm204, %v4330, 0
      %v4417 = vsel %vm204, %v4331, 0
      %v4420 = vsel %vm204, %v4332, 0
      %v4423 = vsel %vm204, %v4333, 0
      %v4426 = vsel %vm204, %v4334, 0
      %v4429 = vsel %vm204, %v4335, 0
      %v4432 = vsel %vm204, %v4336, 0
      %v4435 = vsel %vm795, %v4337, 0
      %4437 = vmatprep.subr.mxu0 0.0
      %4438 = vmatpush1.msra.mxu0 0.0
      %4439 = vmatprep.subr.mxu0 0.0
      %4440 = vmatpush1.msra.mxu0 0.0
      %4441 = vmatprep.subr.mxu0 0.0
      %4442 = vmatpush1.msra.mxu0 0.0
      %4443 = vmatprep.subr.mxu0 0.0
      %4444 = vmatpush1.msra.mxu0 0.0
      %4445 = vmatprep.subr.mxu0 0.0
      %4446 = vmatpush1.msra.mxu0 0.0
      %4447 = vmatprep.subr.mxu0 0.0
      %4448 = vmatpush1.msra.mxu0 0.0
      %4449 = vmatprep.subr.mxu0 0.0
      %4450 = vmatpush1.msra.mxu0 0.0
      %4451 = vmatprep.subr.mxu0 0.0
      %4452 = vmatpush1.msra.mxu0 0.0
      %4453 = vmatprep.subr.mxu0 0.0
      %4454 = vmatpush1.msra.mxu0 0.0
      %4455 = vmatprep.subr.mxu0 0.0
      %4456 = vmatpush1.msra.mxu0 0.0
      %4457 = vmatprep.subr.mxu0 0.0
      %4458 = vmatpush1.msra.mxu0 0.0
      %4459 = vmatprep.subr.mxu0 0.0
      %4460 = vmatpush1.msra.mxu0 0.0
      %4461 = vmatprep.subr.mxu0 0.0
      %4462 = vmatpush1.msra.mxu0 0.0
      %4463 = vmatprep.subr.mxu0 0.0
      %4464 = vmatpush1.msra.mxu0 0.0
      %4465 = vmatprep.subr.mxu0 0.0
      %4466 = vmatpush1.msra.mxu0 0.0
      %4467 = vmatprep.subr.mxu0 0.0
      %4468 = vmatpush1.msra.mxu0 %v4435
      %4469 = vmatprep.subr.mxu0 0.0
      %4470 = vmatpush2.msra.mxu0 0.0
      %4471 = vmatprep.subr.mxu0 0.0
      %4472 = vmatpush2.msra.mxu0 0.0
      %4473 = vmatprep.subr.mxu0 0.0
      %4474 = vmatpush2.msra.mxu0 0.0
      %4475 = vmatprep.subr.mxu0 0.0
      %4476 = vmatpush2.msra.mxu0 0.0
      %4477 = vmatprep.subr.mxu0 0.0
      %4478 = vmatpush2.msra.mxu0 0.0
      %4479 = vmatprep.subr.mxu0 0.0
      %4480 = vmatpush2.msra.mxu0 0.0
      %4481 = vmatprep.subr.mxu0 0.0
      %4482 = vmatpush2.msra.mxu0 0.0
      %4483 = vmatprep.subr.mxu0 0.0
      %4484 = vmatpush2.msra.mxu0 0.0
      %4485 = vmatprep.subr.mxu0 0.0
      %4486 = vmatpush2.msra.mxu0 0.0
      %4487 = vmatprep.subr.mxu0 0.0
      %4488 = vmatpush2.msra.mxu0 0.0
      %4489 = vmatprep.subr.mxu0 0.0
      %4490 = vmatpush2.msra.mxu0 0.0
      %4491 = vmatprep.subr.mxu0 0.0
      %4492 = vmatpush2.msra.mxu0 0.0
      %4493 = vmatprep.subr.mxu0 0.0
      %4494 = vmatpush2.msra.mxu0 0.0
      %4495 = vmatprep.subr.mxu0 0.0
      %4496 = vmatpush2.msra.mxu0 0.0
      %4497 = vmatprep.subr.mxu0 0.0
      %4498 = vmatpush2.msra.mxu0 0.0
      %4499 = vmatprep.subr.mxu0 0.0
      %4500 = vmatpush2.msra.mxu0 0.0
      %4501 = vmatprep.mubr.f32.mxu0 0.0
      %4502 = vmatmul.mubr.f32.gmra.mxu0 %v4339
      %v4503 = vpop.f32.mrf.mxu0
      %v4504 = vadd.f32 0.0, %v4503
      %v4505 = vpop.f32.mrf.mxu0
      %4506 = vmatprep.mubr.f32.mxu0 0.0
      %4507 = vmatmul.mubr.f32.gmra.mxu0 %v4342
      %v4508 = vpop.f32.mrf.mxu0
      %v4509 = vadd.f32 0.0, %v4508
      %v4510 = vpop.f32.mrf.mxu0
      %4511 = vmatprep.mubr.f32.mxu0 0.0
      %4512 = vmatmul.mubr.f32.gmra.mxu0 %v4345
      %v4513 = vpop.f32.mrf.mxu0
      %v4514 = vadd.f32 0.0, %v4513
      %v4515 = vpop.f32.mrf.mxu0
      %4516 = vmatprep.mubr.f32.mxu0 0.0
      %4517 = vmatmul.mubr.f32.gmra.mxu0 %v4348
      %v4518 = vpop.f32.mrf.mxu0
      %v4519 = vadd.f32 0.0, %v4518
      %v4520 = vpop.f32.mrf.mxu0
      %4521 = vmatprep.mubr.f32.mxu0 0.0
      %4522 = vmatmul.mubr.f32.gmra.mxu0 %v4351
      %v4523 = vpop.f32.mrf.mxu0
      %v4524 = vadd.f32 0.0, %v4523
      %v4525 = vpop.f32.mrf.mxu0
      %4526 = vmatprep.mubr.f32.mxu0 0.0
      %4527 = vmatmul.mubr.f32.gmra.mxu0 %v4354
      %v4528 = vpop.f32.mrf.mxu0
      %v4529 = vadd.f32 0.0, %v4528
      %v4530 = vpop.f32.mrf.mxu0
      %4531 = vmatprep.mubr.f32.mxu0 0.0
      %4532 = vmatmul.mubr.f32.gmra.mxu0 %v4357
      %v4533 = vpop.f32.mrf.mxu0
      %v4534 = vadd.f32 0.0, %v4533
      %v4535 = vpop.f32.mrf.mxu0
      %4536 = vmatprep.mubr.f32.mxu0 0.0
      %4537 = vmatmul.mubr.f32.gmra.mxu0 %v4360
      %v4538 = vpop.f32.mrf.mxu0
      %v4539 = vadd.f32 0.0, %v4538
      %v4540 = vpop.f32.mrf.mxu0
      %4541 = vmatprep.mubr.f32.mxu0 0.0
      %4542 = vmatmul.mubr.f32.gmra.mxu0 %v4363
      %v4543 = vpop.f32.mrf.mxu0
      %v4544 = vadd.f32 0.0, %v4543
      %v4545 = vpop.f32.mrf.mxu0
      %4546 = vmatprep.mubr.f32.mxu0 0.0
      %4547 = vmatmul.mubr.f32.gmra.mxu0 %v4366
      %v4548 = vpop.f32.mrf.mxu0
      %v4549 = vadd.f32 0.0, %v4548
      %v4550 = vpop.f32.mrf.mxu0
      %4551 = vmatprep.mubr.f32.mxu0 0.0
      %4552 = vmatmul.mubr.f32.gmra.mxu0 %v4369
      %v4553 = vpop.f32.mrf.mxu0
      %v4554 = vadd.f32 0.0, %v4553
      %v4555 = vpop.f32.mrf.mxu0
      %4556 = vmatprep.mubr.f32.mxu0 0.0
      %4557 = vmatmul.mubr.f32.gmra.mxu0 %v4372
      %v4558 = vpop.f32.mrf.mxu0
      %v4559 = vadd.f32 0.0, %v4558
      %v4560 = vpop.f32.mrf.mxu0
      %4561 = vmatprep.mubr.f32.mxu0 0.0
      %4562 = vmatmul.mubr.f32.gmra.mxu0 %v4375
      %v4563 = vpop.f32.mrf.mxu0
      %v4564 = vadd.f32 0.0, %v4563
      %v4565 = vpop.f32.mrf.mxu0
      %4566 = vmatprep.mubr.f32.mxu0 0.0
      %4567 = vmatmul.mubr.f32.gmra.mxu0 %v4378
      %v4568 = vpop.f32.mrf.mxu0
      %v4569 = vadd.f32 0.0, %v4568
      %v4570 = vpop.f32.mrf.mxu0
      %4571 = vmatprep.mubr.f32.mxu0 0.0
      %4572 = vmatmul.mubr.f32.gmra.mxu0 %v4381
      %v4573 = vpop.f32.mrf.mxu0
      %v4574 = vadd.f32 0.0, %v4573
      %v4575 = vpop.f32.mrf.mxu0
      %4576 = vmatprep.mubr.f32.mxu0 0.0
      %4577 = vmatmul.mubr.f32.gmra.mxu0 %v4384
      %v4578 = vpop.f32.mrf.mxu0
      %v4579 = vadd.f32 0.0, %v4578
      %v4580 = vpop.f32.mrf.mxu0
      %4581 = vmatprep.mubr.f32.mxu0 0.0
      %4582 = vmatmul.mubr.f32.gmra.mxu0 %v4387
      %v4583 = vpop.f32.mrf.mxu0
      %v4584 = vadd.f32 0.0, %v4583
      %v4585 = vpop.f32.mrf.mxu0
      %4586 = vmatprep.mubr.f32.mxu0 0.0
      %4587 = vmatmul.mubr.f32.gmra.mxu0 %v4390
      %v4588 = vpop.f32.mrf.mxu0
      %v4589 = vadd.f32 0.0, %v4588
      %v4590 = vpop.f32.mrf.mxu0
      %4591 = vmatprep.mubr.f32.mxu0 0.0
      %4592 = vmatmul.mubr.f32.gmra.mxu0 %v4393
      %v4593 = vpop.f32.mrf.mxu0
      %v4594 = vadd.f32 0.0, %v4593
      %v4595 = vpop.f32.mrf.mxu0
      %4596 = vmatprep.mubr.f32.mxu0 0.0
      %4597 = vmatmul.mubr.f32.gmra.mxu0 %v4396
      %v4598 = vpop.f32.mrf.mxu0
      %v4599 = vadd.f32 0.0, %v4598
      %v4600 = vpop.f32.mrf.mxu0
      %4601 = vmatprep.mubr.f32.mxu0 0.0
      %4602 = vmatmul.mubr.f32.gmra.mxu0 %v4399
      %v4603 = vpop.f32.mrf.mxu0
      %v4604 = vadd.f32 0.0, %v4603
      %v4605 = vpop.f32.mrf.mxu0
      %4606 = vmatprep.mubr.f32.mxu0 0.0
      %4607 = vmatmul.mubr.f32.gmra.mxu0 %v4402
      %v4608 = vpop.f32.mrf.mxu0
      %v4609 = vadd.f32 0.0, %v4608
      %v4610 = vpop.f32.mrf.mxu0
      %4611 = vmatprep.mubr.f32.mxu0 0.0
      %4612 = vmatmul.mubr.f32.gmra.mxu0 %v4405
      %v4613 = vpop.f32.mrf.mxu0
      %v4614 = vadd.f32 0.0, %v4613
      %v4615 = vpop.f32.mrf.mxu0
      %4616 = vmatprep.mubr.f32.mxu0 0.0
      %4617 = vmatmul.mubr.f32.gmra.mxu0 %v4408
      %v4618 = vpop.f32.mrf.mxu0
      %v4619 = vadd.f32 0.0, %v4618
      %v4620 = vpop.f32.mrf.mxu0
      %4621 = vmatprep.mubr.f32.mxu0 0.0
      %4622 = vmatmul.mubr.f32.gmra.mxu0 %v4411
      %v4623 = vpop.f32.mrf.mxu0
      %v4624 = vadd.f32 0.0, %v4623
      %v4625 = vpop.f32.mrf.mxu0
      %4626 = vmatprep.mubr.f32.mxu0 0.0
      %4627 = vmatmul.mubr.f32.gmra.mxu0 %v4414
      %v4628 = vpop.f32.mrf.mxu0
      %v4629 = vadd.f32 0.0, %v4628
      %v4630 = vpop.f32.mrf.mxu0
      %4631 = vmatprep.mubr.f32.mxu0 0.0
      %4632 = vmatmul.mubr.f32.gmra.mxu0 %v4417
      %v4633 = vpop.f32.mrf.mxu0
      %v4634 = vadd.f32 0.0, %v4633
      %v4635 = vpop.f32.mrf.mxu0
      %4636 = vmatprep.mubr.f32.mxu0 0.0
      %4637 = vmatmul.mubr.f32.gmra.mxu0 %v4420
      %v4638 = vpop.f32.mrf.mxu0
      %v4639 = vadd.f32 0.0, %v4638
      %v4640 = vpop.f32.mrf.mxu0
      %4641 = vmatprep.mubr.f32.mxu0 0.0
      %4642 = vmatmul.mubr.f32.gmra.mxu0 %v4423
      %v4643 = vpop.f32.mrf.mxu0
      %v4644 = vadd.f32 0.0, %v4643
      %v4645 = vpop.f32.mrf.mxu0
      %4646 = vmatprep.mubr.f32.mxu0 0.0
      %4647 = vmatmul.mubr.f32.gmra.mxu0 %v4426
      %v4648 = vpop.f32.mrf.mxu0
      %v4649 = vadd.f32 0.0, %v4648
      %v4650 = vpop.f32.mrf.mxu0
      %4651 = vmatprep.mubr.f32.mxu0 0.0
      %4652 = vmatmul.mubr.f32.gmra.mxu0 %v4429
      %v4653 = vpop.f32.mrf.mxu0
      %v4654 = vadd.f32 0.0, %v4653
      %v4655 = vpop.f32.mrf.mxu0
      %4656 = vmatprep.mubr.f32.mxu0 0.0
      %4657 = vmatmul.mubr.f32.gmra.mxu0 %v4432
      %v4658 = vpop.f32.mrf.mxu0
      %v4659 = vadd.f32 0.0, %v4658
      %v4660 = vpop.f32.mrf.mxu0
      %4661 = vdwg.mxu0
      %v4662 = vadd.f32 %v4177, %v4504
      %v4663 = vadd.f32 %v4178, %v4509
      %v4664 = vadd.f32 %v4179, %v4514
      %v4665 = vadd.f32 %v4180, %v4519
      %v4666 = vadd.f32 %v4181, %v4524
      %v4667 = vadd.f32 %v4182, %v4529
      %v4668 = vadd.f32 %v4183, %v4534
      %v4669 = vadd.f32 %v4184, %v4539
      %v4670 = vadd.f32 %v4185, %v4544
      %v4671 = vadd.f32 %v4186, %v4549
      %v4672 = vadd.f32 %v4187, %v4554
      %v4673 = vadd.f32 %v4188, %v4559
      %v4674 = vadd.f32 %v4189, %v4564
      %v4675 = vadd.f32 %v4190, %v4569
      %v4676 = vadd.f32 %v4191, %v4574
      %v4677 = vadd.f32 %v4192, %v4579
      %v4678 = vadd.f32 %v4193, %v4584
      %v4679 = vadd.f32 %v4194, %v4589
      %v4680 = vadd.f32 %v4195, %v4594
      %v4681 = vadd.f32 %v4196, %v4599
      %v4682 = vadd.f32 %v4197, %v4604
      %v4683 = vadd.f32 %v4198, %v4609
      %v4684 = vadd.f32 %v4199, %v4614
      %v4685 = vadd.f32 %v4200, %v4619
      %v4686 = vadd.f32 %v4201, %v4624
      %v4687 = vadd.f32 %v4202, %v4629
      %v4688 = vadd.f32 %v4203, %v4634
      %v4689 = vadd.f32 %v4204, %v4639
      %v4690 = vadd.f32 %v4205, %v4644
      %v4691 = vadd.f32 %v4206, %v4649
      %v4692 = vadd.f32 %v4207, %v4654
      %v4693 = vadd.f32 %v4208, %v4659
      %v4694 = vld [vmem:[%s2] sm:$0x1]
      %v4696 = vlaneseq
      %v4697 = vshrl.u32 %v4696, 7
      %v4698 = vsub.s32 0, %v4697
      %v4699 = vrot.slane %v4694, %v4698
      %v4701 = vadd.f32 %v4662, %v4699
      %v4702 = vadd.f32 %v4663, %v4699
      %v4703 = vadd.f32 %v4664, %v4699
      %v4704 = vadd.f32 %v4665, %v4699
      %v4705 = vadd.f32 %v4666, %v4699
      %v4706 = vadd.f32 %v4667, %v4699
      %v4707 = vadd.f32 %v4668, %v4699
      %v4708 = vadd.f32 %v4669, %v4699
      %v4709 = vadd.f32 %v4670, %v4699
      %v4710 = vadd.f32 %v4671, %v4699
      %v4711 = vadd.f32 %v4672, %v4699
      %v4712 = vadd.f32 %v4673, %v4699
      %v4713 = vadd.f32 %v4674, %v4699
      %v4714 = vadd.f32 %v4675, %v4699
      %v4715 = vadd.f32 %v4676, %v4699
      %v4716 = vadd.f32 %v4677, %v4699
      %v4717 = vadd.f32 %v4678, %v4699
      %v4718 = vadd.f32 %v4679, %v4699
      %v4719 = vadd.f32 %v4680, %v4699
      %v4720 = vadd.f32 %v4681, %v4699
      %v4721 = vadd.f32 %v4682, %v4699
      %v4722 = vadd.f32 %v4683, %v4699
      %v4723 = vadd.f32 %v4684, %v4699
      %v4724 = vadd.f32 %v4685, %v4699
      %v4725 = vadd.f32 %v4686, %v4699
      %v4726 = vadd.f32 %v4687, %v4699
      %v4727 = vadd.f32 %v4688, %v4699
      %v4728 = vadd.f32 %v4689, %v4699
      %v4729 = vadd.f32 %v4690, %v4699
      %v4730 = vadd.f32 %v4691, %v4699
      %v4731 = vadd.f32 %v4692, %v4699
      %v4732 = vadd.f32 %v4693, %v4699
      %vm4733 = vcmask 261120
      %v4734 = vsel %vm4733, %v4701, 0.0
      %v4735 = vsel %vm4733, %v4702, 0.0
      %v4736 = vadd.f32 %v4734, %v4735
      %v4737 = vsel %vm4733, %v4703, 0.0
      %v4738 = vadd.f32 %v4736, %v4737
      %v4739 = vsel %vm4733, %v4704, 0.0
      %v4740 = vadd.f32 %v4738, %v4739
      %v4741 = vsel %vm4733, %v4705, 0.0
      %v4742 = vadd.f32 %v4740, %v4741
      %v4743 = vsel %vm4733, %v4706, 0.0
      %v4744 = vadd.f32 %v4742, %v4743
      %v4745 = vsel %vm4733, %v4707, 0.0
      %v4746 = vadd.f32 %v4744, %v4745
      %v4747 = vsel %vm4733, %v4708, 0.0
      %v4748 = vadd.f32 %v4746, %v4747
      %v4749 = vsel %vm4733, %v4709, 0.0
      %v4750 = vadd.f32 %v4748, %v4749
      %v4751 = vsel %vm4733, %v4710, 0.0
      %v4752 = vadd.f32 %v4750, %v4751
      %v4753 = vsel %vm4733, %v4711, 0.0
      %v4754 = vadd.f32 %v4752, %v4753
      %v4755 = vsel %vm4733, %v4712, 0.0
      %v4756 = vadd.f32 %v4754, %v4755
      %v4757 = vsel %vm4733, %v4713, 0.0
      %v4758 = vadd.f32 %v4756, %v4757
      %v4759 = vsel %vm4733, %v4714, 0.0
      %v4760 = vadd.f32 %v4758, %v4759
      %v4761 = vsel %vm4733, %v4715, 0.0
      %v4762 = vadd.f32 %v4760, %v4761
      %v4763 = vsel %vm4733, %v4716, 0.0
      %v4764 = vadd.f32 %v4762, %v4763
      %v4765 = vsel %vm4733, %v4717, 0.0
      %v4766 = vadd.f32 %v4764, %v4765
      %v4767 = vsel %vm4733, %v4718, 0.0
      %v4768 = vadd.f32 %v4766, %v4767
      %v4769 = vsel %vm4733, %v4719, 0.0
      %v4770 = vadd.f32 %v4768, %v4769
      %v4771 = vsel %vm4733, %v4720, 0.0
      %v4772 = vadd.f32 %v4770, %v4771
      %v4773 = vsel %vm4733, %v4721, 0.0
      %v4774 = vadd.f32 %v4772, %v4773
      %v4775 = vsel %vm4733, %v4722, 0.0
      %v4776 = vadd.f32 %v4774, %v4775
      %v4777 = vsel %vm4733, %v4723, 0.0
      %v4778 = vadd.f32 %v4776, %v4777
      %v4779 = vsel %vm4733, %v4724, 0.0
      %v4780 = vadd.f32 %v4778, %v4779
      %v4781 = vsel %vm4733, %v4725, 0.0
      %v4782 = vadd.f32 %v4780, %v4781
      %v4783 = vsel %vm4733, %v4726, 0.0
      %v4784 = vadd.f32 %v4782, %v4783
      %v4785 = vsel %vm4733, %v4727, 0.0
      %v4786 = vadd.f32 %v4784, %v4785
      %v4787 = vsel %vm4733, %v4728, 0.0
      %v4788 = vadd.f32 %v4786, %v4787
      %v4789 = vsel %vm4733, %v4729, 0.0
      %v4790 = vadd.f32 %v4788, %v4789
      %v4791 = vsel %vm4733, %v4730, 0.0
      %v4792 = vadd.f32 %v4790, %v4791
      %v4793 = vsel %vm4733, %v4731, 0.0
      %v4794 = vadd.f32 %v4792, %v4793
      %v4795 = vsel %vm4733, %v4732, 0.0
      %v4796 = vadd.f32 %v4794, %v4795
      %v4797 = vrot.slane %v4796, 4
      %v4798 = vadd.f32 %v4796, %v4797
      %v4799 = vrot.slane %v4798, 2
      %v4800 = vadd.f32 %v4798, %v4799
      %v4801 = vrot.slane %v4800, 1
      %v4802 = vadd.f32 %v4800, %v4801
      %v4803 = vmul.f32 %v4802, %v274
      %v4804 = vsub.f32 %v4701, %v4803
      %v4805 = vsub.f32 %v4702, %v4803
      %v4806 = vsub.f32 %v4703, %v4803
      %v4807 = vsub.f32 %v4704, %v4803
      %v4808 = vsub.f32 %v4705, %v4803
      %v4809 = vsub.f32 %v4706, %v4803
      %v4810 = vsub.f32 %v4707, %v4803
      %v4811 = vsub.f32 %v4708, %v4803
      %v4812 = vsub.f32 %v4709, %v4803
      %v4813 = vsub.f32 %v4710, %v4803
      %v4814 = vsub.f32 %v4711, %v4803
      %v4815 = vsub.f32 %v4712, %v4803
      %v4816 = vsub.f32 %v4713, %v4803
      %v4817 = vsub.f32 %v4714, %v4803
      %v4818 = vsub.f32 %v4715, %v4803
      %v4819 = vsub.f32 %v4716, %v4803
      %v4820 = vsub.f32 %v4717, %v4803
      %v4821 = vsub.f32 %v4718, %v4803
      %v4822 = vsub.f32 %v4719, %v4803
      %v4823 = vsub.f32 %v4720, %v4803
      %v4824 = vsub.f32 %v4721, %v4803
      %v4825 = vsub.f32 %v4722, %v4803
      %v4826 = vsub.f32 %v4723, %v4803
      %v4827 = vsub.f32 %v4724, %v4803
      %v4828 = vsub.f32 %v4725, %v4803
      %v4829 = vsub.f32 %v4726, %v4803
      %v4830 = vsub.f32 %v4727, %v4803
      %v4831 = vsub.f32 %v4728, %v4803
      %v4832 = vsub.f32 %v4729, %v4803
      %v4833 = vsub.f32 %v4730, %v4803
      %v4834 = vsub.f32 %v4731, %v4803
      %v4835 = vsub.f32 %v4732, %v4803
      %v4836 = vmul.f32 %v4804, %v4804
      %v4837 = vmul.f32 %v4805, %v4805
      %v4838 = vmul.f32 %v4806, %v4806
      %v4839 = vmul.f32 %v4807, %v4807
      %v4840 = vmul.f32 %v4808, %v4808
      %v4841 = vmul.f32 %v4809, %v4809
      %v4842 = vmul.f32 %v4810, %v4810
      %v4843 = vmul.f32 %v4811, %v4811
      %v4844 = vmul.f32 %v4812, %v4812
      %v4845 = vmul.f32 %v4813, %v4813
      %v4846 = vmul.f32 %v4814, %v4814
      %v4847 = vmul.f32 %v4815, %v4815
      %v4848 = vmul.f32 %v4816, %v4816
      %v4849 = vmul.f32 %v4817, %v4817
      %v4850 = vmul.f32 %v4818, %v4818
      %v4851 = vmul.f32 %v4819, %v4819
      %v4852 = vmul.f32 %v4820, %v4820
      %v4853 = vmul.f32 %v4821, %v4821
      %v4854 = vmul.f32 %v4822, %v4822
      %v4855 = vmul.f32 %v4823, %v4823
      %v4856 = vmul.f32 %v4824, %v4824
      %v4857 = vmul.f32 %v4825, %v4825
      %v4858 = vmul.f32 %v4826, %v4826
      %v4859 = vmul.f32 %v4827, %v4827
      %v4860 = vmul.f32 %v4828, %v4828
      %v4861 = vmul.f32 %v4829, %v4829
      %v4862 = vmul.f32 %v4830, %v4830
      %v4863 = vmul.f32 %v4831, %v4831
      %v4864 = vmul.f32 %v4832, %v4832
      %v4865 = vmul.f32 %v4833, %v4833
      %v4866 = vmul.f32 %v4834, %v4834
      %v4867 = vmul.f32 %v4835, %v4835
      %v4868 = vsel %vm4733, %v4836, 0.0
      %v4869 = vsel %vm4733, %v4837, 0.0
      %v4870 = vadd.f32 %v4868, %v4869
      %v4871 = vsel %vm4733, %v4838, 0.0
      %v4872 = vadd.f32 %v4870, %v4871
      %v4873 = vsel %vm4733, %v4839, 0.0
      %v4874 = vadd.f32 %v4872, %v4873
      %v4875 = vsel %vm4733, %v4840, 0.0
      %v4876 = vadd.f32 %v4874, %v4875
      %v4877 = vsel %vm4733, %v4841, 0.0
      %v4878 = vadd.f32 %v4876, %v4877
      %v4879 = vsel %vm4733, %v4842, 0.0
      %v4880 = vadd.f32 %v4878, %v4879
      %v4881 = vsel %vm4733, %v4843, 0.0
      %v4882 = vadd.f32 %v4880, %v4881
      %v4883 = vsel %vm4733, %v4844, 0.0
      %v4884 = vadd.f32 %v4882, %v4883
      %v4885 = vsel %vm4733, %v4845, 0.0
      %v4886 = vadd.f32 %v4884, %v4885
      %v4887 = vsel %vm4733, %v4846, 0.0
      %v4888 = vadd.f32 %v4886, %v4887
      %v4889 = vsel %vm4733, %v4847, 0.0
      %v4890 = vadd.f32 %v4888, %v4889
      %v4891 = vsel %vm4733, %v4848, 0.0
      %v4892 = vadd.f32 %v4890, %v4891
      %v4893 = vsel %vm4733, %v4849, 0.0
      %v4894 = vadd.f32 %v4892, %v4893
      %v4895 = vsel %vm4733, %v4850, 0.0
      %v4896 = vadd.f32 %v4894, %v4895
      %v4897 = vsel %vm4733, %v4851, 0.0
      %v4898 = vadd.f32 %v4896, %v4897
      %v4899 = vsel %vm4733, %v4852, 0.0
      %v4900 = vadd.f32 %v4898, %v4899
      %v4901 = vsel %vm4733, %v4853, 0.0
      %v4902 = vadd.f32 %v4900, %v4901
      %v4903 = vsel %vm4733, %v4854, 0.0
      %v4904 = vadd.f32 %v4902, %v4903
      %v4905 = vsel %vm4733, %v4855, 0.0
      %v4906 = vadd.f32 %v4904, %v4905
      %v4907 = vsel %vm4733, %v4856, 0.0
      %v4908 = vadd.f32 %v4906, %v4907
      %v4909 = vsel %vm4733, %v4857, 0.0
      %v4910 = vadd.f32 %v4908, %v4909
      %v4911 = vsel %vm4733, %v4858, 0.0
      %v4912 = vadd.f32 %v4910, %v4911
      %v4913 = vsel %vm4733, %v4859, 0.0
      %v4914 = vadd.f32 %v4912, %v4913
      %v4915 = vsel %vm4733, %v4860, 0.0
      %v4916 = vadd.f32 %v4914, %v4915
      %v4917 = vsel %vm4733, %v4861, 0.0
      %v4918 = vadd.f32 %v4916, %v4917
      %v4919 = vsel %vm4733, %v4862, 0.0
      %v4920 = vadd.f32 %v4918, %v4919
      %v4921 = vsel %vm4733, %v4863, 0.0
      %v4922 = vadd.f32 %v4920, %v4921
      %v4923 = vsel %vm4733, %v4864, 0.0
      %v4924 = vadd.f32 %v4922, %v4923
      %v4925 = vsel %vm4733, %v4865, 0.0
      %v4926 = vadd.f32 %v4924, %v4925
      %v4927 = vsel %vm4733, %v4866, 0.0
      %v4928 = vadd.f32 %v4926, %v4927
      %v4929 = vsel %vm4733, %v4867, 0.0
      %v4930 = vadd.f32 %v4928, %v4929
      %v4931 = vrot.slane %v4930, 4
      %v4932 = vadd.f32 %v4930, %v4931
      %v4933 = vrot.slane %v4932, 2
      %v4934 = vadd.f32 %v4932, %v4933
      %v4935 = vrot.slane %v4934, 1
      %v4936 = vadd.f32 %v4934, %v4935
      %v4937 = vmul.f32 %v4936, %v274
      %v4938 = vadd.f32 %v4937, 1e-05
      %v4939 = vrsqrt.pop %v4938
      %v4940 = vmul.f32 %v4804, %v4939
      %v4941 = vmul.f32 %v4805, %v4939
      %v4942 = vmul.f32 %v4806, %v4939
      %v4943 = vmul.f32 %v4807, %v4939
      %v4944 = vmul.f32 %v4808, %v4939
      %v4945 = vmul.f32 %v4809, %v4939
      %v4946 = vmul.f32 %v4810, %v4939
      %v4947 = vmul.f32 %v4811, %v4939
      %v4948 = vmul.f32 %v4812, %v4939
      %v4949 = vmul.f32 %v4813, %v4939
      %v4950 = vmul.f32 %v4814, %v4939
      %v4951 = vmul.f32 %v4815, %v4939
      %v4952 = vmul.f32 %v4816, %v4939
      %v4953 = vmul.f32 %v4817, %v4939
      %v4954 = vmul.f32 %v4818, %v4939
      %v4955 = vmul.f32 %v4819, %v4939
      %v4956 = vmul.f32 %v4820, %v4939
      %v4957 = vmul.f32 %v4821, %v4939
      %v4958 = vmul.f32 %v4822, %v4939
      %v4959 = vmul.f32 %v4823, %v4939
      %v4960 = vmul.f32 %v4824, %v4939
      %v4961 = vmul.f32 %v4825, %v4939
      %v4962 = vmul.f32 %v4826, %v4939
      %v4963 = vmul.f32 %v4827, %v4939
      %v4964 = vmul.f32 %v4828, %v4939
      %v4965 = vmul.f32 %v4829, %v4939
      %v4966 = vmul.f32 %v4830, %v4939
      %v4967 = vmul.f32 %v4831, %v4939
      %v4968 = vmul.f32 %v4832, %v4939
      %v4969 = vmul.f32 %v4833, %v4939
      %v4970 = vmul.f32 %v4834, %v4939
      %v4971 = vmul.f32 %v4835, %v4939
      %v4972 = vmul.f32 %v4940, 0.5
      %v4973 = vmul.f32 %v4941, 0.5
      %v4974 = vmul.f32 %v4942, 0.5
      %v4975 = vmul.f32 %v4943, 0.5
      %v4976 = vmul.f32 %v4944, 0.5
      %v4977 = vmul.f32 %v4945, 0.5
      %v4978 = vmul.f32 %v4946, 0.5
      %v4979 = vmul.f32 %v4947, 0.5
      %v4980 = vmul.f32 %v4948, 0.5
      %v4981 = vmul.f32 %v4949, 0.5
      %v4982 = vmul.f32 %v4950, 0.5
      %v4983 = vmul.f32 %v4951, 0.5
      %v4984 = vmul.f32 %v4952, 0.5
      %v4985 = vmul.f32 %v4953, 0.5
      %v4986 = vmul.f32 %v4954, 0.5
      %v4987 = vmul.f32 %v4955, 0.5
      %v4988 = vmul.f32 %v4956, 0.5
      %v4989 = vmul.f32 %v4957, 0.5
      %v4990 = vmul.f32 %v4958, 0.5
      %v4991 = vmul.f32 %v4959, 0.5
      %v4992 = vmul.f32 %v4960, 0.5
      %v4993 = vmul.f32 %v4961, 0.5
      %v4994 = vmul.f32 %v4962, 0.5
      %v4995 = vmul.f32 %v4963, 0.5
      %v4996 = vmul.f32 %v4964, 0.5
      %v4997 = vmul.f32 %v4965, 0.5
      %v4998 = vmul.f32 %v4966, 0.5
      %v4999 = vmul.f32 %v4967, 0.5
      %v5000 = vmul.f32 %v4968, 0.5
      %v5001 = vmul.f32 %v4969, 0.5
      %v5002 = vmul.f32 %v4970, 0.5
      %v5003 = vmul.f32 %v4971, 0.5
      %v5004 = vmul.f32 %v4940, 0.70710677
      %v5005 = vmul.f32 %v4941, 0.70710677
      %v5006 = vmul.f32 %v4942, 0.70710677
      %v5007 = vmul.f32 %v4943, 0.70710677
      %v5008 = vmul.f32 %v4944, 0.70710677
      %v5009 = vmul.f32 %v4945, 0.70710677
      %v5010 = vmul.f32 %v4946, 0.70710677
      %v5011 = vmul.f32 %v4947, 0.70710677
      %v5012 = vmul.f32 %v4948, 0.70710677
      %v5013 = vmul.f32 %v4949, 0.70710677
      %v5014 = vmul.f32 %v4950, 0.70710677
      %v5015 = vmul.f32 %v4951, 0.70710677
      %v5016 = vmul.f32 %v4952, 0.70710677
      %v5017 = vmul.f32 %v4953, 0.70710677
      %v5018 = vmul.f32 %v4954, 0.70710677
      %v5019 = vmul.f32 %v4955, 0.70710677
      %v5020 = vmul.f32 %v4956, 0.70710677
      %v5021 = vmul.f32 %v4957, 0.70710677
      %v5022 = vmul.f32 %v4958, 0.70710677
      %v5023 = vmul.f32 %v4959, 0.70710677
      %v5024 = vmul.f32 %v4960, 0.70710677
      %v5025 = vmul.f32 %v4961, 0.70710677
      %v5026 = vmul.f32 %v4962, 0.70710677
      %v5027 = vmul.f32 %v4963, 0.70710677
      %v5028 = vmul.f32 %v4964, 0.70710677
      %v5029 = vmul.f32 %v4965, 0.70710677
      %v5030 = vmul.f32 %v4966, 0.70710677
      %v5031 = vmul.f32 %v4967, 0.70710677
      %v5032 = vmul.f32 %v4968, 0.70710677
      %v5033 = vmul.f32 %v4969, 0.70710677
      %v5034 = vmul.f32 %v4970, 0.70710677
      %v5035 = vmul.f32 %v4971, 0.70710677
      %v5036 = verf.f32.pop %v5004
      %v5037 = verf.f32.pop %v5005
      %v5038 = verf.f32.pop %v5006
      %v5039 = verf.f32.pop %v5007
      %v5040 = verf.f32.pop %v5008
      %v5041 = verf.f32.pop %v5009
      %v5042 = verf.f32.pop %v5010
      %v5043 = verf.f32.pop %v5011
      %v5044 = verf.f32.pop %v5012
      %v5045 = verf.f32.pop %v5013
      %v5046 = verf.f32.pop %v5014
      %v5047 = verf.f32.pop %v5015
      %v5048 = verf.f32.pop %v5016
      %v5049 = verf.f32.pop %v5017
      %v5050 = verf.f32.pop %v5018
      %v5051 = verf.f32.pop %v5019
      %v5052 = verf.f32.pop %v5020
      %v5053 = verf.f32.pop %v5021
      %v5054 = verf.f32.pop %v5022
      %v5055 = verf.f32.pop %v5023
      %v5056 = verf.f32.pop %v5024
      %v5057 = verf.f32.pop %v5025
      %v5058 = verf.f32.pop %v5026
      %v5059 = verf.f32.pop %v5027
      %v5060 = verf.f32.pop %v5028
      %v5061 = verf.f32.pop %v5029
      %v5062 = verf.f32.pop %v5030
      %v5063 = verf.f32.pop %v5031
      %v5064 = verf.f32.pop %v5032
      %v5065 = verf.f32.pop %v5033
      %v5066 = verf.f32.pop %v5034
      %v5067 = verf.f32.pop %v5035
      %v5068 = vadd.f32 %v5036, 1.0
      %v5069 = vadd.f32 %v5037, 1.0
      %v5070 = vadd.f32 %v5038, 1.0
      %v5071 = vadd.f32 %v5039, 1.0
      %v5072 = vadd.f32 %v5040, 1.0
      %v5073 = vadd.f32 %v5041, 1.0
      %v5074 = vadd.f32 %v5042, 1.0
      %v5075 = vadd.f32 %v5043, 1.0
      %v5076 = vadd.f32 %v5044, 1.0
      %v5077 = vadd.f32 %v5045, 1.0
      %v5078 = vadd.f32 %v5046, 1.0
      %v5079 = vadd.f32 %v5047, 1.0
      %v5080 = vadd.f32 %v5048, 1.0
      %v5081 = vadd.f32 %v5049, 1.0
      %v5082 = vadd.f32 %v5050, 1.0
      %v5083 = vadd.f32 %v5051, 1.0
      %v5084 = vadd.f32 %v5052, 1.0
      %v5085 = vadd.f32 %v5053, 1.0
      %v5086 = vadd.f32 %v5054, 1.0
      %v5087 = vadd.f32 %v5055, 1.0
      %v5088 = vadd.f32 %v5056, 1.0
      %v5089 = vadd.f32 %v5057, 1.0
      %v5090 = vadd.f32 %v5058, 1.0
      %v5091 = vadd.f32 %v5059, 1.0
      %v5092 = vadd.f32 %v5060, 1.0
      %v5093 = vadd.f32 %v5061, 1.0
      %v5094 = vadd.f32 %v5062, 1.0
      %v5095 = vadd.f32 %v5063, 1.0
      %v5096 = vadd.f32 %v5064, 1.0
      %v5097 = vadd.f32 %v5065, 1.0
      %v5098 = vadd.f32 %v5066, 1.0
      %v5099 = vadd.f32 %v5067, 1.0
      %v5100 = vmul.f32 %v4972, %v5068
      %v5101 = vmul.f32 %v4973, %v5069
      %v5102 = vmul.f32 %v4974, %v5070
      %v5103 = vmul.f32 %v4975, %v5071
      %v5104 = vmul.f32 %v4976, %v5072
      %v5105 = vmul.f32 %v4977, %v5073
      %v5106 = vmul.f32 %v4978, %v5074
      %v5107 = vmul.f32 %v4979, %v5075
      %v5108 = vmul.f32 %v4980, %v5076
      %v5109 = vmul.f32 %v4981, %v5077
      %v5110 = vmul.f32 %v4982, %v5078
      %v5111 = vmul.f32 %v4983, %v5079
      %v5112 = vmul.f32 %v4984, %v5080
      %v5113 = vmul.f32 %v4985, %v5081
      %v5114 = vmul.f32 %v4986, %v5082
      %v5115 = vmul.f32 %v4987, %v5083
      %v5116 = vmul.f32 %v4988, %v5084
      %v5117 = vmul.f32 %v4989, %v5085
      %v5118 = vmul.f32 %v4990, %v5086
      %v5119 = vmul.f32 %v4991, %v5087
      %v5120 = vmul.f32 %v4992, %v5088
      %v5121 = vmul.f32 %v4993, %v5089
      %v5122 = vmul.f32 %v4994, %v5090
      %v5123 = vmul.f32 %v4995, %v5091
      %v5124 = vmul.f32 %v4996, %v5092
      %v5125 = vmul.f32 %v4997, %v5093
      %v5126 = vmul.f32 %v4998, %v5094
      %v5127 = vmul.f32 %v4999, %v5095
      %v5128 = vmul.f32 %v5000, %v5096
      %v5129 = vmul.f32 %v5001, %v5097
      %v5130 = vmul.f32 %v5002, %v5098
      %v5131 = vmul.f32 %v5003, %v5099
      %5132 = vst.msk [vmem:[%s170] sm:$0xff] %vm4733, %v5100
      %5133 = vst.msk [vmem:[%s170 + $0x8] sm:$0xff] %vm4733, %v5101
      %5134 = vst.msk [vmem:[%s170 + $0x10] sm:$0xff] %vm4733, %v5102
      %5135 = vst.msk [vmem:[%s170 + $0x18] sm:$0xff] %vm4733, %v5103
      %5136 = vst.msk [vmem:[%s170 + $0x20] sm:$0xff] %vm4733, %v5104
      %5137 = vst.msk [vmem:[%s170 + $0x28] sm:$0xff] %vm4733, %v5105
      %5138 = vst.msk [vmem:[%s170 + $0x30] sm:$0xff] %vm4733, %v5106
      %5139 = vst.msk [vmem:[%s170 + $0x38] sm:$0xff] %vm4733, %v5107
      %5140 = vst.msk [vmem:[%s170 + $0x40] sm:$0xff] %vm4733, %v5108
      %5141 = vst.msk [vmem:[%s170 + $0x48] sm:$0xff] %vm4733, %v5109
      %5142 = vst.msk [vmem:[%s170 + $0x50] sm:$0xff] %vm4733, %v5110
      %5143 = vst.msk [vmem:[%s170 + $0x58] sm:$0xff] %vm4733, %v5111
      %5144 = vst.msk [vmem:[%s170 + $0x60] sm:$0xff] %vm4733, %v5112
      %5145 = vst.msk [vmem:[%s170 + $0x68] sm:$0xff] %vm4733, %v5113
      %5146 = vst.msk [vmem:[%s170 + $0x70] sm:$0xff] %vm4733, %v5114
      %5147 = vst.msk [vmem:[%s170 + $0x78] sm:$0xff] %vm4733, %v5115
      %5148 = vst.msk [vmem:[%s170 + $0x80] sm:$0xff] %vm4733, %v5116
      %5149 = vst.msk [vmem:[%s170 + $0x88] sm:$0xff] %vm4733, %v5117
      %5150 = vst.msk [vmem:[%s170 + $0x90] sm:$0xff] %vm4733, %v5118
      %5151 = vst.msk [vmem:[%s170 + $0x98] sm:$0xff] %vm4733, %v5119
      %5152 = vst.msk [vmem:[%s170 + $0xa0] sm:$0xff] %vm4733, %v5120
      %5153 = vst.msk [vmem:[%s170 + $0xa8] sm:$0xff] %vm4733, %v5121
      %5154 = vst.msk [vmem:[%s170 + $0xb0] sm:$0xff] %vm4733, %v5122
      %5155 = vst.msk [vmem:[%s170 + $0xb8] sm:$0xff] %vm4733, %v5123
      %5156 = vst.msk [vmem:[%s170 + $0xc0] sm:$0xff] %vm4733, %v5124
      %5157 = vst.msk [vmem:[%s170 + $0xc8] sm:$0xff] %vm4733, %v5125
      %5158 = vst.msk [vmem:[%s170 + $0xd0] sm:$0xff] %vm4733, %v5126
      %5159 = vst.msk [vmem:[%s170 + $0xd8] sm:$0xff] %vm4733, %v5127
      %5160 = vst.msk [vmem:[%s170 + $0xe0] sm:$0xff] %vm4733, %v5128
      %5161 = vst.msk [vmem:[%s170 + $0xe8] sm:$0xff] %vm4733, %v5129
      %5162 = vst.msk [vmem:[%s170 + $0xf0] sm:$0xff] %vm4733, %v5130
      %5163 = vst.msk [vmem:[%s170 + $0xf8] sm:$0xff] %vm4733, %v5131
      %p5164 = scmp.lt.s32.totalorder %s14, 1
      %s5165 = scalar_select %p5164, %s14, 1
      %s5166 = smul.addr %s5165, 32
      %s5167 = smul.addr %s5166, 8
      %s5168 = scalar_lea.vmem %s3, %s5167
      // Predicated region
      $region33: #{tpu_custom_call.1} parent=31 // pred_check
        %p5169 = pneg %p100
      $region34: #{tpu_custom_call.1} parent=31 // pred_check_branch
        %5171 = sbr.rel (%p5169) target = $region36
      $region35: #{tpu_custom_call.1} parent=31 // pred_region
        _
      $region36: #{tpu_custom_call.1} parent=31 // pred_fallthru
        _
    $region32: #{tpu_custom_call.1} parent=5 // pred_fallthru
      _
    %p5172 = scmp.le.s32.totalorder 2, %s9
    // Predicated region
    $region37: #{tpu_custom_call.1} parent=5 // pred_check
      %p5173 = pneg %p5172
    $region38: #{tpu_custom_call.1} parent=5 // pred_check_branch
      %5175 = sbr.rel (%p5173) target = $region40
    $region39: #{tpu_custom_call.1} parent=5 // pred_region
      %s5176 = ssub.s32 %s9, 2
      // Predicated region
      $region41: #{tpu_custom_call.1} parent=39 // pred_check
        %p5177 = pneg %p106
      $region42: #{tpu_custom_call.1} parent=39 // pred_check_branch
        %5179 = sbr.rel (%p5177) target = $region44
      $region43: #{tpu_custom_call.1} parent=39 // pred_region
        %p5180 = scmp.lt.s32.totalorder %s15, 1
        %s5181 = scalar_select %p5180, %s15, 1
        %s5182 = smul.addr %s5181, 32
        %s5183 = smul.addr %s5182, 8
        %s5184 = scalar_lea.vmem %s3, %s5183
      $region44: #{tpu_custom_call.1} parent=39 // pred_fallthru
        _
    $region40: #{tpu_custom_call.1} parent=5 // pred_fallthru
      _
  $region6: #{tpu_custom_call.1} parent=0 // loop_footer
    %s13 = sadd.s32 1, %s9
  $region7: #{tpu_custom_call.1} parent=0 // loop_footer_branch
    %8 = sbr.rel target = $region3
  $region8: #{tpu_custom_call.1} parent=0 // loop_exit
    _

</llo_original>
